<compile_context>
chip_gen: v5e
topology: v5e:2x2
jax: 0.10.0
libtpu: 0.0.40
codegen_flags: <defaults>
</compile_context>

<pallas_src>
import jax
import jax.numpy as jnp
from jax.experimental import pallas as pl
from jax.experimental.pallas import tpu as pltpu


_LAYER_DIMS = ((3, 64), (64, 128), (128, 1024), (1024, 512), (512, 256))


def pointnet_kernel(x_ref,
                    w1_ref, b1_ref,
                    w2_ref, b2_ref,
                    w3_ref, b3_ref,
                    w4_ref, b4_ref,
                    w5_ref, b5_ref,
                    o_ref):
    x = x_ref[...].astype(jnp.float32)          # (tile_m, 3)
    w1 = w1_ref[...]                            # (3, 64) f32

    # Layer 1 (K=3): three broadcast FMAs on the VPU -- a K=3 matmul would
    # occupy a full MXU pass while using only 3 of its contraction rows.
    h = (x[:, 0:1] * w1[0:1, :]
         + x[:, 1:2] * w1[1:2, :]
         + x[:, 2:3] * w1[2:3, :]
         + b1_ref[...])
    h = jnp.maximum(h, 0.0)

    def dense(h_f32, w_ref, b_ref):
        # bf16 operands on the MXU (weights are already bf16), f32 accumulation,
        # bias add stays in f32.
        return jnp.dot(h_f32.astype(jnp.bfloat16), w_ref[...],
                       preferred_element_type=jnp.float32) + b_ref[...]

    h = jnp.maximum(dense(h, w2_ref, b2_ref), 0.0)
    h = jnp.maximum(dense(h, w3_ref, b3_ref), 0.0)
    h = jnp.maximum(dense(h, w4_ref, b4_ref), 0.0)
    h = dense(h, w5_ref, b5_ref)                # final layer: no ReLU

    o_ref[...] = h.astype(o_ref.dtype)


def _round_up(x, m):
    return ((x + m - 1) // m) * m


def _build_call(tile_m, m_pad, cin, cout, weight_shapes, vmem_limit_bytes,
                single_buffer_weights):
    def row_spec(c):
        return pl.BlockSpec((tile_m, c), lambda i: (i, 0))

    def const_spec(shape):
        if single_buffer_weights:
            # Constant across the grid -> single-buffer to reclaim VMEM.
            return pl.BlockSpec(shape, lambda i: (0,) * len(shape),
                                pipeline_mode=pl.Buffered(1))
        return pl.BlockSpec(shape, lambda i: (0,) * len(shape))

    in_specs = [row_spec(cin)]
    for w_shape, b_shape in weight_shapes:
        in_specs.append(const_spec(w_shape))
        in_specs.append(const_spec(b_shape))

    return pl.pallas_call(
        pointnet_kernel,
        out_shape=jax.ShapeDtypeStruct((m_pad, cout), jnp.float32),
        grid_spec=pltpu.PrefetchScalarGridSpec(
            num_scalar_prefetch=0,
            grid=(m_pad // tile_m,),
            in_specs=in_specs,
            out_specs=row_spec(cout),
        ),
        compiler_params=pltpu.CompilerParams(
            dimension_semantics=("parallel",),
            vmem_limit_bytes=vmem_limit_bytes,
        ),
    )


def pointnet_forward(x, params, *, tile_m=1024):
    """x: (B, N, 3) float32.  Returns (B, N, 256) float32."""
    B, N, Cin = x.shape
    assert Cin == 3
    M = B * N

    (w1, b1), (w2, b2), (w3, b3), (w4, b4), (w5, b5) = params
    Cout = w5.shape[1]

    # Cast the MXU-dominant weights to bf16 once (halves their HBM/VMEM
    # footprint and enables full bf16 MXU throughput).  w1 is tiny and used on
    # the VPU; biases are added in f32 -> keep them f32.
    w1 = w1.astype(jnp.float32)
    w2, w3, w4, w5 = (w.astype(jnp.bfloat16) for w in (w2, w3, w4, w5))
    b1, b2, b3, b4, b5 = (b.astype(jnp.float32) for b in (b1, b2, b3, b4, b5))

    # Large row tile (multiple of 8); shrink only if the whole input is smaller,
    # otherwise pad rows up to a multiple of the tile (padding a few rows is far
    # cheaper than an MXU-underutilized small tile).
    tm = min(tile_m, _round_up(M, 8))
    M_pad = _round_up(M, tm)

    x2d = x.reshape(M, Cin).astype(jnp.float32)
    if M_pad != M:
        x2d = jnp.pad(x2d, ((0, M_pad - M), (0, 0)))

    flat_params = (w1, b1, w2, b2, w3, b3, w4, b4, w5, b5)
    weight_shapes = tuple((w.shape, b.shape) for w, b in
                          ((w1, b1), (w2, b2), (w3, b3), (w4, b4), (w5, b5)))

    # Scoped-VMEM budget: double-buffered IO tiles + resident params + f32
    # intermediates (+ bf16 operand copies), with 2x margin; floored at 32 MiB
    # and capped below v7x's 64 MiB physical VMEM.
    param_bytes = sum(int(a.size) * a.dtype.itemsize for a in flat_params)
    inter_cols = sum(fo for _, fo in _LAYER_DIMS)
    est = (2 * tm * Cin * 4 + 2 * tm * Cout * 4 + param_bytes
           + tm * inter_cols * 6)
    vmem_limit = int(min(max(2 * est, 32 * 1024 * 1024), 48 * 1024 * 1024))

    try:
        call = _build_call(tm, M_pad, Cin, Cout, weight_shapes, vmem_limit,
                           single_buffer_weights=True)
        out = jax.block_until_ready(call(x2d, *flat_params))
    except Exception:
        # Fallback for JAX builds without per-operand pipeline_mode support:
        # default (double-buffered) weight blocks -- costs ~1.7 MiB extra VMEM.
        call = _build_call(tm, M_pad, Cin, Cout, weight_shapes, vmem_limit,
                           single_buffer_weights=False)
        out = call(x2d, *flat_params)

    if M_pad != M:
        out = out[:M]
    return out.reshape(B, N, Cout)


def init_params(key):
    """Deterministic init.  Weights stored as (in, out); biases as (1, out)."""
    params = []
    for (fan_in, fan_out) in _LAYER_DIMS:
        key, kw, kb = jax.random.split(key, 3)
        bound = 1.0 / jnp.sqrt(fan_in)  # matches torch nn.Linear default init range
        w = jax.random.uniform(kw, (fan_in, fan_out), jnp.float32, -bound, bound)
        b = jax.random.uniform(kb, (1, fan_out), jnp.float32, -bound, bound)
        params.append((w, b))
    return params


def pointnet_reference_f32(x, params):
    """Pure-JAX f32 reference (original module semantics)."""
    h = x
    for i, (w, b) in enumerate(params):
        h = jnp.dot(h, w) + b[0]
        if i < len(params) - 1:
            h = jnp.maximum(h, 0.0)
    return h


def pointnet_reference_kernel_math(x, params):
    """Pure-JAX reference mirroring the kernel's precision (bf16 operands, f32 accum)."""
    h = x.astype(jnp.float32)
    for i, (w, b) in enumerate(params):
        if i == 0:
            h = jnp.dot(h, w, preferred_element_type=jnp.float32) + b[0]
        else:
            h = jnp.dot(h.astype(jnp.bfloat16), w.astype(jnp.bfloat16),
                        preferred_element_type=jnp.float32) + b[0]
        if i < len(params) - 1:
            h = jnp.maximum(h, 0.0)
    return h


if __name__ == "__main__":
    key = jax.random.PRNGKey(0)
    kx, kp = jax.random.split(key)

    B, N = 2, 8  # 2 batches of 8 points, each point is (x, y, z)
    x = jax.random.normal(kx, (B, N, 3), jnp.float32)
    params = init_params(kp)

    out = jax.block_until_ready(pointnet_forward(x, params))
    assert out.shape == (B, N, 256), out.shape

    ref_mixed = pointnet_reference_kernel_math(x, params)
    ref_f32 = pointnet_reference_f32(x, params)
    assert jnp.allclose(out, ref_mixed, atol=1e-2, rtol=1e-2), \
        "mismatch vs bf16-operand reference"
    assert jnp.allclose(out, ref_f32, atol=5e-2, rtol=5e-2), \
        "mismatch vs f32 reference"

    print("KERNEL_OK")
</pallas_src>

<mosaic_0001>
module attributes {stable_mosaic.version = 11 : i64} {
  func.func @pointnet_kernel(%arg0: i32, %arg1: memref<16x3xf32, #tpu.memory_space<vmem>>, %arg2: memref<3x64xf32, #tpu.memory_space<vmem>>, %arg3: memref<1x64xf32, #tpu.memory_space<vmem>>, %arg4: memref<64x128xbf16, #tpu.memory_space<vmem>>, %arg5: memref<1x128xf32, #tpu.memory_space<vmem>>, %arg6: memref<128x1024xbf16, #tpu.memory_space<vmem>>, %arg7: memref<1x1024xf32, #tpu.memory_space<vmem>>, %arg8: memref<1024x512xbf16, #tpu.memory_space<vmem>>, %arg9: memref<1x512xf32, #tpu.memory_space<vmem>>, %arg10: memref<512x256xbf16, #tpu.memory_space<vmem>>, %arg11: memref<1x256xf32, #tpu.memory_space<vmem>>, %arg12: memref<16x256xf32, #tpu.memory_space<vmem>>) attributes {dimension_semantics = [#tpu.dimension_semantics<parallel>], iteration_bounds = array<i64: 1>, scalar_prefetch = 0 : i64, scratch_operands = 0 : i64, tpu.core_type = #tpu.core_type<tc>, window_params = [{transform_indices = @transform_0, window_bounds = array<i64: 16, 3>}, {pipeline_mode = #tpu.pipeline_mode<synchronous>, transform_indices = @transform_1, window_bounds = array<i64: 3, 64>}, {pipeline_mode = #tpu.pipeline_mode<synchronous>, transform_indices = @transform_2, window_bounds = array<i64: 1, 64>}, {pipeline_mode = #tpu.pipeline_mode<synchronous>, transform_indices = @transform_3, window_bounds = array<i64: 64, 128>}, {pipeline_mode = #tpu.pipeline_mode<synchronous>, transform_indices = @transform_4, window_bounds = array<i64: 1, 128>}, {pipeline_mode = #tpu.pipeline_mode<synchronous>, transform_indices = @transform_5, window_bounds = array<i64: 128, 1024>}, {pipeline_mode = #tpu.pipeline_mode<synchronous>, transform_indices = @transform_6, window_bounds = array<i64: 1, 1024>}, {pipeline_mode = #tpu.pipeline_mode<synchronous>, transform_indices = @transform_7, window_bounds = array<i64: 1024, 512>}, {pipeline_mode = #tpu.pipeline_mode<synchronous>, transform_indices = @transform_8, window_bounds = array<i64: 1, 512>}, {pipeline_mode = #tpu.pipeline_mode<synchronous>, transform_indices = @transform_9, window_bounds = array<i64: 512, 256>}, {pipeline_mode = #tpu.pipeline_mode<synchronous>, transform_indices = @transform_10, window_bounds = array<i64: 1, 256>}, {transform_indices = @transform_11, window_bounds = array<i64: 16, 256>}]} {
    %c0 = arith.constant 0 : index
    %c0_0 = arith.constant 0 : index
    %0 = vector.load %arg1[%c0, %c0_0] : memref<16x3xf32, #tpu.memory_space<vmem>>, vector<16x3xf32>
    %c0_1 = arith.constant 0 : index
    %c0_2 = arith.constant 0 : index
    %1 = vector.load %arg2[%c0_1, %c0_2] : memref<3x64xf32, #tpu.memory_space<vmem>>, vector<3x64xf32>
    %2 = vector.extract_strided_slice %0 {offsets = [0, 0], sizes = [16, 1], strides = [1, 1]} : vector<16x3xf32> to vector<16x1xf32>
    %3 = vector.extract_strided_slice %1 {offsets = [0, 0], sizes = [1, 64], strides = [1, 1]} : vector<3x64xf32> to vector<1x64xf32>
    %4 = vector.broadcast %2 : vector<16x1xf32> to vector<16x64xf32>
    %5 = vector.broadcast %3 : vector<1x64xf32> to vector<16x64xf32>
    %6 = arith.mulf %4, %5 : vector<16x64xf32>
    %7 = vector.extract_strided_slice %0 {offsets = [0, 1], sizes = [16, 1], strides = [1, 1]} : vector<16x3xf32> to vector<16x1xf32>
    %8 = vector.extract_strided_slice %1 {offsets = [1, 0], sizes = [1, 64], strides = [1, 1]} : vector<3x64xf32> to vector<1x64xf32>
    %9 = vector.broadcast %7 : vector<16x1xf32> to vector<16x64xf32>
    %10 = vector.broadcast %8 : vector<1x64xf32> to vector<16x64xf32>
    %11 = arith.mulf %9, %10 : vector<16x64xf32>
    %12 = arith.addf %6, %11 : vector<16x64xf32>
    %13 = vector.extract_strided_slice %0 {offsets = [0, 2], sizes = [16, 1], strides = [1, 1]} : vector<16x3xf32> to vector<16x1xf32>
    %14 = vector.extract_strided_slice %1 {offsets = [2, 0], sizes = [1, 64], strides = [1, 1]} : vector<3x64xf32> to vector<1x64xf32>
    %15 = vector.broadcast %13 : vector<16x1xf32> to vector<16x64xf32>
    %16 = vector.broadcast %14 : vector<1x64xf32> to vector<16x64xf32>
    %17 = arith.mulf %15, %16 : vector<16x64xf32>
    %18 = arith.addf %12, %17 : vector<16x64xf32>
    %c0_3 = arith.constant 0 : index
    %c0_4 = arith.constant 0 : index
    %19 = vector.load %arg3[%c0_3, %c0_4] : memref<1x64xf32, #tpu.memory_space<vmem>>, vector<1x64xf32>
    %20 = vector.broadcast %19 : vector<1x64xf32> to vector<16x64xf32>
    %21 = arith.addf %18, %20 : vector<16x64xf32>
    %cst = arith.constant 0.000000e+00 : f32
    %22 = vector.broadcast %cst : f32 to vector<16x64xf32>
    %23 = arith.maximumf %21, %22 : vector<16x64xf32>
    %24 = arith.truncf %23 : vector<16x64xf32> to vector<16x64xbf16>
    %c0_5 = arith.constant 0 : index
    %c0_6 = arith.constant 0 : index
    %25 = vector.load %arg4[%c0_5, %c0_6] : memref<64x128xbf16, #tpu.memory_space<vmem>>, vector<64x128xbf16>
    %cst_7 = arith.constant dense<0.000000e+00> : vector<16x128xf32>
    %26 = tpu.matmul %24, %25, %cst_7 {dimension_numbers = #tpu.dot_dimension_numbers<[1], [0], [0], [1], [0, 0, 1, 1], [], []>} : vector<16x64xbf16>, vector<64x128xbf16>, vector<16x128xf32> -> vector<16x128xf32>
    %c0_8 = arith.constant 0 : index
    %c0_9 = arith.constant 0 : index
    %27 = vector.load %arg5[%c0_8, %c0_9] : memref<1x128xf32, #tpu.memory_space<vmem>>, vector<1x128xf32>
    %28 = vector.broadcast %27 : vector<1x128xf32> to vector<16x128xf32>
    %29 = arith.addf %26, %28 : vector<16x128xf32>
    %cst_10 = arith.constant 0.000000e+00 : f32
    %30 = vector.broadcast %cst_10 : f32 to vector<16x128xf32>
    %31 = arith.maximumf %29, %30 : vector<16x128xf32>
    %32 = arith.truncf %31 : vector<16x128xf32> to vector<16x128xbf16>
    %c0_11 = arith.constant 0 : index
    %c0_12 = arith.constant 0 : index
    %33 = vector.load %arg6[%c0_11, %c0_12] : memref<128x1024xbf16, #tpu.memory_space<vmem>>, vector<128x1024xbf16>
    %cst_13 = arith.constant dense<0.000000e+00> : vector<16x1024xf32>
    %34 = tpu.matmul %32, %33, %cst_13 {dimension_numbers = #tpu.dot_dimension_numbers<[1], [0], [0], [1], [0, 0, 1, 1], [], []>} : vector<16x128xbf16>, vector<128x1024xbf16>, vector<16x1024xf32> -> vector<16x1024xf32>
    %c0_14 = arith.constant 0 : index
    %c0_15 = arith.constant 0 : index
    %35 = vector.load %arg7[%c0_14, %c0_15] : memref<1x1024xf32, #tpu.memory_space<vmem>>, vector<1x1024xf32>
    %36 = vector.broadcast %35 : vector<1x1024xf32> to vector<16x1024xf32>
    %37 = arith.addf %34, %36 : vector<16x1024xf32>
    %cst_16 = arith.constant 0.000000e+00 : f32
    %38 = vector.broadcast %cst_16 : f32 to vector<16x1024xf32>
    %39 = arith.maximumf %37, %38 : vector<16x1024xf32>
    %40 = arith.truncf %39 : vector<16x1024xf32> to vector<16x1024xbf16>
    %c0_17 = arith.constant 0 : index
    %c0_18 = arith.constant 0 : index
    %41 = vector.load %arg8[%c0_17, %c0_18] : memref<1024x512xbf16, #tpu.memory_space<vmem>>, vector<1024x512xbf16>
    %cst_19 = arith.constant dense<0.000000e+00> : vector<16x512xf32>
    %42 = tpu.matmul %40, %41, %cst_19 {dimension_numbers = #tpu.dot_dimension_numbers<[1], [0], [0], [1], [0, 0, 1, 1], [], []>} : vector<16x1024xbf16>, vector<1024x512xbf16>, vector<16x512xf32> -> vector<16x512xf32>
    %c0_20 = arith.constant 0 : index
    %c0_21 = arith.constant 0 : index
    %43 = vector.load %arg9[%c0_20, %c0_21] : memref<1x512xf32, #tpu.memory_space<vmem>>, vector<1x512xf32>
    %44 = vector.broadcast %43 : vector<1x512xf32> to vector<16x512xf32>
    %45 = arith.addf %42, %44 : vector<16x512xf32>
    %cst_22 = arith.constant 0.000000e+00 : f32
    %46 = vector.broadcast %cst_22 : f32 to vector<16x512xf32>
    %47 = arith.maximumf %45, %46 : vector<16x512xf32>
    %48 = arith.truncf %47 : vector<16x512xf32> to vector<16x512xbf16>
    %c0_23 = arith.constant 0 : index
    %c0_24 = arith.constant 0 : index
    %49 = vector.load %arg10[%c0_23, %c0_24] : memref<512x256xbf16, #tpu.memory_space<vmem>>, vector<512x256xbf16>
    %cst_25 = arith.constant dense<0.000000e+00> : vector<16x256xf32>
    %50 = tpu.matmul %48, %49, %cst_25 {dimension_numbers = #tpu.dot_dimension_numbers<[1], [0], [0], [1], [0, 0, 1, 1], [], []>} : vector<16x512xbf16>, vector<512x256xbf16>, vector<16x256xf32> -> vector<16x256xf32>
    %c0_26 = arith.constant 0 : index
    %c0_27 = arith.constant 0 : index
    %51 = vector.load %arg11[%c0_26, %c0_27] : memref<1x256xf32, #tpu.memory_space<vmem>>, vector<1x256xf32>
    %52 = vector.broadcast %51 : vector<1x256xf32> to vector<16x256xf32>
    %53 = arith.addf %50, %52 : vector<16x256xf32>
    %c0_28 = arith.constant 0 : index
    %c0_29 = arith.constant 0 : index
    %54 = vector.load %arg12[%c0_28, %c0_29] : memref<16x256xf32, #tpu.memory_space<vmem>>, vector<16x256xf32>
    tpu.vector_store %arg12[%c0_28, %c0_29], %53 {strides = array<i32>} : memref<16x256xf32, #tpu.memory_space<vmem>>, vector<16x256xf32>,
    return
  }
  func.func @transform_0(%arg0: i32) -> (i32, i32) {
    %c0_i32 = arith.constant 0 : i32
    %c0_i32_0 = arith.constant 0 : i32
    return %arg0, %c0_i32 : i32, i32
  }
  func.func @transform_1(%arg0: i32) -> (i32, i32) {
    %c0_i32 = arith.constant 0 : i32
    %c0_i32_0 = arith.constant 0 : i32
    %c0_i32_1 = arith.constant 0 : i32
    return %c0_i32, %c0_i32_0 : i32, i32
  }
  func.func @transform_2(%arg0: i32) -> (i32, i32) {
    %c0_i32 = arith.constant 0 : i32
    %c0_i32_0 = arith.constant 0 : i32
    %c0_i32_1 = arith.constant 0 : i32
    return %c0_i32, %c0_i32_0 : i32, i32
  }
  func.func @transform_3(%arg0: i32) -> (i32, i32) {
    %c0_i32 = arith.constant 0 : i32
    %c0_i32_0 = arith.constant 0 : i32
    %c0_i32_1 = arith.constant 0 : i32
    return %c0_i32, %c0_i32_0 : i32, i32
  }
  func.func @transform_4(%arg0: i32) -> (i32, i32) {
    %c0_i32 = arith.constant 0 : i32
    %c0_i32_0 = arith.constant 0 : i32
    %c0_i32_1 = arith.constant 0 : i32
    return %c0_i32, %c0_i32_0 : i32, i32
  }
  func.func @transform_5(%arg0: i32) -> (i32, i32) {
    %c0_i32 = arith.constant 0 : i32
    %c0_i32_0 = arith.constant 0 : i32
    %c0_i32_1 = arith.constant 0 : i32
    return %c0_i32, %c0_i32_0 : i32, i32
  }
  func.func @transform_6(%arg0: i32) -> (i32, i32) {
    %c0_i32 = arith.constant 0 : i32
    %c0_i32_0 = arith.constant 0 : i32
    %c0_i32_1 = arith.constant 0 : i32
    return %c0_i32, %c0_i32_0 : i32, i32
  }
  func.func @transform_7(%arg0: i32) -> (i32, i32) {
    %c0_i32 = arith.constant 0 : i32
    %c0_i32_0 = arith.constant 0 : i32
    %c0_i32_1 = arith.constant 0 : i32
    return %c0_i32, %c0_i32_0 : i32, i32
  }
  func.func @transform_8(%arg0: i32) -> (i32, i32) {
    %c0_i32 = arith.constant 0 : i32
    %c0_i32_0 = arith.constant 0 : i32
    %c0_i32_1 = arith.constant 0 : i32
    return %c0_i32, %c0_i32_0 : i32, i32
  }
  func.func @transform_9(%arg0: i32) -> (i32, i32) {
    %c0_i32 = arith.constant 0 : i32
    %c0_i32_0 = arith.constant 0 : i32
    %c0_i32_1 = arith.constant 0 : i32
    return %c0_i32, %c0_i32_0 : i32, i32
  }
  func.func @transform_10(%arg0: i32) -> (i32, i32) {
    %c0_i32 = arith.constant 0 : i32
    %c0_i32_0 = arith.constant 0 : i32
    %c0_i32_1 = arith.constant 0 : i32
    return %c0_i32, %c0_i32_0 : i32, i32
  }
  func.func @transform_11(%arg0: i32) -> (i32, i32) {
    %c0_i32 = arith.constant 0 : i32
    %c0_i32_0 = arith.constant 0 : i32
    return %arg0, %c0_i32 : i32, i32
  }
}

module attributes {stable_mosaic.version = 11 : i64} {
  func.func @pointnet_kernel(%arg0: i32, %arg1: memref<16x3xf32, #tpu.memory_space<vmem>>, %arg2: memref<3x64xf32, #tpu.memory_space<vmem>>, %arg3: memref<1x64xf32, #tpu.memory_space<vmem>>, %arg4: memref<64x128xbf16, #tpu.memory_space<vmem>>, %arg5: memref<1x128xf32, #tpu.memory_space<vmem>>, %arg6: memref<128x1024xbf16, #tpu.memory_space<vmem>>, %arg7: memref<1x1024xf32, #tpu.memory_space<vmem>>, %arg8: memref<1024x512xbf16, #tpu.memory_space<vmem>>, %arg9: memref<1x512xf32, #tpu.memory_space<vmem>>, %arg10: memref<512x256xbf16, #tpu.memory_space<vmem>>, %arg11: memref<1x256xf32, #tpu.memory_space<vmem>>, %arg12: memref<16x256xf32, #tpu.memory_space<vmem>>) attributes {dimension_semantics = [#tpu.dimension_semantics<parallel>], iteration_bounds = array<i64: 1>, scalar_prefetch = 0 : i64, scratch_operands = 0 : i64, tpu.core_type = #tpu.core_type<tc>, window_params = [{transform_indices = @transform_0, window_bounds = array<i64: 16, 3>}, {pipeline_mode = #tpu.pipeline_mode<synchronous>, transform_indices = @transform_1, window_bounds = array<i64: 3, 64>}, {pipeline_mode = #tpu.pipeline_mode<synchronous>, transform_indices = @transform_2, window_bounds = array<i64: 1, 64>}, {pipeline_mode = #tpu.pipeline_mode<synchronous>, transform_indices = @transform_3, window_bounds = array<i64: 64, 128>}, {pipeline_mode = #tpu.pipeline_mode<synchronous>, transform_indices = @transform_4, window_bounds = array<i64: 1, 128>}, {pipeline_mode = #tpu.pipeline_mode<synchronous>, transform_indices = @transform_5, window_bounds = array<i64: 128, 1024>}, {pipeline_mode = #tpu.pipeline_mode<synchronous>, transform_indices = @transform_6, window_bounds = array<i64: 1, 1024>}, {pipeline_mode = #tpu.pipeline_mode<synchronous>, transform_indices = @transform_7, window_bounds = array<i64: 1024, 512>}, {pipeline_mode = #tpu.pipeline_mode<synchronous>, transform_indices = @transform_8, window_bounds = array<i64: 1, 512>}, {pipeline_mode = #tpu.pipeline_mode<synchronous>, transform_indices = @transform_9, window_bounds = array<i64: 512, 256>}, {pipeline_mode = #tpu.pipeline_mode<synchronous>, transform_indices = @transform_10, window_bounds = array<i64: 1, 256>}, {transform_indices = @transform_11, window_bounds = array<i64: 16, 256>}]} {
    %c0 = arith.constant 0 : index
    %c0_0 = arith.constant 0 : index
    %0 = vector.load %arg1[%c0, %c0_0] : memref<16x3xf32, #tpu.memory_space<vmem>>, vector<16x3xf32>
    %c0_1 = arith.constant 0 : index
    %c0_2 = arith.constant 0 : index
    %1 = vector.load %arg2[%c0_1, %c0_2] : memref<3x64xf32, #tpu.memory_space<vmem>>, vector<3x64xf32>
    %2 = vector.extract_strided_slice %0 {offsets = [0, 0], sizes = [16, 1], strides = [1, 1]} : vector<16x3xf32> to vector<16x1xf32>
    %3 = vector.extract_strided_slice %1 {offsets = [0, 0], sizes = [1, 64], strides = [1, 1]} : vector<3x64xf32> to vector<1x64xf32>
    %4 = vector.broadcast %2 : vector<16x1xf32> to vector<16x64xf32>
    %5 = vector.broadcast %3 : vector<1x64xf32> to vector<16x64xf32>
    %6 = arith.mulf %4, %5 : vector<16x64xf32>
    %7 = vector.extract_strided_slice %0 {offsets = [0, 1], sizes = [16, 1], strides = [1, 1]} : vector<16x3xf32> to vector<16x1xf32>
    %8 = vector.extract_strided_slice %1 {offsets = [1, 0], sizes = [1, 64], strides = [1, 1]} : vector<3x64xf32> to vector<1x64xf32>
    %9 = vector.broadcast %7 : vector<16x1xf32> to vector<16x64xf32>
    %10 = vector.broadcast %8 : vector<1x64xf32> to vector<16x64xf32>
    %11 = arith.mulf %9, %10 : vector<16x64xf32>
    %12 = arith.addf %6, %11 : vector<16x64xf32>
    %13 = vector.extract_strided_slice %0 {offsets = [0, 2], sizes = [16, 1], strides = [1, 1]} : vector<16x3xf32> to vector<16x1xf32>
    %14 = vector.extract_strided_slice %1 {offsets = [2, 0], sizes = [1, 64], strides = [1, 1]} : vector<3x64xf32> to vector<1x64xf32>
    %15 = vector.broadcast %13 : vector<16x1xf32> to vector<16x64xf32>
    %16 = vector.broadcast %14 : vector<1x64xf32> to vector<16x64xf32>
    %17 = arith.mulf %15, %16 : vector<16x64xf32>
    %18 = arith.addf %12, %17 : vector<16x64xf32>
    %c0_3 = arith.constant 0 : index
    %c0_4 = arith.constant 0 : index
    %19 = vector.load %arg3[%c0_3, %c0_4] : memref<1x64xf32, #tpu.memory_space<vmem>>, vector<1x64xf32>
    %20 = vector.broadcast %19 : vector<1x64xf32> to vector<16x64xf32>
    %21 = arith.addf %18, %20 : vector<16x64xf32>
    %cst = arith.constant 0.000000e+00 : f32
    %22 = vector.broadcast %cst : f32 to vector<16x64xf32>
    %23 = arith.maximumf %21, %22 : vector<16x64xf32>
    %24 = arith.truncf %23 : vector<16x64xf32> to vector<16x64xbf16>
    %c0_5 = arith.constant 0 : index
    %c0_6 = arith.constant 0 : index
    %25 = vector.load %arg4[%c0_5, %c0_6] : memref<64x128xbf16, #tpu.memory_space<vmem>>, vector<64x128xbf16>
    %cst_7 = arith.constant dense<0.000000e+00> : vector<16x128xf32>
    %26 = tpu.matmul %24, %25, %cst_7 {dimension_numbers = #tpu.dot_dimension_numbers<[1], [0], [0], [1], [0, 0, 1, 1], [], []>} : vector<16x64xbf16>, vector<64x128xbf16>, vector<16x128xf32> -> vector<16x128xf32>
    %c0_8 = arith.constant 0 : index
    %c0_9 = arith.constant 0 : index
    %27 = vector.load %arg5[%c0_8, %c0_9] : memref<1x128xf32, #tpu.memory_space<vmem>>, vector<1x128xf32>
    %28 = vector.broadcast %27 : vector<1x128xf32> to vector<16x128xf32>
    %29 = arith.addf %26, %28 : vector<16x128xf32>
    %cst_10 = arith.constant 0.000000e+00 : f32
    %30 = vector.broadcast %cst_10 : f32 to vector<16x128xf32>
    %31 = arith.maximumf %29, %30 : vector<16x128xf32>
    %32 = arith.truncf %31 : vector<16x128xf32> to vector<16x128xbf16>
    %c0_11 = arith.constant 0 : index
    %c0_12 = arith.constant 0 : index
    %33 = vector.load %arg6[%c0_11, %c0_12] : memref<128x1024xbf16, #tpu.memory_space<vmem>>, vector<128x1024xbf16>
    %cst_13 = arith.constant dense<0.000000e+00> : vector<16x1024xf32>
    %34 = tpu.matmul %32, %33, %cst_13 {dimension_numbers = #tpu.dot_dimension_numbers<[1], [0], [0], [1], [0, 0, 1, 1], [], []>} : vector<16x128xbf16>, vector<128x1024xbf16>, vector<16x1024xf32> -> vector<16x1024xf32>
    %c0_14 = arith.constant 0 : index
    %c0_15 = arith.constant 0 : index
    %35 = vector.load %arg7[%c0_14, %c0_15] : memref<1x1024xf32, #tpu.memory_space<vmem>>, vector<1x1024xf32>
    %36 = vector.broadcast %35 : vector<1x1024xf32> to vector<16x1024xf32>
    %37 = arith.addf %34, %36 : vector<16x1024xf32>
    %cst_16 = arith.constant 0.000000e+00 : f32
    %38 = vector.broadcast %cst_16 : f32 to vector<16x1024xf32>
    %39 = arith.maximumf %37, %38 : vector<16x1024xf32>
    %40 = arith.truncf %39 : vector<16x1024xf32> to vector<16x1024xbf16>
    %c0_17 = arith.constant 0 : index
    %c0_18 = arith.constant 0 : index
    %41 = vector.load %arg8[%c0_17, %c0_18] : memref<1024x512xbf16, #tpu.memory_space<vmem>>, vector<1024x512xbf16>
    %cst_19 = arith.constant dense<0.000000e+00> : vector<16x512xf32>
    %42 = tpu.matmul %40, %41, %cst_19 {dimension_numbers = #tpu.dot_dimension_numbers<[1], [0], [0], [1], [0, 0, 1, 1], [], []>} : vector<16x1024xbf16>, vector<1024x512xbf16>, vector<16x512xf32> -> vector<16x512xf32>
    %c0_20 = arith.constant 0 : index
    %c0_21 = arith.constant 0 : index
    %43 = vector.load %arg9[%c0_20, %c0_21] : memref<1x512xf32, #tpu.memory_space<vmem>>, vector<1x512xf32>
    %44 = vector.broadcast %43 : vector<1x512xf32> to vector<16x512xf32>
    %45 = arith.addf %42, %44 : vector<16x512xf32>
    %cst_22 = arith.constant 0.000000e+00 : f32
    %46 = vector.broadcast %cst_22 : f32 to vector<16x512xf32>
    %47 = arith.maximumf %45, %46 : vector<16x512xf32>
    %48 = arith.truncf %47 : vector<16x512xf32> to vector<16x512xbf16>
    %c0_23 = arith.constant 0 : index
    %c0_24 = arith.constant 0 : index
    %49 = vector.load %arg10[%c0_23, %c0_24] : memref<512x256xbf16, #tpu.memory_space<vmem>>, vector<512x256xbf16>
    %cst_25 = arith.constant dense<0.000000e+00> : vector<16x256xf32>
    %50 = tpu.matmul %48, %49, %cst_25 {dimension_numbers = #tpu.dot_dimension_numbers<[1], [0], [0], [1], [0, 0, 1, 1], [], []>} : vector<16x512xbf16>, vector<512x256xbf16>, vector<16x256xf32> -> vector<16x256xf32>
    %c0_26 = arith.constant 0 : index
    %c0_27 = arith.constant 0 : index
    %51 = vector.load %arg11[%c0_26, %c0_27] : memref<1x256xf32, #tpu.memory_space<vmem>>, vector<1x256xf32>
    %52 = vector.broadcast %51 : vector<1x256xf32> to vector<16x256xf32>
    %53 = arith.addf %50, %52 : vector<16x256xf32>
    %c0_28 = arith.constant 0 : index
    %c0_29 = arith.constant 0 : index
    %54 = vector.load %arg12[%c0_28, %c0_29] : memref<16x256xf32, #tpu.memory_space<vmem>>, vector<16x256xf32>
    tpu.vector_store %arg12[%c0_28, %c0_29], %53 {strides = array<i32>} : memref<16x256xf32, #tpu.memory_space<vmem>>, vector<16x256xf32>,
    return
  }
  func.func @transform_0(%arg0: i32) -> (i32, i32) {
    %c0_i32 = arith.constant 0 : i32
    %c0_i32_0 = arith.constant 0 : i32
    return %arg0, %c0_i32 : i32, i32
  }
  func.func @transform_1(%arg0: i32) -> (i32, i32) {
    %c0_i32 = arith.constant 0 : i32
    %c0_i32_0 = arith.constant 0 : i32
    %c0_i32_1 = arith.constant 0 : i32
    return %c0_i32, %c0_i32_0 : i32, i32
  }
  func.func @transform_2(%arg0: i32) -> (i32, i32) {
    %c0_i32 = arith.constant 0 : i32
    %c0_i32_0 = arith.constant 0 : i32
    %c0_i32_1 = arith.constant 0 : i32
    return %c0_i32, %c0_i32_0 : i32, i32
  }
  func.func @transform_3(%arg0: i32) -> (i32, i32) {
    %c0_i32 = arith.constant 0 : i32
    %c0_i32_0 = arith.constant 0 : i32
    %c0_i32_1 = arith.constant 0 : i32
    return %c0_i32, %c0_i32_0 : i32, i32
  }
  func.func @transform_4(%arg0: i32) -> (i32, i32) {
    %c0_i32 = arith.constant 0 : i32
    %c0_i32_0 = arith.constant 0 : i32
    %c0_i32_1 = arith.constant 0 : i32
    return %c0_i32, %c0_i32_0 : i32, i32
  }
  func.func @transform_5(%arg0: i32) -> (i32, i32) {
    %c0_i32 = arith.constant 0 : i32
    %c0_i32_0 = arith.constant 0 : i32
    %c0_i32_1 = arith.constant 0 : i32
    return %c0_i32, %c0_i32_0 : i32, i32
  }
  func.func @transform_6(%arg0: i32) -> (i32, i32) {
    %c0_i32 = arith.constant 0 : i32
    %c0_i32_0 = arith.constant 0 : i32
    %c0_i32_1 = arith.constant 0 : i32
    return %c0_i32, %c0_i32_0 : i32, i32
  }
  func.func @transform_7(%arg0: i32) -> (i32, i32) {
    %c0_i32 = arith.constant 0 : i32
    %c0_i32_0 = arith.constant 0 : i32
    %c0_i32_1 = arith.constant 0 : i32
    return %c0_i32, %c0_i32_0 : i32, i32
  }
  func.func @transform_8(%arg0: i32) -> (i32, i32) {
    %c0_i32 = arith.constant 0 : i32
    %c0_i32_0 = arith.constant 0 : i32
    %c0_i32_1 = arith.constant 0 : i32
    return %c0_i32, %c0_i32_0 : i32, i32
  }
  func.func @transform_9(%arg0: i32) -> (i32, i32) {
    %c0_i32 = arith.constant 0 : i32
    %c0_i32_0 = arith.constant 0 : i32
    %c0_i32_1 = arith.constant 0 : i32
    return %c0_i32, %c0_i32_0 : i32, i32
  }
  func.func @transform_10(%arg0: i32) -> (i32, i32) {
    %c0_i32 = arith.constant 0 : i32
    %c0_i32_0 = arith.constant 0 : i32
    %c0_i32_1 = arith.constant 0 : i32
    return %c0_i32, %c0_i32_0 : i32, i32
  }
  func.func @transform_11(%arg0: i32) -> (i32, i32) {
    %c0_i32 = arith.constant 0 : i32
    %c0_i32_0 = arith.constant 0 : i32
    return %arg0, %c0_i32 : i32, i32
  }
}

</mosaic_0001>

<llo_original>
// kernel: tpu_custom_call.1
$region0: #{tpu_custom_call.1}
  #allocation0 [shape = 'u32[]', space=smem, size = 0x4, offset = 0x4, fixed_abs, tag = 'smem constant byte address 0x4 - core index']
  #allocation1 [shape = 'u32[72,128]{1,0:T(1,128)}', space=vmem, size = 0x9000, scoped, tag = 'internal scratch']
  %s0 = inlined_call_operand.vmem [shape: f32[16,3], index: 0, kind: input, shape index: {}]
  %s1 = inlined_call_operand.vmem [shape: f32[3,64], index: 1, kind: input, shape index: {}]
  %s2 = inlined_call_operand.vmem [shape: f32[1,64], index: 2, kind: input, shape index: {}]
  %s3 = inlined_call_operand.hbm [shape: bf16[64,128], index: 3, kind: input, shape index: {}]
  %s4 = inlined_call_operand.vmem [shape: f32[1,128], index: 4, kind: input, shape index: {}]
  %s5 = inlined_call_operand.hbm [shape: bf16[128,1024], index: 5, kind: input, shape index: {}]
  %s6 = inlined_call_operand.vmem [shape: f32[1,1024], index: 6, kind: input, shape index: {}]
  %s7 = inlined_call_operand.hbm [shape: bf16[1024,512], index: 7, kind: input, shape index: {}]
  %s8 = inlined_call_operand.vmem [shape: f32[1,512], index: 8, kind: input, shape index: {}]
  %s9 = inlined_call_operand.hbm [shape: bf16[512,256], index: 9, kind: input, shape index: {}]
  %s10 = inlined_call_operand.vmem [shape: f32[1,256], index: 10, kind: input, shape index: {}]
  %s11 = inlined_call_operand.hbm [shape: f32[16,256], index: 11, kind: output, shape index: {}]
  %s12 = sld [smem:[#allocation0]]
  $region70: #{tpu_custom_call.1} parent=0
    _
  %s14 = ssub.s32 1, %s12
  %s15 = scalar_select 0, %s14, %s12
  $region1: #{tpu_custom_call.1} parent=0
    #allocation2 [shape = 'u8[16384]{0}', space=vmem, size = 0x4000, scoped, tag = 'input window, operand 3, single buffered']
    #allocation3 [shape = 's32[1]{0}', space=sflag, size = 0x4, scoped, tag = 'scoped memory for tpu_custom_call.1']
    #allocation4 [shape = 's32[1]{0}', space=sflag, size = 0x4, scoped, tag = 'scoped memory for tpu_custom_call.1']
    #allocation5 [shape = 'u8[262144]{0}', space=vmem, size = 0x40000, scoped, tag = 'input window, operand 5, single buffered']
    #allocation6 [shape = 's32[1]{0}', space=sflag, size = 0x4, scoped, tag = 'scoped memory for tpu_custom_call.1']
    #allocation7 [shape = 'u8[1048576]{0}', space=vmem, size = 0x100000, scoped, tag = 'input window, operand 7, single buffered']
    #allocation8 [shape = 'u8[262144]{0}', space=vmem, size = 0x40000, scoped, tag = 'input window, operand 9, single buffered']
    #allocation9 [shape = 's32[1]{0}', space=sflag, size = 0x4, scoped, tag = 'scoped memory for tpu_custom_call.1']
    #allocation10 [shape = 'u8[16384]{0}', space=vmem, size = 0x4000, scoped, tag = 'output window, operand 0, single buffered']
    %16 = vsyncpa [#allocation3], 0
    %17 = vsyncpa [#allocation6], 0
    %18 = vsyncpa [#allocation9], 0
    %19 = vsyncpa [#allocation4], 0
    // Predicated region
    $region2: #{tpu_custom_call.1} parent=1 // pred_check
      _
    $region3: #{tpu_custom_call.1} parent=1 // pred_check_branch
      %21 = sbr.rel (0) target = $region5
    $region4: #{tpu_custom_call.1} parent=1 // pred_region
      _
    $region5: #{tpu_custom_call.1} parent=1 // pred_fallthru
      _
    // Predicated region
    $region6: #{tpu_custom_call.1} parent=1 // pred_check
      _
    $region7: #{tpu_custom_call.1} parent=1 // pred_check_branch
      %23 = sbr.rel (0) target = $region9
    $region8: #{tpu_custom_call.1} parent=1 // pred_region
      _
    $region9: #{tpu_custom_call.1} parent=1 // pred_fallthru
      _
    // Predicated region
    $region10: #{tpu_custom_call.1} parent=1 // pred_check
      _
    $region11: #{tpu_custom_call.1} parent=1 // pred_check_branch
      %25 = sbr.rel (0) target = $region13
    $region12: #{tpu_custom_call.1} parent=1 // pred_region
      _
    $region13: #{tpu_custom_call.1} parent=1 // pred_fallthru
      _
    // Predicated region
    $region14: #{tpu_custom_call.1} parent=1 // pred_check
      _
    $region15: #{tpu_custom_call.1} parent=1 // pred_check_branch
      %27 = sbr.rel (0) target = $region17
    $region16: #{tpu_custom_call.1} parent=1 // pred_region
      %29 = vsyncadd [#allocation3], 0
      %s30 = sshll.u32 %s3, 4
      %s31 = int_to_ptr.hbm [resolvable:$true] %s30
      %s32 = sshll.u32 [#allocation2], 4
      %s33 = int_to_ptr.vmem [resolvable:$true] %s32
      %38 = dma.hbm_to_vmem [thread:$0]  %s31, 512, %s33, [#allocation3], 64, 64, 4
    $region17: #{tpu_custom_call.1} parent=1 // pred_fallthru
      _
    // Predicated region
    $region18: #{tpu_custom_call.1} parent=1 // pred_check
      _
    $region19: #{tpu_custom_call.1} parent=1 // pred_check_branch
      %40 = sbr.rel (0) target = $region21
    $region20: #{tpu_custom_call.1} parent=1 // pred_region
      _
    $region21: #{tpu_custom_call.1} parent=1 // pred_fallthru
      _
    // Predicated region
    $region22: #{tpu_custom_call.1} parent=1 // pred_check
      _
    $region23: #{tpu_custom_call.1} parent=1 // pred_check_branch
      %42 = sbr.rel (0) target = $region25
    $region24: #{tpu_custom_call.1} parent=1 // pred_region
      %44 = vsyncadd [#allocation6], 0
      %s45 = sshll.u32 %s5, 4
      %s46 = int_to_ptr.hbm [resolvable:$true] %s45
      %s47 = sshll.u32 [#allocation5], 4
      %s48 = int_to_ptr.vmem [resolvable:$true] %s47
      %53 = dma.hbm_to_vmem [thread:$0]  %s46, 8192, %s48, [#allocation6], 512, 512, 32
    $region25: #{tpu_custom_call.1} parent=1 // pred_fallthru
      _
    // Predicated region
    $region26: #{tpu_custom_call.1} parent=1 // pred_check
      _
    $region27: #{tpu_custom_call.1} parent=1 // pred_check_branch
      %55 = sbr.rel (0) target = $region29
    $region28: #{tpu_custom_call.1} parent=1 // pred_region
      _
    $region29: #{tpu_custom_call.1} parent=1 // pred_fallthru
      _
    // Predicated region
    $region30: #{tpu_custom_call.1} parent=1 // pred_check
      _
    $region31: #{tpu_custom_call.1} parent=1 // pred_check_branch
      %57 = sbr.rel (0) target = $region33
    $region32: #{tpu_custom_call.1} parent=1 // pred_region
      %59 = vsyncadd [#allocation6], 0
      %s60 = sshll.u32 %s7, 4
      %s61 = int_to_ptr.hbm [resolvable:$true] %s60
      %s62 = sshll.u32 [#allocation7], 4
      %s63 = int_to_ptr.vmem [resolvable:$true] %s62
      %68 = dma.hbm_to_vmem [thread:$0]  %s61, 32768, %s63, [#allocation6], 256, 256, 16
    $region33: #{tpu_custom_call.1} parent=1 // pred_fallthru
      _
    // Predicated region
    $region34: #{tpu_custom_call.1} parent=1 // pred_check
      _
    $region35: #{tpu_custom_call.1} parent=1 // pred_check_branch
      %70 = sbr.rel (0) target = $region37
    $region36: #{tpu_custom_call.1} parent=1 // pred_region
      _
    $region37: #{tpu_custom_call.1} parent=1 // pred_fallthru
      _
    // Predicated region
    $region38: #{tpu_custom_call.1} parent=1 // pred_check
      _
    $region39: #{tpu_custom_call.1} parent=1 // pred_check_branch
      %72 = sbr.rel (0) target = $region41
    $region40: #{tpu_custom_call.1} parent=1 // pred_region
      %74 = vsyncadd [#allocation9], 0
      %s75 = sshll.u32 %s9, 4
      %s76 = int_to_ptr.hbm [resolvable:$true] %s75
      %s77 = sshll.u32 [#allocation8], 4
      %s78 = int_to_ptr.vmem [resolvable:$true] %s77
      %83 = dma.hbm_to_vmem [thread:$0]  %s76, 8192, %s78, [#allocation9], 128, 128, 8
    $region41: #{tpu_custom_call.1} parent=1 // pred_fallthru
      _
    // Predicated region
    $region42: #{tpu_custom_call.1} parent=1 // pred_check
      _
    $region43: #{tpu_custom_call.1} parent=1 // pred_check_branch
      %85 = sbr.rel (0) target = $region45
    $region44: #{tpu_custom_call.1} parent=1 // pred_region
      _
    $region45: #{tpu_custom_call.1} parent=1 // pred_fallthru
      _
    // Predicated region
    $region46: #{tpu_custom_call.1} parent=1 // pred_check
      _
    $region47: #{tpu_custom_call.1} parent=1 // pred_check_branch
      %87 = sbr.rel (0) target = $region49
    $region48: #{tpu_custom_call.1} parent=1 // pred_region
      %89 = dma.done [#allocation3], 512
    $region49: #{tpu_custom_call.1} parent=1 // pred_fallthru
      _
    // Predicated region
    $region50: #{tpu_custom_call.1} parent=1 // pred_check
      _
    $region51: #{tpu_custom_call.1} parent=1 // pred_check_branch
      %91 = sbr.rel (0) target = $region53
    $region52: #{tpu_custom_call.1} parent=1 // pred_region
      %93 = dma.done [#allocation6], 8192
    $region53: #{tpu_custom_call.1} parent=1 // pred_fallthru
      _
    // Predicated region
    $region54: #{tpu_custom_call.1} parent=1 // pred_check
      _
    $region55: #{tpu_custom_call.1} parent=1 // pred_check_branch
      %95 = sbr.rel (0) target = $region57
    $region56: #{tpu_custom_call.1} parent=1 // pred_region
      %97 = dma.done [#allocation6], 32768
    $region57: #{tpu_custom_call.1} parent=1 // pred_fallthru
      _
    // Predicated region
    $region58: #{tpu_custom_call.1} parent=1 // pred_check
      _
    $region59: #{tpu_custom_call.1} parent=1 // pred_check_branch
      %99 = sbr.rel (0) target = $region61
    $region60: #{tpu_custom_call.1} parent=1 // pred_region
      %101 = dma.done [#allocation9], 8192
    $region61: #{tpu_custom_call.1} parent=1 // pred_fallthru
      _
    %v103 = vld [vmem:[%s0] sm:$0xff]
    %v104 = vld [vmem:[%s0 + $0x8] sm:$0xff]
    %v105 = vld [vmem:[%s1] sm:$0x7]
    %107 = vset.pattern.permute.xlu0 0
    %108 = vperm.xlu0 %107, %v103
    %v109 = vpop.permute.xlu0 %108
    %112 = vset.pattern.permute.xlu0 0
    %113 = vperm.xlu0 %112, %v104
    %v114 = vpop.permute.xlu0 %113
    %v116 = vperm.slane %v105, 0
    %v117 = vmul.f32 %v109, %v116
    %v118 = vmul.f32 %v114, %v116
    %119 = vset.pattern.permute.xlu0 1
    %120 = vperm.xlu0 %119, %v103
    %v121 = vpop.permute.xlu0 %120
    %123 = vset.pattern.permute.xlu0 1
    %124 = vperm.xlu0 %123, %v104
    %v125 = vpop.permute.xlu0 %124
    %v127 = vperm.slane %v105, 1
    %v128 = vmul.f32 %v121, %v127
    %v129 = vmul.f32 %v125, %v127
    %v130 = vadd.f32 %v117, %v128
    %v131 = vadd.f32 %v118, %v129
    %132 = vset.pattern.permute.xlu0 2
    %133 = vperm.xlu0 %132, %v103
    %v134 = vpop.permute.xlu0 %133
    %136 = vset.pattern.permute.xlu0 2
    %137 = vperm.xlu0 %136, %v104
    %v138 = vpop.permute.xlu0 %137
    %v140 = vperm.slane %v105, 2
    %v141 = vmul.f32 %v134, %v140
    %v142 = vmul.f32 %v138, %v140
    %v143 = vadd.f32 %v130, %v141
    %v144 = vadd.f32 %v131, %v142
    %v145 = vld [vmem:[%s2] sm:$0x1]
    %v147 = vperm.slane %v145, 0
    %v149 = vadd.f32 %v143, %v147
    %v150 = vadd.f32 %v144, %v147
    %v151 = vmax.f32 %v149, 0.0
    %v152 = vmax.f32 %v150, 0.0
    %v153 = vpack.c.bf16 %v152, %v151
    %v154 = vld [vmem:[#allocation2] sm:$0xf]
    %v155 = vld [vmem:[#allocation2 + $0x4] sm:$0xf]
    %v156 = vld [vmem:[#allocation2 + $0x8] sm:$0xf]
    %v157 = vld [vmem:[#allocation2 + $0xc] sm:$0xf]
    %v158 = vld [vmem:[#allocation2 + $0x10] sm:$0xf]
    %v159 = vld [vmem:[#allocation2 + $0x14] sm:$0xf]
    %v160 = vld [vmem:[#allocation2 + $0x18] sm:$0xf]
    %v161 = vld [vmem:[#allocation2 + $0x1c] sm:$0xf]
    %v162 = vld [vmem:[%s4] sm:$0x1]
    %v164 = vperm.slane %v162, 0
    %v174 = vunpack.c.l.b16 %v154
    %v175 = vunpack.c.l.b16 %v155
    %v176 = vunpack.c.l.b16 %v156
    %v177 = vunpack.c.l.b16 %v157
    %v178 = vunpack.c.l.b16 %v158
    %v179 = vunpack.c.l.b16 %v159
    %v180 = vunpack.c.l.b16 %v160
    %v181 = vunpack.c.l.b16 %v161
    %v182 = vpack.c.b16 %v175, %v174
    %v183 = vpack.c.b16 %v177, %v176
    %v184 = vpack.c.b16 %v179, %v178
    %v185 = vpack.c.b16 %v181, %v180
    %vm190 = vcmask 523264
    %v192 = vsel %vm190, %v153, 0
    %194 = vmatpush.bf16.msra.mxu0 0
    %195 = vmatpush.bf16.msra.mxu0 0
    %196 = vmatpush.bf16.msra.mxu0 0
    %197 = vmatpush.bf16.msra.mxu0 0
    %198 = vmatpush.bf16.msra.mxu0 %v185
    %199 = vmatpush.bf16.msra.mxu0 %v184
    %200 = vmatpush.bf16.msra.mxu0 %v183
    %201 = vmatpush.bf16.msra.mxu0 %v182
    %202 = vmatmul.bf16.gmra.mxu0 %v192
    %v203 = vpop.f32.mrf.mxu0
    %v204 = vadd.f32 %v164, %v203
    %v205 = vpop.f32.mrf.mxu0
    %v206 = vadd.f32 %v164, %v205
    %207 = vdwg.mxu0
    %v208 = vmax.f32 %v204, 0.0
    %v209 = vmax.f32 %v206, 0.0
    %v210 = vpack.c.bf16 %v209, %v208
    %v211 = vld [vmem:[#allocation5] sm:$0xff]
    %v212 = vld [vmem:[#allocation5 + $0x8] sm:$0xff]
    %v213 = vld [vmem:[#allocation5 + $0x10] sm:$0xff]
    %v214 = vld [vmem:[#allocation5 + $0x18] sm:$0xff]
    %v215 = vld [vmem:[#allocation5 + $0x20] sm:$0xff]
    %v216 = vld [vmem:[#allocation5 + $0x28] sm:$0xff]
    %v217 = vld [vmem:[#allocation5 + $0x30] sm:$0xff]
    %v218 = vld [vmem:[#allocation5 + $0x38] sm:$0xff]
    %v219 = vld [vmem:[#allocation5 + $0x40] sm:$0xff]
    %v220 = vld [vmem:[#allocation5 + $0x48] sm:$0xff]
    %v221 = vld [vmem:[#allocation5 + $0x50] sm:$0xff]
    %v222 = vld [vmem:[#allocation5 + $0x58] sm:$0xff]
    %v223 = vld [vmem:[#allocation5 + $0x60] sm:$0xff]
    %v224 = vld [vmem:[#allocation5 + $0x68] sm:$0xff]
    %v225 = vld [vmem:[#allocation5 + $0x70] sm:$0xff]
    %v226 = vld [vmem:[#allocation5 + $0x78] sm:$0xff]
    %v227 = vld [vmem:[#allocation5 + $0x80] sm:$0xff]
    %v228 = vld [vmem:[#allocation5 + $0x88] sm:$0xff]
    %v229 = vld [vmem:[#allocation5 + $0x90] sm:$0xff]
    %v230 = vld [vmem:[#allocation5 + $0x98] sm:$0xff]
    %v231 = vld [vmem:[#allocation5 + $0xa0] sm:$0xff]
    %v232 = vld [vmem:[#allocation5 + $0xa8] sm:$0xff]
    %v233 = vld [vmem:[#allocation5 + $0xb0] sm:$0xff]
    %v234 = vld [vmem:[#allocation5 + $0xb8] sm:$0xff]
    %v235 = vld [vmem:[#allocation5 + $0xc0] sm:$0xff]
    %v236 = vld [vmem:[#allocation5 + $0xc8] sm:$0xff]
    %v237 = vld [vmem:[#allocation5 + $0xd0] sm:$0xff]
    %v238 = vld [vmem:[#allocation5 + $0xd8] sm:$0xff]
    %v239 = vld [vmem:[#allocation5 + $0xe0] sm:$0xff]
    %v240 = vld [vmem:[#allocation5 + $0xe8] sm:$0xff]
    %v241 = vld [vmem:[#allocation5 + $0xf0] sm:$0xff]
    %v242 = vld [vmem:[#allocation5 + $0xf8] sm:$0xff]
    %v243 = vld [vmem:[#allocation5 + $0x100] sm:$0xff]
    %v244 = vld [vmem:[#allocation5 + $0x108] sm:$0xff]
    %v245 = vld [vmem:[#allocation5 + $0x110] sm:$0xff]
    %v246 = vld [vmem:[#allocation5 + $0x118] sm:$0xff]
    %v247 = vld [vmem:[#allocation5 + $0x120] sm:$0xff]
    %v248 = vld [vmem:[#allocation5 + $0x128] sm:$0xff]
    %v249 = vld [vmem:[#allocation5 + $0x130] sm:$0xff]
    %v250 = vld [vmem:[#allocation5 + $0x138] sm:$0xff]
    %v251 = vld [vmem:[#allocation5 + $0x140] sm:$0xff]
    %v252 = vld [vmem:[#allocation5 + $0x148] sm:$0xff]
    %v253 = vld [vmem:[#allocation5 + $0x150] sm:$0xff]
    %v254 = vld [vmem:[#allocation5 + $0x158] sm:$0xff]
    %v255 = vld [vmem:[#allocation5 + $0x160] sm:$0xff]
    %v256 = vld [vmem:[#allocation5 + $0x168] sm:$0xff]
    %v257 = vld [vmem:[#allocation5 + $0x170] sm:$0xff]
    %v258 = vld [vmem:[#allocation5 + $0x178] sm:$0xff]
    %v259 = vld [vmem:[#allocation5 + $0x180] sm:$0xff]
    %v260 = vld [vmem:[#allocation5 + $0x188] sm:$0xff]
    %v261 = vld [vmem:[#allocation5 + $0x190] sm:$0xff]
    %v262 = vld [vmem:[#allocation5 + $0x198] sm:$0xff]
    %v263 = vld [vmem:[#allocation5 + $0x1a0] sm:$0xff]
    %v264 = vld [vmem:[#allocation5 + $0x1a8] sm:$0xff]
    %v265 = vld [vmem:[#allocation5 + $0x1b0] sm:$0xff]
    %v266 = vld [vmem:[#allocation5 + $0x1b8] sm:$0xff]
    %v267 = vld [vmem:[#allocation5 + $0x1c0] sm:$0xff]
    %v268 = vld [vmem:[#allocation5 + $0x1c8] sm:$0xff]
    %v269 = vld [vmem:[#allocation5 + $0x1d0] sm:$0xff]
    %v270 = vld [vmem:[#allocation5 + $0x1d8] sm:$0xff]
    %v271 = vld [vmem:[#allocation5 + $0x1e0] sm:$0xff]
    %v272 = vld [vmem:[#allocation5 + $0x1e8] sm:$0xff]
    %v273 = vld [vmem:[#allocation5 + $0x1f0] sm:$0xff]
    %v274 = vld [vmem:[#allocation5 + $0x1f8] sm:$0xff]
    %v275 = vld [vmem:[%s6] sm:$0xff]
    %v277 = vperm.slane %v275, 0
    %v278 = vperm.slane %v275, 1
    %v279 = vperm.slane %v275, 2
    %v280 = vperm.slane %v275, 3
    %v281 = vperm.slane %v275, 4
    %v282 = vperm.slane %v275, 5
    %v283 = vperm.slane %v275, 6
    %v284 = vperm.slane %v275, 7
    %v357 = vunpack.c.l.b16 %v211
    %v358 = vunpack.c.h.b16 %v211
    %v359 = vunpack.c.l.b16 %v212
    %v360 = vunpack.c.h.b16 %v212
    %v361 = vunpack.c.l.b16 %v213
    %v362 = vunpack.c.h.b16 %v213
    %v363 = vunpack.c.l.b16 %v214
    %v364 = vunpack.c.h.b16 %v214
    %v365 = vunpack.c.l.b16 %v215
    %v366 = vunpack.c.h.b16 %v215
    %v367 = vunpack.c.l.b16 %v216
    %v368 = vunpack.c.h.b16 %v216
    %v369 = vunpack.c.l.b16 %v217
    %v370 = vunpack.c.h.b16 %v217
    %v371 = vunpack.c.l.b16 %v218
    %v372 = vunpack.c.h.b16 %v218
    %v373 = vunpack.c.l.b16 %v219
    %v374 = vunpack.c.h.b16 %v219
    %v375 = vunpack.c.l.b16 %v220
    %v376 = vunpack.c.h.b16 %v220
    %v377 = vunpack.c.l.b16 %v221
    %v378 = vunpack.c.h.b16 %v221
    %v379 = vunpack.c.l.b16 %v222
    %v380 = vunpack.c.h.b16 %v222
    %v381 = vunpack.c.l.b16 %v223
    %v382 = vunpack.c.h.b16 %v223
    %v383 = vunpack.c.l.b16 %v224
    %v384 = vunpack.c.h.b16 %v224
    %v385 = vunpack.c.l.b16 %v225
    %v386 = vunpack.c.h.b16 %v225
    %v387 = vunpack.c.l.b16 %v226
    %v388 = vunpack.c.h.b16 %v226
    %v389 = vunpack.c.l.b16 %v227
    %v390 = vunpack.c.h.b16 %v227
    %v391 = vunpack.c.l.b16 %v228
    %v392 = vunpack.c.h.b16 %v228
    %v393 = vunpack.c.l.b16 %v229
    %v394 = vunpack.c.h.b16 %v229
    %v395 = vunpack.c.l.b16 %v230
    %v396 = vunpack.c.h.b16 %v230
    %v397 = vunpack.c.l.b16 %v231
    %v398 = vunpack.c.h.b16 %v231
    %v399 = vunpack.c.l.b16 %v232
    %v400 = vunpack.c.h.b16 %v232
    %v401 = vunpack.c.l.b16 %v233
    %v402 = vunpack.c.h.b16 %v233
    %v403 = vunpack.c.l.b16 %v234
    %v404 = vunpack.c.h.b16 %v234
    %v405 = vunpack.c.l.b16 %v235
    %v406 = vunpack.c.h.b16 %v235
    %v407 = vunpack.c.l.b16 %v236
    %v408 = vunpack.c.h.b16 %v236
    %v409 = vunpack.c.l.b16 %v237
    %v410 = vunpack.c.h.b16 %v237
    %v411 = vunpack.c.l.b16 %v238
    %v412 = vunpack.c.h.b16 %v238
    %v413 = vunpack.c.l.b16 %v239
    %v414 = vunpack.c.h.b16 %v239
    %v415 = vunpack.c.l.b16 %v240
    %v416 = vunpack.c.h.b16 %v240
    %v417 = vunpack.c.l.b16 %v241
    %v418 = vunpack.c.h.b16 %v241
    %v419 = vunpack.c.l.b16 %v242
    %v420 = vunpack.c.h.b16 %v242
    %v421 = vunpack.c.l.b16 %v243
    %v422 = vunpack.c.h.b16 %v243
    %v423 = vunpack.c.l.b16 %v244
    %v424 = vunpack.c.h.b16 %v244
    %v425 = vunpack.c.l.b16 %v245
    %v426 = vunpack.c.h.b16 %v245
    %v427 = vunpack.c.l.b16 %v246
    %v428 = vunpack.c.h.b16 %v246
    %v429 = vunpack.c.l.b16 %v247
    %v430 = vunpack.c.h.b16 %v247
    %v431 = vunpack.c.l.b16 %v248
    %v432 = vunpack.c.h.b16 %v248
    %v433 = vunpack.c.l.b16 %v249
    %v434 = vunpack.c.h.b16 %v249
    %v435 = vunpack.c.l.b16 %v250
    %v436 = vunpack.c.h.b16 %v250
    %v437 = vunpack.c.l.b16 %v251
    %v438 = vunpack.c.h.b16 %v251
    %v439 = vunpack.c.l.b16 %v252
    %v440 = vunpack.c.h.b16 %v252
    %v441 = vunpack.c.l.b16 %v253
    %v442 = vunpack.c.h.b16 %v253
    %v443 = vunpack.c.l.b16 %v254
    %v444 = vunpack.c.h.b16 %v254
    %v445 = vunpack.c.l.b16 %v255
    %v446 = vunpack.c.h.b16 %v255
    %v447 = vunpack.c.l.b16 %v256
    %v448 = vunpack.c.h.b16 %v256
    %v449 = vunpack.c.l.b16 %v257
    %v450 = vunpack.c.h.b16 %v257
    %v451 = vunpack.c.l.b16 %v258
    %v452 = vunpack.c.h.b16 %v258
    %v453 = vunpack.c.l.b16 %v259
    %v454 = vunpack.c.h.b16 %v259
    %v455 = vunpack.c.l.b16 %v260
    %v456 = vunpack.c.h.b16 %v260
    %v457 = vunpack.c.l.b16 %v261
    %v458 = vunpack.c.h.b16 %v261
    %v459 = vunpack.c.l.b16 %v262
    %v460 = vunpack.c.h.b16 %v262
    %v461 = vunpack.c.l.b16 %v263
    %v462 = vunpack.c.h.b16 %v263
    %v463 = vunpack.c.l.b16 %v264
    %v464 = vunpack.c.h.b16 %v264
    %v465 = vunpack.c.l.b16 %v265
    %v466 = vunpack.c.h.b16 %v265
    %v467 = vunpack.c.l.b16 %v266
    %v468 = vunpack.c.h.b16 %v266
    %v469 = vunpack.c.l.b16 %v267
    %v470 = vunpack.c.h.b16 %v267
    %v471 = vunpack.c.l.b16 %v268
    %v472 = vunpack.c.h.b16 %v268
    %v473 = vunpack.c.l.b16 %v269
    %v474 = vunpack.c.h.b16 %v269
    %v475 = vunpack.c.l.b16 %v270
    %v476 = vunpack.c.h.b16 %v270
    %v477 = vunpack.c.l.b16 %v271
    %v478 = vunpack.c.h.b16 %v271
    %v479 = vunpack.c.l.b16 %v272
    %v480 = vunpack.c.h.b16 %v272
    %v481 = vunpack.c.l.b16 %v273
    %v482 = vunpack.c.h.b16 %v273
    %v483 = vunpack.c.l.b16 %v274
    %v484 = vunpack.c.h.b16 %v274
    %v485 = vpack.c.b16 %v365, %v357
    %v486 = vpack.c.b16 %v366, %v358
    %v487 = vpack.c.b16 %v367, %v359
    %v488 = vpack.c.b16 %v368, %v360
    %v489 = vpack.c.b16 %v369, %v361
    %v490 = vpack.c.b16 %v370, %v362
    %v491 = vpack.c.b16 %v371, %v363
    %v492 = vpack.c.b16 %v372, %v364
    %v493 = vpack.c.b16 %v381, %v373
    %v494 = vpack.c.b16 %v382, %v374
    %v495 = vpack.c.b16 %v383, %v375
    %v496 = vpack.c.b16 %v384, %v376
    %v497 = vpack.c.b16 %v385, %v377
    %v498 = vpack.c.b16 %v386, %v378
    %v499 = vpack.c.b16 %v387, %v379
    %v500 = vpack.c.b16 %v388, %v380
    %v501 = vpack.c.b16 %v397, %v389
    %v502 = vpack.c.b16 %v398, %v390
    %v503 = vpack.c.b16 %v399, %v391
    %v504 = vpack.c.b16 %v400, %v392
    %v505 = vpack.c.b16 %v401, %v393
    %v506 = vpack.c.b16 %v402, %v394
    %v507 = vpack.c.b16 %v403, %v395
    %v508 = vpack.c.b16 %v404, %v396
    %v509 = vpack.c.b16 %v413, %v405
    %v510 = vpack.c.b16 %v414, %v406
    %v511 = vpack.c.b16 %v415, %v407
    %v512 = vpack.c.b16 %v416, %v408
    %v513 = vpack.c.b16 %v417, %v409
    %v514 = vpack.c.b16 %v418, %v410
    %v515 = vpack.c.b16 %v419, %v411
    %v516 = vpack.c.b16 %v420, %v412
    %v517 = vpack.c.b16 %v429, %v421
    %v518 = vpack.c.b16 %v430, %v422
    %v519 = vpack.c.b16 %v431, %v423
    %v520 = vpack.c.b16 %v432, %v424
    %v521 = vpack.c.b16 %v433, %v425
    %v522 = vpack.c.b16 %v434, %v426
    %v523 = vpack.c.b16 %v435, %v427
    %v524 = vpack.c.b16 %v436, %v428
    %v525 = vpack.c.b16 %v445, %v437
    %v526 = vpack.c.b16 %v446, %v438
    %v527 = vpack.c.b16 %v447, %v439
    %v528 = vpack.c.b16 %v448, %v440
    %v529 = vpack.c.b16 %v449, %v441
    %v530 = vpack.c.b16 %v450, %v442
    %v531 = vpack.c.b16 %v451, %v443
    %v532 = vpack.c.b16 %v452, %v444
    %v533 = vpack.c.b16 %v461, %v453
    %v534 = vpack.c.b16 %v462, %v454
    %v535 = vpack.c.b16 %v463, %v455
    %v536 = vpack.c.b16 %v464, %v456
    %v537 = vpack.c.b16 %v465, %v457
    %v538 = vpack.c.b16 %v466, %v458
    %v539 = vpack.c.b16 %v467, %v459
    %v540 = vpack.c.b16 %v468, %v460
    %v541 = vpack.c.b16 %v477, %v469
    %v542 = vpack.c.b16 %v478, %v470
    %v543 = vpack.c.b16 %v479, %v471
    %v544 = vpack.c.b16 %v480, %v472
    %v545 = vpack.c.b16 %v481, %v473
    %v546 = vpack.c.b16 %v482, %v474
    %v547 = vpack.c.b16 %v483, %v475
    %v548 = vpack.c.b16 %v484, %v476
    %613 = vmatpush.bf16.msra.mxu0 %v541
    %614 = vmatpush.bf16.msra.mxu0 %v533
    %615 = vmatpush.bf16.msra.mxu0 %v525
    %616 = vmatpush.bf16.msra.mxu0 %v517
    %617 = vmatpush.bf16.msra.mxu0 %v509
    %618 = vmatpush.bf16.msra.mxu0 %v501
    %619 = vmatpush.bf16.msra.mxu0 %v493
    %620 = vmatpush.bf16.msra.mxu0 %v485
    %621 = vmatmul.bf16.gmra.mxu0 %v210
    %v622 = vpop.f32.mrf.mxu0
    %v623 = vadd.f32 %v277, %v622
    %v624 = vpop.f32.mrf.mxu0
    %v625 = vadd.f32 %v277, %v624
    %626 = vdwg.mxu0
    %627 = vmatpush.bf16.msra.mxu0 %v542
    %628 = vmatpush.bf16.msra.mxu0 %v534
    %629 = vmatpush.bf16.msra.mxu0 %v526
    %630 = vmatpush.bf16.msra.mxu0 %v518
    %631 = vmatpush.bf16.msra.mxu0 %v510
    %632 = vmatpush.bf16.msra.mxu0 %v502
    %633 = vmatpush.bf16.msra.mxu0 %v494
    %634 = vmatpush.bf16.msra.mxu0 %v486
    %635 = vmatmul.bf16.gmra.mxu0 %v210
    %v636 = vpop.f32.mrf.mxu0
    %v637 = vadd.f32 %v278, %v636
    %v638 = vpop.f32.mrf.mxu0
    %v639 = vadd.f32 %v278, %v638
    %640 = vdwg.mxu0
    %641 = vmatpush.bf16.msra.mxu0 %v543
    %642 = vmatpush.bf16.msra.mxu0 %v535
    %643 = vmatpush.bf16.msra.mxu0 %v527
    %644 = vmatpush.bf16.msra.mxu0 %v519
    %645 = vmatpush.bf16.msra.mxu0 %v511
    %646 = vmatpush.bf16.msra.mxu0 %v503
    %647 = vmatpush.bf16.msra.mxu0 %v495
    %648 = vmatpush.bf16.msra.mxu0 %v487
    %649 = vmatmul.bf16.gmra.mxu0 %v210
    %v650 = vpop.f32.mrf.mxu0
    %v651 = vadd.f32 %v279, %v650
    %v652 = vpop.f32.mrf.mxu0
    %v653 = vadd.f32 %v279, %v652
    %654 = vdwg.mxu0
    %655 = vmatpush.bf16.msra.mxu0 %v544
    %656 = vmatpush.bf16.msra.mxu0 %v536
    %657 = vmatpush.bf16.msra.mxu0 %v528
    %658 = vmatpush.bf16.msra.mxu0 %v520
    %659 = vmatpush.bf16.msra.mxu0 %v512
    %660 = vmatpush.bf16.msra.mxu0 %v504
    %661 = vmatpush.bf16.msra.mxu0 %v496
    %662 = vmatpush.bf16.msra.mxu0 %v488
    %663 = vmatmul.bf16.gmra.mxu0 %v210
    %v664 = vpop.f32.mrf.mxu0
    %v665 = vadd.f32 %v280, %v664
    %v666 = vpop.f32.mrf.mxu0
    %v667 = vadd.f32 %v280, %v666
    %668 = vdwg.mxu0
    %669 = vmatpush.bf16.msra.mxu0 %v545
    %670 = vmatpush.bf16.msra.mxu0 %v537
    %671 = vmatpush.bf16.msra.mxu0 %v529
    %672 = vmatpush.bf16.msra.mxu0 %v521
    %673 = vmatpush.bf16.msra.mxu0 %v513
    %674 = vmatpush.bf16.msra.mxu0 %v505
    %675 = vmatpush.bf16.msra.mxu0 %v497
    %676 = vmatpush.bf16.msra.mxu0 %v489
    %677 = vmatmul.bf16.gmra.mxu0 %v210
    %v678 = vpop.f32.mrf.mxu0
    %v679 = vadd.f32 %v281, %v678
    %v680 = vpop.f32.mrf.mxu0
    %v681 = vadd.f32 %v281, %v680
    %682 = vdwg.mxu0
    %683 = vmatpush.bf16.msra.mxu0 %v546
    %684 = vmatpush.bf16.msra.mxu0 %v538
    %685 = vmatpush.bf16.msra.mxu0 %v530
    %686 = vmatpush.bf16.msra.mxu0 %v522
    %687 = vmatpush.bf16.msra.mxu0 %v514
    %688 = vmatpush.bf16.msra.mxu0 %v506
    %689 = vmatpush.bf16.msra.mxu0 %v498
    %690 = vmatpush.bf16.msra.mxu0 %v490
    %691 = vmatmul.bf16.gmra.mxu0 %v210
    %v692 = vpop.f32.mrf.mxu0
    %v693 = vadd.f32 %v282, %v692
    %v694 = vpop.f32.mrf.mxu0
    %v695 = vadd.f32 %v282, %v694
    %696 = vdwg.mxu0
    %697 = vmatpush.bf16.msra.mxu0 %v547
    %698 = vmatpush.bf16.msra.mxu0 %v539
    %699 = vmatpush.bf16.msra.mxu0 %v531
    %700 = vmatpush.bf16.msra.mxu0 %v523
    %701 = vmatpush.bf16.msra.mxu0 %v515
    %702 = vmatpush.bf16.msra.mxu0 %v507
    %703 = vmatpush.bf16.msra.mxu0 %v499
    %704 = vmatpush.bf16.msra.mxu0 %v491
    %705 = vmatmul.bf16.gmra.mxu0 %v210
    %v706 = vpop.f32.mrf.mxu0
    %v707 = vadd.f32 %v283, %v706
    %v708 = vpop.f32.mrf.mxu0
    %v709 = vadd.f32 %v283, %v708
    %710 = vdwg.mxu0
    %711 = vmatpush.bf16.msra.mxu0 %v548
    %712 = vmatpush.bf16.msra.mxu0 %v540
    %713 = vmatpush.bf16.msra.mxu0 %v532
    %714 = vmatpush.bf16.msra.mxu0 %v524
    %715 = vmatpush.bf16.msra.mxu0 %v516
    %716 = vmatpush.bf16.msra.mxu0 %v508
    %717 = vmatpush.bf16.msra.mxu0 %v500
    %718 = vmatpush.bf16.msra.mxu0 %v492
    %719 = vmatmul.bf16.gmra.mxu0 %v210
    %v720 = vpop.f32.mrf.mxu0
    %v721 = vadd.f32 %v284, %v720
    %v722 = vpop.f32.mrf.mxu0
    %v723 = vadd.f32 %v284, %v722
    %724 = vdwg.mxu0
    %v725 = vmax.f32 %v623, 0.0
    %v726 = vmax.f32 %v637, 0.0
    %v727 = vmax.f32 %v651, 0.0
    %v728 = vmax.f32 %v665, 0.0
    %v729 = vmax.f32 %v679, 0.0
    %v730 = vmax.f32 %v693, 0.0
    %v731 = vmax.f32 %v707, 0.0
    %v732 = vmax.f32 %v721, 0.0
    %v733 = vmax.f32 %v625, 0.0
    %v734 = vmax.f32 %v639, 0.0
    %v735 = vmax.f32 %v653, 0.0
    %v736 = vmax.f32 %v667, 0.0
    %v737 = vmax.f32 %v681, 0.0
    %v738 = vmax.f32 %v695, 0.0
    %v739 = vmax.f32 %v709, 0.0
    %v740 = vmax.f32 %v723, 0.0
    %v741 = vpack.c.bf16 %v733, %v725
    %v742 = vpack.c.bf16 %v734, %v726
    %v743 = vpack.c.bf16 %v735, %v727
    %v744 = vpack.c.bf16 %v736, %v728
    %v745 = vpack.c.bf16 %v737, %v729
    %v746 = vpack.c.bf16 %v738, %v730
    %v747 = vpack.c.bf16 %v739, %v731
    %v748 = vpack.c.bf16 %v740, %v732
    %v749 = vld [vmem:[#allocation7] sm:$0xff]
    %v750 = vld [vmem:[#allocation7 + $0x8] sm:$0xff]
    %v751 = vld [vmem:[#allocation7 + $0x10] sm:$0xff]
    %v752 = vld [vmem:[#allocation7 + $0x18] sm:$0xff]
    %v753 = vld [vmem:[#allocation7 + $0x20] sm:$0xff]
    %v754 = vld [vmem:[#allocation7 + $0x28] sm:$0xff]
    %v755 = vld [vmem:[#allocation7 + $0x30] sm:$0xff]
    %v756 = vld [vmem:[#allocation7 + $0x38] sm:$0xff]
    %v757 = vld [vmem:[#allocation7 + $0x40] sm:$0xff]
    %v758 = vld [vmem:[#allocation7 + $0x48] sm:$0xff]
    %v759 = vld [vmem:[#allocation7 + $0x50] sm:$0xff]
    %v760 = vld [vmem:[#allocation7 + $0x58] sm:$0xff]
    %v761 = vld [vmem:[#allocation7 + $0x60] sm:$0xff]
    %v762 = vld [vmem:[#allocation7 + $0x68] sm:$0xff]
    %v763 = vld [vmem:[#allocation7 + $0x70] sm:$0xff]
    %v764 = vld [vmem:[#allocation7 + $0x78] sm:$0xff]
    %v765 = vld [vmem:[#allocation7 + $0x80] sm:$0xff]
    %v766 = vld [vmem:[#allocation7 + $0x88] sm:$0xff]
    %v767 = vld [vmem:[#allocation7 + $0x90] sm:$0xff]
    %v768 = vld [vmem:[#allocation7 + $0x98] sm:$0xff]
    %v769 = vld [vmem:[#allocation7 + $0xa0] sm:$0xff]
    %v770 = vld [vmem:[#allocation7 + $0xa8] sm:$0xff]
    %v771 = vld [vmem:[#allocation7 + $0xb0] sm:$0xff]
    %v772 = vld [vmem:[#allocation7 + $0xb8] sm:$0xff]
    %v773 = vld [vmem:[#allocation7 + $0xc0] sm:$0xff]
    %v774 = vld [vmem:[#allocation7 + $0xc8] sm:$0xff]
    %v775 = vld [vmem:[#allocation7 + $0xd0] sm:$0xff]
    %v776 = vld [vmem:[#allocation7 + $0xd8] sm:$0xff]
    %v777 = vld [vmem:[#allocation7 + $0xe0] sm:$0xff]
    %v778 = vld [vmem:[#allocation7 + $0xe8] sm:$0xff]
    %v779 = vld [vmem:[#allocation7 + $0xf0] sm:$0xff]
    %v780 = vld [vmem:[#allocation7 + $0xf8] sm:$0xff]
    %v781 = vld [vmem:[#allocation7 + $0x100] sm:$0xff]
    %v782 = vld [vmem:[#allocation7 + $0x108] sm:$0xff]
    %v783 = vld [vmem:[#allocation7 + $0x110] sm:$0xff]
    %v784 = vld [vmem:[#allocation7 + $0x118] sm:$0xff]
    %v785 = vld [vmem:[#allocation7 + $0x120] sm:$0xff]
    %v786 = vld [vmem:[#allocation7 + $0x128] sm:$0xff]
    %v787 = vld [vmem:[#allocation7 + $0x130] sm:$0xff]
    %v788 = vld [vmem:[#allocation7 + $0x138] sm:$0xff]
    %v789 = vld [vmem:[#allocation7 + $0x140] sm:$0xff]
    %v790 = vld [vmem:[#allocation7 + $0x148] sm:$0xff]
    %v791 = vld [vmem:[#allocation7 + $0x150] sm:$0xff]
    %v792 = vld [vmem:[#allocation7 + $0x158] sm:$0xff]
    %v793 = vld [vmem:[#allocation7 + $0x160] sm:$0xff]
    %v794 = vld [vmem:[#allocation7 + $0x168] sm:$0xff]
    %v795 = vld [vmem:[#allocation7 + $0x170] sm:$0xff]
    %v796 = vld [vmem:[#allocation7 + $0x178] sm:$0xff]
    %v797 = vld [vmem:[#allocation7 + $0x180] sm:$0xff]
    %v798 = vld [vmem:[#allocation7 + $0x188] sm:$0xff]
    %v799 = vld [vmem:[#allocation7 + $0x190] sm:$0xff]
    %v800 = vld [vmem:[#allocation7 + $0x198] sm:$0xff]
    %v801 = vld [vmem:[#allocation7 + $0x1a0] sm:$0xff]
    %v802 = vld [vmem:[#allocation7 + $0x1a8] sm:$0xff]
    %v803 = vld [vmem:[#allocation7 + $0x1b0] sm:$0xff]
    %v804 = vld [vmem:[#allocation7 + $0x1b8] sm:$0xff]
    %v805 = vld [vmem:[#allocation7 + $0x1c0] sm:$0xff]
    %v806 = vld [vmem:[#allocation7 + $0x1c8] sm:$0xff]
    %v807 = vld [vmem:[#allocation7 + $0x1d0] sm:$0xff]
    %v808 = vld [vmem:[#allocation7 + $0x1d8] sm:$0xff]
    %v809 = vld [vmem:[#allocation7 + $0x1e0] sm:$0xff]
    %v810 = vld [vmem:[#allocation7 + $0x1e8] sm:$0xff]
    %v811 = vld [vmem:[#allocation7 + $0x1f0] sm:$0xff]
    %v812 = vld [vmem:[#allocation7 + $0x1f8] sm:$0xff]
    %v813 = vld [vmem:[#allocation7 + $0x200] sm:$0xff]
    %v814 = vld [vmem:[#allocation7 + $0x208] sm:$0xff]
    %v815 = vld [vmem:[#allocation7 + $0x210] sm:$0xff]
    %v816 = vld [vmem:[#allocation7 + $0x218] sm:$0xff]
    %v817 = vld [vmem:[#allocation7 + $0x220] sm:$0xff]
    %v818 = vld [vmem:[#allocation7 + $0x228] sm:$0xff]
    %v819 = vld [vmem:[#allocation7 + $0x230] sm:$0xff]
    %v820 = vld [vmem:[#allocation7 + $0x238] sm:$0xff]
    %v821 = vld [vmem:[#allocation7 + $0x240] sm:$0xff]
    %v822 = vld [vmem:[#allocation7 + $0x248] sm:$0xff]
    %v823 = vld [vmem:[#allocation7 + $0x250] sm:$0xff]
    %v824 = vld [vmem:[#allocation7 + $0x258] sm:$0xff]
    %v825 = vld [vmem:[#allocation7 + $0x260] sm:$0xff]
    %v826 = vld [vmem:[#allocation7 + $0x268] sm:$0xff]
    %v827 = vld [vmem:[#allocation7 + $0x270] sm:$0xff]
    %v828 = vld [vmem:[#allocation7 + $0x278] sm:$0xff]
    %v829 = vld [vmem:[#allocation7 + $0x280] sm:$0xff]
    %v830 = vld [vmem:[#allocation7 + $0x288] sm:$0xff]
    %v831 = vld [vmem:[#allocation7 + $0x290] sm:$0xff]
    %v832 = vld [vmem:[#allocation7 + $0x298] sm:$0xff]
    %v833 = vld [vmem:[#allocation7 + $0x2a0] sm:$0xff]
    %v834 = vld [vmem:[#allocation7 + $0x2a8] sm:$0xff]
    %v835 = vld [vmem:[#allocation7 + $0x2b0] sm:$0xff]
    %v836 = vld [vmem:[#allocation7 + $0x2b8] sm:$0xff]
    %v837 = vld [vmem:[#allocation7 + $0x2c0] sm:$0xff]
    %v838 = vld [vmem:[#allocation7 + $0x2c8] sm:$0xff]
    %v839 = vld [vmem:[#allocation7 + $0x2d0] sm:$0xff]
    %v840 = vld [vmem:[#allocation7 + $0x2d8] sm:$0xff]
    %v841 = vld [vmem:[#allocation7 + $0x2e0] sm:$0xff]
    %v842 = vld [vmem:[#allocation7 + $0x2e8] sm:$0xff]
    %v843 = vld [vmem:[#allocation7 + $0x2f0] sm:$0xff]
    %v844 = vld [vmem:[#allocation7 + $0x2f8] sm:$0xff]
    %v845 = vld [vmem:[#allocation7 + $0x300] sm:$0xff]
    %v846 = vld [vmem:[#allocation7 + $0x308] sm:$0xff]
    %v847 = vld [vmem:[#allocation7 + $0x310] sm:$0xff]
    %v848 = vld [vmem:[#allocation7 + $0x318] sm:$0xff]
    %v849 = vld [vmem:[#allocation7 + $0x320] sm:$0xff]
    %v850 = vld [vmem:[#allocation7 + $0x328] sm:$0xff]
    %v851 = vld [vmem:[#allocation7 + $0x330] sm:$0xff]
    %v852 = vld [vmem:[#allocation7 + $0x338] sm:$0xff]
    %v853 = vld [vmem:[#allocation7 + $0x340] sm:$0xff]
    %v854 = vld [vmem:[#allocation7 + $0x348] sm:$0xff]
    %v855 = vld [vmem:[#allocation7 + $0x350] sm:$0xff]
    %v856 = vld [vmem:[#allocation7 + $0x358] sm:$0xff]
    %v857 = vld [vmem:[#allocation7 + $0x360] sm:$0xff]
    %v858 = vld [vmem:[#allocation7 + $0x368] sm:$0xff]
    %v859 = vld [vmem:[#allocation7 + $0x370] sm:$0xff]
    %v860 = vld [vmem:[#allocation7 + $0x378] sm:$0xff]
    %v861 = vld [vmem:[#allocation7 + $0x380] sm:$0xff]
    %v862 = vld [vmem:[#allocation7 + $0x388] sm:$0xff]
    %v863 = vld [vmem:[#allocation7 + $0x390] sm:$0xff]
    %v864 = vld [vmem:[#allocation7 + $0x398] sm:$0xff]
    %v865 = vld [vmem:[#allocation7 + $0x3a0] sm:$0xff]
    %v866 = vld [vmem:[#allocation7 + $0x3a8] sm:$0xff]
    %v867 = vld [vmem:[#allocation7 + $0x3b0] sm:$0xff]
    %v868 = vld [vmem:[#allocation7 + $0x3b8] sm:$0xff]
    %v869 = vld [vmem:[#allocation7 + $0x3c0] sm:$0xff]
    %v870 = vld [vmem:[#allocation7 + $0x3c8] sm:$0xff]
    %v871 = vld [vmem:[#allocation7 + $0x3d0] sm:$0xff]
    %v872 = vld [vmem:[#allocation7 + $0x3d8] sm:$0xff]
    %v873 = vld [vmem:[#allocation7 + $0x3e0] sm:$0xff]
    %v874 = vld [vmem:[#allocation7 + $0x3e8] sm:$0xff]
    %v875 = vld [vmem:[#allocation7 + $0x3f0] sm:$0xff]
    %v876 = vld [vmem:[#allocation7 + $0x3f8] sm:$0xff]
    %v877 = vld [vmem:[#allocation7 + $0x400] sm:$0xff]
    %v878 = vld [vmem:[#allocation7 + $0x408] sm:$0xff]
    %v879 = vld [vmem:[#allocation7 + $0x410] sm:$0xff]
    %v880 = vld [vmem:[#allocation7 + $0x418] sm:$0xff]
    %v881 = vld [vmem:[#allocation7 + $0x420] sm:$0xff]
    %v882 = vld [vmem:[#allocation7 + $0x428] sm:$0xff]
    %v883 = vld [vmem:[#allocation7 + $0x430] sm:$0xff]
    %v884 = vld [vmem:[#allocation7 + $0x438] sm:$0xff]
    %v885 = vld [vmem:[#allocation7 + $0x440] sm:$0xff]
    %v886 = vld [vmem:[#allocation7 + $0x448] sm:$0xff]
    %v887 = vld [vmem:[#allocation7 + $0x450] sm:$0xff]
    %v888 = vld [vmem:[#allocation7 + $0x458] sm:$0xff]
    %v889 = vld [vmem:[#allocation7 + $0x460] sm:$0xff]
    %v890 = vld [vmem:[#allocation7 + $0x468] sm:$0xff]
    %v891 = vld [vmem:[#allocation7 + $0x470] sm:$0xff]
    %v892 = vld [vmem:[#allocation7 + $0x478] sm:$0xff]
    %v893 = vld [vmem:[#allocation7 + $0x480] sm:$0xff]
    %v894 = vld [vmem:[#allocation7 + $0x488] sm:$0xff]
    %v895 = vld [vmem:[#allocation7 + $0x490] sm:$0xff]
    %v896 = vld [vmem:[#allocation7 + $0x498] sm:$0xff]
    %v897 = vld [vmem:[#allocation7 + $0x4a0] sm:$0xff]
    %v898 = vld [vmem:[#allocation7 + $0x4a8] sm:$0xff]
    %v899 = vld [vmem:[#allocation7 + $0x4b0] sm:$0xff]
    %v900 = vld [vmem:[#allocation7 + $0x4b8] sm:$0xff]
    %v901 = vld [vmem:[#allocation7 + $0x4c0] sm:$0xff]
    %v902 = vld [vmem:[#allocation7 + $0x4c8] sm:$0xff]
    %v903 = vld [vmem:[#allocation7 + $0x4d0] sm:$0xff]
    %v904 = vld [vmem:[#allocation7 + $0x4d8] sm:$0xff]
    %v905 = vld [vmem:[#allocation7 + $0x4e0] sm:$0xff]
    %v906 = vld [vmem:[#allocation7 + $0x4e8] sm:$0xff]
    %v907 = vld [vmem:[#allocation7 + $0x4f0] sm:$0xff]
    %v908 = vld [vmem:[#allocation7 + $0x4f8] sm:$0xff]
    %v909 = vld [vmem:[#allocation7 + $0x500] sm:$0xff]
    %v910 = vld [vmem:[#allocation7 + $0x508] sm:$0xff]
    %v911 = vld [vmem:[#allocation7 + $0x510] sm:$0xff]
    %v912 = vld [vmem:[#allocation7 + $0x518] sm:$0xff]
    %v913 = vld [vmem:[#allocation7 + $0x520] sm:$0xff]
    %v914 = vld [vmem:[#allocation7 + $0x528] sm:$0xff]
    %v915 = vld [vmem:[#allocation7 + $0x530] sm:$0xff]
    %v916 = vld [vmem:[#allocation7 + $0x538] sm:$0xff]
    %v917 = vld [vmem:[#allocation7 + $0x540] sm:$0xff]
    %v918 = vld [vmem:[#allocation7 + $0x548] sm:$0xff]
    %v919 = vld [vmem:[#allocation7 + $0x550] sm:$0xff]
    %v920 = vld [vmem:[#allocation7 + $0x558] sm:$0xff]
    %v921 = vld [vmem:[#allocation7 + $0x560] sm:$0xff]
    %v922 = vld [vmem:[#allocation7 + $0x568] sm:$0xff]
    %v923 = vld [vmem:[#allocation7 + $0x570] sm:$0xff]
    %v924 = vld [vmem:[#allocation7 + $0x578] sm:$0xff]
    %v925 = vld [vmem:[#allocation7 + $0x580] sm:$0xff]
    %v926 = vld [vmem:[#allocation7 + $0x588] sm:$0xff]
    %v927 = vld [vmem:[#allocation7 + $0x590] sm:$0xff]
    %v928 = vld [vmem:[#allocation7 + $0x598] sm:$0xff]
    %v929 = vld [vmem:[#allocation7 + $0x5a0] sm:$0xff]
    %v930 = vld [vmem:[#allocation7 + $0x5a8] sm:$0xff]
    %v931 = vld [vmem:[#allocation7 + $0x5b0] sm:$0xff]
    %v932 = vld [vmem:[#allocation7 + $0x5b8] sm:$0xff]
    %v933 = vld [vmem:[#allocation7 + $0x5c0] sm:$0xff]
    %v934 = vld [vmem:[#allocation7 + $0x5c8] sm:$0xff]
    %v935 = vld [vmem:[#allocation7 + $0x5d0] sm:$0xff]
    %v936 = vld [vmem:[#allocation7 + $0x5d8] sm:$0xff]
    %v937 = vld [vmem:[#allocation7 + $0x5e0] sm:$0xff]
    %v938 = vld [vmem:[#allocation7 + $0x5e8] sm:$0xff]
    %v939 = vld [vmem:[#allocation7 + $0x5f0] sm:$0xff]
    %v940 = vld [vmem:[#allocation7 + $0x5f8] sm:$0xff]
    %v941 = vld [vmem:[#allocation7 + $0x600] sm:$0xff]
    %v942 = vld [vmem:[#allocation7 + $0x608] sm:$0xff]
    %v943 = vld [vmem:[#allocation7 + $0x610] sm:$0xff]
    %v944 = vld [vmem:[#allocation7 + $0x618] sm:$0xff]
    %v945 = vld [vmem:[#allocation7 + $0x620] sm:$0xff]
    %v946 = vld [vmem:[#allocation7 + $0x628] sm:$0xff]
    %v947 = vld [vmem:[#allocation7 + $0x630] sm:$0xff]
    %v948 = vld [vmem:[#allocation7 + $0x638] sm:$0xff]
    %v949 = vld [vmem:[#allocation7 + $0x640] sm:$0xff]
    %v950 = vld [vmem:[#allocation7 + $0x648] sm:$0xff]
    %v951 = vld [vmem:[#allocation7 + $0x650] sm:$0xff]
    %v952 = vld [vmem:[#allocation7 + $0x658] sm:$0xff]
    %v953 = vld [vmem:[#allocation7 + $0x660] sm:$0xff]
    %v954 = vld [vmem:[#allocation7 + $0x668] sm:$0xff]
    %v955 = vld [vmem:[#allocation7 + $0x670] sm:$0xff]
    %v956 = vld [vmem:[#allocation7 + $0x678] sm:$0xff]
    %v957 = vld [vmem:[#allocation7 + $0x680] sm:$0xff]
    %v958 = vld [vmem:[#allocation7 + $0x688] sm:$0xff]
    %v959 = vld [vmem:[#allocation7 + $0x690] sm:$0xff]
    %v960 = vld [vmem:[#allocation7 + $0x698] sm:$0xff]
    %v961 = vld [vmem:[#allocation7 + $0x6a0] sm:$0xff]
    %v962 = vld [vmem:[#allocation7 + $0x6a8] sm:$0xff]
    %v963 = vld [vmem:[#allocation7 + $0x6b0] sm:$0xff]
    %v964 = vld [vmem:[#allocation7 + $0x6b8] sm:$0xff]
    %v965 = vld [vmem:[#allocation7 + $0x6c0] sm:$0xff]
    %v966 = vld [vmem:[#allocation7 + $0x6c8] sm:$0xff]
    %v967 = vld [vmem:[#allocation7 + $0x6d0] sm:$0xff]
    %v968 = vld [vmem:[#allocation7 + $0x6d8] sm:$0xff]
    %v969 = vld [vmem:[#allocation7 + $0x6e0] sm:$0xff]
    %v970 = vld [vmem:[#allocation7 + $0x6e8] sm:$0xff]
    %v971 = vld [vmem:[#allocation7 + $0x6f0] sm:$0xff]
    %v972 = vld [vmem:[#allocation7 + $0x6f8] sm:$0xff]
    %v973 = vld [vmem:[#allocation7 + $0x700] sm:$0xff]
    %v974 = vld [vmem:[#allocation7 + $0x708] sm:$0xff]
    %v975 = vld [vmem:[#allocation7 + $0x710] sm:$0xff]
    %v976 = vld [vmem:[#allocation7 + $0x718] sm:$0xff]
    %v977 = vld [vmem:[#allocation7 + $0x720] sm:$0xff]
    %v978 = vld [vmem:[#allocation7 + $0x728] sm:$0xff]
    %v979 = vld [vmem:[#allocation7 + $0x730] sm:$0xff]
    %v980 = vld [vmem:[#allocation7 + $0x738] sm:$0xff]
    %v981 = vld [vmem:[#allocation7 + $0x740] sm:$0xff]
    %v982 = vld [vmem:[#allocation7 + $0x748] sm:$0xff]
    %v983 = vld [vmem:[#allocation7 + $0x750] sm:$0xff]
    %v984 = vld [vmem:[#allocation7 + $0x758] sm:$0xff]
    %v985 = vld [vmem:[#allocation7 + $0x760] sm:$0xff]
    %v986 = vld [vmem:[#allocation7 + $0x768] sm:$0xff]
    %v987 = vld [vmem:[#allocation7 + $0x770] sm:$0xff]
    %v988 = vld [vmem:[#allocation7 + $0x778] sm:$0xff]
    %v989 = vld [vmem:[#allocation7 + $0x780] sm:$0xff]
    %v990 = vld [vmem:[#allocation7 + $0x788] sm:$0xff]
    %v991 = vld [vmem:[#allocation7 + $0x790] sm:$0xff]
    %v992 = vld [vmem:[#allocation7 + $0x798] sm:$0xff]
    %v993 = vld [vmem:[#allocation7 + $0x7a0] sm:$0xff]
    %v994 = vld [vmem:[#allocation7 + $0x7a8] sm:$0xff]
    %v995 = vld [vmem:[#allocation7 + $0x7b0] sm:$0xff]
    %v996 = vld [vmem:[#allocation7 + $0x7b8] sm:$0xff]
    %v997 = vld [vmem:[#allocation7 + $0x7c0] sm:$0xff]
    %v998 = vld [vmem:[#allocation7 + $0x7c8] sm:$0xff]
    %v999 = vld [vmem:[#allocation7 + $0x7d0] sm:$0xff]
    %v1000 = vld [vmem:[#allocation7 + $0x7d8] sm:$0xff]
    %v1001 = vld [vmem:[#allocation7 + $0x7e0] sm:$0xff]
    %v1002 = vld [vmem:[#allocation7 + $0x7e8] sm:$0xff]
    %v1003 = vld [vmem:[#allocation7 + $0x7f0] sm:$0xff]
    %v1004 = vld [vmem:[#allocation7 + $0x7f8] sm:$0xff]
    %v1005 = vld [vmem:[%s8] sm:$0xf]
    %v1007 = vperm.slane %v1005, 0
    %v1008 = vperm.slane %v1005, 1
    %v1009 = vperm.slane %v1005, 2
    %v1010 = vperm.slane %v1005, 3
    %v1271 = vunpack.c.l.b16 %v749
    %v1272 = vunpack.c.h.b16 %v749
    %v1273 = vunpack.c.l.b16 %v750
    %v1274 = vunpack.c.h.b16 %v750
    %v1275 = vunpack.c.l.b16 %v751
    %v1276 = vunpack.c.h.b16 %v751
    %v1277 = vunpack.c.l.b16 %v752
    %v1278 = vunpack.c.h.b16 %v752
    %v1279 = vunpack.c.l.b16 %v753
    %v1280 = vunpack.c.h.b16 %v753
    %v1281 = vunpack.c.l.b16 %v754
    %v1282 = vunpack.c.h.b16 %v754
    %v1283 = vunpack.c.l.b16 %v755
    %v1284 = vunpack.c.h.b16 %v755
    %v1285 = vunpack.c.l.b16 %v756
    %v1286 = vunpack.c.h.b16 %v756
    %v1287 = vunpack.c.l.b16 %v757
    %v1288 = vunpack.c.h.b16 %v757
    %v1289 = vunpack.c.l.b16 %v758
    %v1290 = vunpack.c.h.b16 %v758
    %v1291 = vunpack.c.l.b16 %v759
    %v1292 = vunpack.c.h.b16 %v759
    %v1293 = vunpack.c.l.b16 %v760
    %v1294 = vunpack.c.h.b16 %v760
    %v1295 = vunpack.c.l.b16 %v761
    %v1296 = vunpack.c.h.b16 %v761
    %v1297 = vunpack.c.l.b16 %v762
    %v1298 = vunpack.c.h.b16 %v762
    %v1299 = vunpack.c.l.b16 %v763
    %v1300 = vunpack.c.h.b16 %v763
    %v1301 = vunpack.c.l.b16 %v764
    %v1302 = vunpack.c.h.b16 %v764
    %v1303 = vunpack.c.l.b16 %v765
    %v1304 = vunpack.c.h.b16 %v765
    %v1305 = vunpack.c.l.b16 %v766
    %v1306 = vunpack.c.h.b16 %v766
    %v1307 = vunpack.c.l.b16 %v767
    %v1308 = vunpack.c.h.b16 %v767
    %v1309 = vunpack.c.l.b16 %v768
    %v1310 = vunpack.c.h.b16 %v768
    %v1311 = vunpack.c.l.b16 %v769
    %v1312 = vunpack.c.h.b16 %v769
    %v1313 = vunpack.c.l.b16 %v770
    %v1314 = vunpack.c.h.b16 %v770
    %v1315 = vunpack.c.l.b16 %v771
    %v1316 = vunpack.c.h.b16 %v771
    %v1317 = vunpack.c.l.b16 %v772
    %v1318 = vunpack.c.h.b16 %v772
    %v1319 = vunpack.c.l.b16 %v773
    %v1320 = vunpack.c.h.b16 %v773
    %v1321 = vunpack.c.l.b16 %v774
    %v1322 = vunpack.c.h.b16 %v774
    %v1323 = vunpack.c.l.b16 %v775
    %v1324 = vunpack.c.h.b16 %v775
    %v1325 = vunpack.c.l.b16 %v776
    %v1326 = vunpack.c.h.b16 %v776
    %v1327 = vunpack.c.l.b16 %v777
    %v1328 = vunpack.c.h.b16 %v777
    %v1329 = vunpack.c.l.b16 %v778
    %v1330 = vunpack.c.h.b16 %v778
    %v1331 = vunpack.c.l.b16 %v779
    %v1332 = vunpack.c.h.b16 %v779
    %v1333 = vunpack.c.l.b16 %v780
    %v1334 = vunpack.c.h.b16 %v780
    %v1335 = vunpack.c.l.b16 %v781
    %v1336 = vunpack.c.h.b16 %v781
    %v1337 = vunpack.c.l.b16 %v782
    %v1338 = vunpack.c.h.b16 %v782
    %v1339 = vunpack.c.l.b16 %v783
    %v1340 = vunpack.c.h.b16 %v783
    %v1341 = vunpack.c.l.b16 %v784
    %v1342 = vunpack.c.h.b16 %v784
    %v1343 = vunpack.c.l.b16 %v785
    %v1344 = vunpack.c.h.b16 %v785
    %v1345 = vunpack.c.l.b16 %v786
    %v1346 = vunpack.c.h.b16 %v786
    %v1347 = vunpack.c.l.b16 %v787
    %v1348 = vunpack.c.h.b16 %v787
    %v1349 = vunpack.c.l.b16 %v788
    %v1350 = vunpack.c.h.b16 %v788
    %v1351 = vunpack.c.l.b16 %v789
    %v1352 = vunpack.c.h.b16 %v789
    %v1353 = vunpack.c.l.b16 %v790
    %v1354 = vunpack.c.h.b16 %v790
    %v1355 = vunpack.c.l.b16 %v791
    %v1356 = vunpack.c.h.b16 %v791
    %v1357 = vunpack.c.l.b16 %v792
    %v1358 = vunpack.c.h.b16 %v792
    %v1359 = vunpack.c.l.b16 %v793
    %v1360 = vunpack.c.h.b16 %v793
    %v1361 = vunpack.c.l.b16 %v794
    %v1362 = vunpack.c.h.b16 %v794
    %v1363 = vunpack.c.l.b16 %v795
    %v1364 = vunpack.c.h.b16 %v795
    %v1365 = vunpack.c.l.b16 %v796
    %v1366 = vunpack.c.h.b16 %v796
    %v1367 = vunpack.c.l.b16 %v797
    %v1368 = vunpack.c.h.b16 %v797
    %v1369 = vunpack.c.l.b16 %v798
    %v1370 = vunpack.c.h.b16 %v798
    %v1371 = vunpack.c.l.b16 %v799
    %v1372 = vunpack.c.h.b16 %v799
    %v1373 = vunpack.c.l.b16 %v800
    %v1374 = vunpack.c.h.b16 %v800
    %v1375 = vunpack.c.l.b16 %v801
    %v1376 = vunpack.c.h.b16 %v801
    %v1377 = vunpack.c.l.b16 %v802
    %v1378 = vunpack.c.h.b16 %v802
    %v1379 = vunpack.c.l.b16 %v803
    %v1380 = vunpack.c.h.b16 %v803
    %v1381 = vunpack.c.l.b16 %v804
    %v1382 = vunpack.c.h.b16 %v804
    %v1383 = vunpack.c.l.b16 %v805
    %v1384 = vunpack.c.h.b16 %v805
    %v1385 = vunpack.c.l.b16 %v806
    %v1386 = vunpack.c.h.b16 %v806
    %v1387 = vunpack.c.l.b16 %v807
    %v1388 = vunpack.c.h.b16 %v807
    %v1389 = vunpack.c.l.b16 %v808
    %v1390 = vunpack.c.h.b16 %v808
    %v1391 = vunpack.c.l.b16 %v809
    %v1392 = vunpack.c.h.b16 %v809
    %v1393 = vunpack.c.l.b16 %v810
    %v1394 = vunpack.c.h.b16 %v810
    %v1395 = vunpack.c.l.b16 %v811
    %v1396 = vunpack.c.h.b16 %v811
    %v1397 = vunpack.c.l.b16 %v812
    %v1398 = vunpack.c.h.b16 %v812
    %v1399 = vunpack.c.l.b16 %v813
    %v1400 = vunpack.c.h.b16 %v813
    %v1401 = vunpack.c.l.b16 %v814
    %v1402 = vunpack.c.h.b16 %v814
    %v1403 = vunpack.c.l.b16 %v815
    %v1404 = vunpack.c.h.b16 %v815
    %v1405 = vunpack.c.l.b16 %v816
    %v1406 = vunpack.c.h.b16 %v816
    %v1407 = vunpack.c.l.b16 %v817
    %v1408 = vunpack.c.h.b16 %v817
    %v1409 = vunpack.c.l.b16 %v818
    %v1410 = vunpack.c.h.b16 %v818
    %v1411 = vunpack.c.l.b16 %v819
    %v1412 = vunpack.c.h.b16 %v819
    %v1413 = vunpack.c.l.b16 %v820
    %v1414 = vunpack.c.h.b16 %v820
    %v1415 = vunpack.c.l.b16 %v821
    %v1416 = vunpack.c.h.b16 %v821
    %v1417 = vunpack.c.l.b16 %v822
    %v1418 = vunpack.c.h.b16 %v822
    %v1419 = vunpack.c.l.b16 %v823
    %v1420 = vunpack.c.h.b16 %v823
    %v1421 = vunpack.c.l.b16 %v824
    %v1422 = vunpack.c.h.b16 %v824
    %v1423 = vunpack.c.l.b16 %v825
    %v1424 = vunpack.c.h.b16 %v825
    %v1425 = vunpack.c.l.b16 %v826
    %v1426 = vunpack.c.h.b16 %v826
    %v1427 = vunpack.c.l.b16 %v827
    %v1428 = vunpack.c.h.b16 %v827
    %v1429 = vunpack.c.l.b16 %v828
    %v1430 = vunpack.c.h.b16 %v828
    %v1431 = vunpack.c.l.b16 %v829
    %v1432 = vunpack.c.h.b16 %v829
    %v1433 = vunpack.c.l.b16 %v830
    %v1434 = vunpack.c.h.b16 %v830
    %v1435 = vunpack.c.l.b16 %v831
    %v1436 = vunpack.c.h.b16 %v831
    %v1437 = vunpack.c.l.b16 %v832
    %v1438 = vunpack.c.h.b16 %v832
    %v1439 = vunpack.c.l.b16 %v833
    %v1440 = vunpack.c.h.b16 %v833
    %v1441 = vunpack.c.l.b16 %v834
    %v1442 = vunpack.c.h.b16 %v834
    %v1443 = vunpack.c.l.b16 %v835
    %v1444 = vunpack.c.h.b16 %v835
    %v1445 = vunpack.c.l.b16 %v836
    %v1446 = vunpack.c.h.b16 %v836
    %v1447 = vunpack.c.l.b16 %v837
    %v1448 = vunpack.c.h.b16 %v837
    %v1449 = vunpack.c.l.b16 %v838
    %v1450 = vunpack.c.h.b16 %v838
    %v1451 = vunpack.c.l.b16 %v839
    %v1452 = vunpack.c.h.b16 %v839
    %v1453 = vunpack.c.l.b16 %v840
    %v1454 = vunpack.c.h.b16 %v840
    %v1455 = vunpack.c.l.b16 %v841
    %v1456 = vunpack.c.h.b16 %v841
    %v1457 = vunpack.c.l.b16 %v842
    %v1458 = vunpack.c.h.b16 %v842
    %v1459 = vunpack.c.l.b16 %v843
    %v1460 = vunpack.c.h.b16 %v843
    %v1461 = vunpack.c.l.b16 %v844
    %v1462 = vunpack.c.h.b16 %v844
    %v1463 = vunpack.c.l.b16 %v845
    %v1464 = vunpack.c.h.b16 %v845
    %v1465 = vunpack.c.l.b16 %v846
    %v1466 = vunpack.c.h.b16 %v846
    %v1467 = vunpack.c.l.b16 %v847
    %v1468 = vunpack.c.h.b16 %v847
    %v1469 = vunpack.c.l.b16 %v848
    %v1470 = vunpack.c.h.b16 %v848
    %v1471 = vunpack.c.l.b16 %v849
    %v1472 = vunpack.c.h.b16 %v849
    %v1473 = vunpack.c.l.b16 %v850
    %v1474 = vunpack.c.h.b16 %v850
    %v1475 = vunpack.c.l.b16 %v851
    %v1476 = vunpack.c.h.b16 %v851
    %v1477 = vunpack.c.l.b16 %v852
    %v1478 = vunpack.c.h.b16 %v852
    %v1479 = vunpack.c.l.b16 %v853
    %v1480 = vunpack.c.h.b16 %v853
    %v1481 = vunpack.c.l.b16 %v854
    %v1482 = vunpack.c.h.b16 %v854
    %v1483 = vunpack.c.l.b16 %v855
    %v1484 = vunpack.c.h.b16 %v855
    %v1485 = vunpack.c.l.b16 %v856
    %v1486 = vunpack.c.h.b16 %v856
    %v1487 = vunpack.c.l.b16 %v857
    %v1488 = vunpack.c.h.b16 %v857
    %v1489 = vunpack.c.l.b16 %v858
    %v1490 = vunpack.c.h.b16 %v858
    %v1491 = vunpack.c.l.b16 %v859
    %v1492 = vunpack.c.h.b16 %v859
    %v1493 = vunpack.c.l.b16 %v860
    %v1494 = vunpack.c.h.b16 %v860
    %v1495 = vunpack.c.l.b16 %v861
    %v1496 = vunpack.c.h.b16 %v861
    %v1497 = vunpack.c.l.b16 %v862
    %v1498 = vunpack.c.h.b16 %v862
    %v1499 = vunpack.c.l.b16 %v863
    %v1500 = vunpack.c.h.b16 %v863
    %v1501 = vunpack.c.l.b16 %v864
    %v1502 = vunpack.c.h.b16 %v864
    %v1503 = vunpack.c.l.b16 %v865
    %v1504 = vunpack.c.h.b16 %v865
    %v1505 = vunpack.c.l.b16 %v866
    %v1506 = vunpack.c.h.b16 %v866
    %v1507 = vunpack.c.l.b16 %v867
    %v1508 = vunpack.c.h.b16 %v867
    %v1509 = vunpack.c.l.b16 %v868
    %v1510 = vunpack.c.h.b16 %v868
    %v1511 = vunpack.c.l.b16 %v869
    %v1512 = vunpack.c.h.b16 %v869
    %v1513 = vunpack.c.l.b16 %v870
    %v1514 = vunpack.c.h.b16 %v870
    %v1515 = vunpack.c.l.b16 %v871
    %v1516 = vunpack.c.h.b16 %v871
    %v1517 = vunpack.c.l.b16 %v872
    %v1518 = vunpack.c.h.b16 %v872
    %v1519 = vunpack.c.l.b16 %v873
    %v1520 = vunpack.c.h.b16 %v873
    %v1521 = vunpack.c.l.b16 %v874
    %v1522 = vunpack.c.h.b16 %v874
    %v1523 = vunpack.c.l.b16 %v875
    %v1524 = vunpack.c.h.b16 %v875
    %v1525 = vunpack.c.l.b16 %v876
    %v1526 = vunpack.c.h.b16 %v876
    %v1527 = vunpack.c.l.b16 %v877
    %v1528 = vunpack.c.h.b16 %v877
    %v1529 = vunpack.c.l.b16 %v878
    %v1530 = vunpack.c.h.b16 %v878
    %v1531 = vunpack.c.l.b16 %v879
    %v1532 = vunpack.c.h.b16 %v879
    %v1533 = vunpack.c.l.b16 %v880
    %v1534 = vunpack.c.h.b16 %v880
    %v1535 = vunpack.c.l.b16 %v881
    %v1536 = vunpack.c.h.b16 %v881
    %v1537 = vunpack.c.l.b16 %v882
    %v1538 = vunpack.c.h.b16 %v882
    %v1539 = vunpack.c.l.b16 %v883
    %v1540 = vunpack.c.h.b16 %v883
    %v1541 = vunpack.c.l.b16 %v884
    %v1542 = vunpack.c.h.b16 %v884
    %v1543 = vunpack.c.l.b16 %v885
    %v1544 = vunpack.c.h.b16 %v885
    %v1545 = vunpack.c.l.b16 %v886
    %v1546 = vunpack.c.h.b16 %v886
    %v1547 = vunpack.c.l.b16 %v887
    %v1548 = vunpack.c.h.b16 %v887
    %v1549 = vunpack.c.l.b16 %v888
    %v1550 = vunpack.c.h.b16 %v888
    %v1551 = vunpack.c.l.b16 %v889
    %v1552 = vunpack.c.h.b16 %v889
    %v1553 = vunpack.c.l.b16 %v890
    %v1554 = vunpack.c.h.b16 %v890
    %v1555 = vunpack.c.l.b16 %v891
    %v1556 = vunpack.c.h.b16 %v891
    %v1557 = vunpack.c.l.b16 %v892
    %v1558 = vunpack.c.h.b16 %v892
    %v1559 = vunpack.c.l.b16 %v893
    %v1560 = vunpack.c.h.b16 %v893
    %v1561 = vunpack.c.l.b16 %v894
    %v1562 = vunpack.c.h.b16 %v894
    %v1563 = vunpack.c.l.b16 %v895
    %v1564 = vunpack.c.h.b16 %v895
    %v1565 = vunpack.c.l.b16 %v896
    %v1566 = vunpack.c.h.b16 %v896
    %v1567 = vunpack.c.l.b16 %v897
    %v1568 = vunpack.c.h.b16 %v897
    %v1569 = vunpack.c.l.b16 %v898
    %v1570 = vunpack.c.h.b16 %v898
    %v1571 = vunpack.c.l.b16 %v899
    %v1572 = vunpack.c.h.b16 %v899
    %v1573 = vunpack.c.l.b16 %v900
    %v1574 = vunpack.c.h.b16 %v900
    %v1575 = vunpack.c.l.b16 %v901
    %v1576 = vunpack.c.h.b16 %v901
    %v1577 = vunpack.c.l.b16 %v902
    %v1578 = vunpack.c.h.b16 %v902
    %v1579 = vunpack.c.l.b16 %v903
    %v1580 = vunpack.c.h.b16 %v903
    %v1581 = vunpack.c.l.b16 %v904
    %v1582 = vunpack.c.h.b16 %v904
    %v1583 = vunpack.c.l.b16 %v905
    %v1584 = vunpack.c.h.b16 %v905
    %v1585 = vunpack.c.l.b16 %v906
    %v1586 = vunpack.c.h.b16 %v906
    %v1587 = vunpack.c.l.b16 %v907
    %v1588 = vunpack.c.h.b16 %v907
    %v1589 = vunpack.c.l.b16 %v908
    %v1590 = vunpack.c.h.b16 %v908
    %v1591 = vunpack.c.l.b16 %v909
    %v1592 = vunpack.c.h.b16 %v909
    %v1593 = vunpack.c.l.b16 %v910
    %v1594 = vunpack.c.h.b16 %v910
    %v1595 = vunpack.c.l.b16 %v911
    %v1596 = vunpack.c.h.b16 %v911
    %v1597 = vunpack.c.l.b16 %v912
    %v1598 = vunpack.c.h.b16 %v912
    %v1599 = vunpack.c.l.b16 %v913
    %v1600 = vunpack.c.h.b16 %v913
    %v1601 = vunpack.c.l.b16 %v914
    %v1602 = vunpack.c.h.b16 %v914
    %v1603 = vunpack.c.l.b16 %v915
    %v1604 = vunpack.c.h.b16 %v915
    %v1605 = vunpack.c.l.b16 %v916
    %v1606 = vunpack.c.h.b16 %v916
    %v1607 = vunpack.c.l.b16 %v917
    %v1608 = vunpack.c.h.b16 %v917
    %v1609 = vunpack.c.l.b16 %v918
    %v1610 = vunpack.c.h.b16 %v918
    %v1611 = vunpack.c.l.b16 %v919
    %v1612 = vunpack.c.h.b16 %v919
    %v1613 = vunpack.c.l.b16 %v920
    %v1614 = vunpack.c.h.b16 %v920
    %v1615 = vunpack.c.l.b16 %v921
    %v1616 = vunpack.c.h.b16 %v921
    %v1617 = vunpack.c.l.b16 %v922
    %v1618 = vunpack.c.h.b16 %v922
    %v1619 = vunpack.c.l.b16 %v923
    %v1620 = vunpack.c.h.b16 %v923
    %v1621 = vunpack.c.l.b16 %v924
    %v1622 = vunpack.c.h.b16 %v924
    %v1623 = vunpack.c.l.b16 %v925
    %v1624 = vunpack.c.h.b16 %v925
    %v1625 = vunpack.c.l.b16 %v926
    %v1626 = vunpack.c.h.b16 %v926
    %v1627 = vunpack.c.l.b16 %v927
    %v1628 = vunpack.c.h.b16 %v927
    %v1629 = vunpack.c.l.b16 %v928
    %v1630 = vunpack.c.h.b16 %v928
    %v1631 = vunpack.c.l.b16 %v929
    %v1632 = vunpack.c.h.b16 %v929
    %v1633 = vunpack.c.l.b16 %v930
    %v1634 = vunpack.c.h.b16 %v930
    %v1635 = vunpack.c.l.b16 %v931
    %v1636 = vunpack.c.h.b16 %v931
    %v1637 = vunpack.c.l.b16 %v932
    %v1638 = vunpack.c.h.b16 %v932
    %v1639 = vunpack.c.l.b16 %v933
    %v1640 = vunpack.c.h.b16 %v933
    %v1641 = vunpack.c.l.b16 %v934
    %v1642 = vunpack.c.h.b16 %v934
    %v1643 = vunpack.c.l.b16 %v935
    %v1644 = vunpack.c.h.b16 %v935
    %v1645 = vunpack.c.l.b16 %v936
    %v1646 = vunpack.c.h.b16 %v936
    %v1647 = vunpack.c.l.b16 %v937
    %v1648 = vunpack.c.h.b16 %v937
    %v1649 = vunpack.c.l.b16 %v938
    %v1650 = vunpack.c.h.b16 %v938
    %v1651 = vunpack.c.l.b16 %v939
    %v1652 = vunpack.c.h.b16 %v939
    %v1653 = vunpack.c.l.b16 %v940
    %v1654 = vunpack.c.h.b16 %v940
    %v1655 = vunpack.c.l.b16 %v941
    %v1656 = vunpack.c.h.b16 %v941
    %v1657 = vunpack.c.l.b16 %v942
    %v1658 = vunpack.c.h.b16 %v942
    %v1659 = vunpack.c.l.b16 %v943
    %v1660 = vunpack.c.h.b16 %v943
    %v1661 = vunpack.c.l.b16 %v944
    %v1662 = vunpack.c.h.b16 %v944
    %v1663 = vunpack.c.l.b16 %v945
    %v1664 = vunpack.c.h.b16 %v945
    %v1665 = vunpack.c.l.b16 %v946
    %v1666 = vunpack.c.h.b16 %v946
    %v1667 = vunpack.c.l.b16 %v947
    %v1668 = vunpack.c.h.b16 %v947
    %v1669 = vunpack.c.l.b16 %v948
    %v1670 = vunpack.c.h.b16 %v948
    %v1671 = vunpack.c.l.b16 %v949
    %v1672 = vunpack.c.h.b16 %v949
    %v1673 = vunpack.c.l.b16 %v950
    %v1674 = vunpack.c.h.b16 %v950
    %v1675 = vunpack.c.l.b16 %v951
    %v1676 = vunpack.c.h.b16 %v951
    %v1677 = vunpack.c.l.b16 %v952
    %v1678 = vunpack.c.h.b16 %v952
    %v1679 = vunpack.c.l.b16 %v953
    %v1680 = vunpack.c.h.b16 %v953
    %v1681 = vunpack.c.l.b16 %v954
    %v1682 = vunpack.c.h.b16 %v954
    %v1683 = vunpack.c.l.b16 %v955
    %v1684 = vunpack.c.h.b16 %v955
    %v1685 = vunpack.c.l.b16 %v956
    %v1686 = vunpack.c.h.b16 %v956
    %v1687 = vunpack.c.l.b16 %v957
    %v1688 = vunpack.c.h.b16 %v957
    %v1689 = vunpack.c.l.b16 %v958
    %v1690 = vunpack.c.h.b16 %v958
    %v1691 = vunpack.c.l.b16 %v959
    %v1692 = vunpack.c.h.b16 %v959
    %v1693 = vunpack.c.l.b16 %v960
    %v1694 = vunpack.c.h.b16 %v960
    %v1695 = vunpack.c.l.b16 %v961
    %v1696 = vunpack.c.h.b16 %v961
    %v1697 = vunpack.c.l.b16 %v962
    %v1698 = vunpack.c.h.b16 %v962
    %v1699 = vunpack.c.l.b16 %v963
    %v1700 = vunpack.c.h.b16 %v963
    %v1701 = vunpack.c.l.b16 %v964
    %v1702 = vunpack.c.h.b16 %v964
    %v1703 = vunpack.c.l.b16 %v965
    %v1704 = vunpack.c.h.b16 %v965
    %v1705 = vunpack.c.l.b16 %v966
    %v1706 = vunpack.c.h.b16 %v966
    %v1707 = vunpack.c.l.b16 %v967
    %v1708 = vunpack.c.h.b16 %v967
    %v1709 = vunpack.c.l.b16 %v968
    %v1710 = vunpack.c.h.b16 %v968
    %v1711 = vunpack.c.l.b16 %v969
    %v1712 = vunpack.c.h.b16 %v969
    %v1713 = vunpack.c.l.b16 %v970
    %v1714 = vunpack.c.h.b16 %v970
    %v1715 = vunpack.c.l.b16 %v971
    %v1716 = vunpack.c.h.b16 %v971
    %v1717 = vunpack.c.l.b16 %v972
    %v1718 = vunpack.c.h.b16 %v972
    %v1719 = vunpack.c.l.b16 %v973
    %v1720 = vunpack.c.h.b16 %v973
    %v1721 = vunpack.c.l.b16 %v974
    %v1722 = vunpack.c.h.b16 %v974
    %v1723 = vunpack.c.l.b16 %v975
    %v1724 = vunpack.c.h.b16 %v975
    %v1725 = vunpack.c.l.b16 %v976
    %v1726 = vunpack.c.h.b16 %v976
    %v1727 = vunpack.c.l.b16 %v977
    %v1728 = vunpack.c.h.b16 %v977
    %v1729 = vunpack.c.l.b16 %v978
    %v1730 = vunpack.c.h.b16 %v978
    %v1731 = vunpack.c.l.b16 %v979
    %v1732 = vunpack.c.h.b16 %v979
    %v1733 = vunpack.c.l.b16 %v980
    %v1734 = vunpack.c.h.b16 %v980
    %v1735 = vunpack.c.l.b16 %v981
    %v1736 = vunpack.c.h.b16 %v981
    %v1737 = vunpack.c.l.b16 %v982
    %v1738 = vunpack.c.h.b16 %v982
    %v1739 = vunpack.c.l.b16 %v983
    %v1740 = vunpack.c.h.b16 %v983
    %v1741 = vunpack.c.l.b16 %v984
    %v1742 = vunpack.c.h.b16 %v984
    %v1743 = vunpack.c.l.b16 %v985
    %v1744 = vunpack.c.h.b16 %v985
    %v1745 = vunpack.c.l.b16 %v986
    %v1746 = vunpack.c.h.b16 %v986
    %v1747 = vunpack.c.l.b16 %v987
    %v1748 = vunpack.c.h.b16 %v987
    %v1749 = vunpack.c.l.b16 %v988
    %v1750 = vunpack.c.h.b16 %v988
    %v1751 = vunpack.c.l.b16 %v989
    %v1752 = vunpack.c.h.b16 %v989
    %v1753 = vunpack.c.l.b16 %v990
    %v1754 = vunpack.c.h.b16 %v990
    %v1755 = vunpack.c.l.b16 %v991
    %v1756 = vunpack.c.h.b16 %v991
    %v1757 = vunpack.c.l.b16 %v992
    %v1758 = vunpack.c.h.b16 %v992
    %v1759 = vunpack.c.l.b16 %v993
    %v1760 = vunpack.c.h.b16 %v993
    %v1761 = vunpack.c.l.b16 %v994
    %v1762 = vunpack.c.h.b16 %v994
    %v1763 = vunpack.c.l.b16 %v995
    %v1764 = vunpack.c.h.b16 %v995
    %v1765 = vunpack.c.l.b16 %v996
    %v1766 = vunpack.c.h.b16 %v996
    %v1767 = vunpack.c.l.b16 %v997
    %v1768 = vunpack.c.h.b16 %v997
    %v1769 = vunpack.c.l.b16 %v998
    %v1770 = vunpack.c.h.b16 %v998
    %v1771 = vunpack.c.l.b16 %v999
    %v1772 = vunpack.c.h.b16 %v999
    %v1773 = vunpack.c.l.b16 %v1000
    %v1774 = vunpack.c.h.b16 %v1000
    %v1775 = vunpack.c.l.b16 %v1001
    %v1776 = vunpack.c.h.b16 %v1001
    %v1777 = vunpack.c.l.b16 %v1002
    %v1778 = vunpack.c.h.b16 %v1002
    %v1779 = vunpack.c.l.b16 %v1003
    %v1780 = vunpack.c.h.b16 %v1003
    %v1781 = vunpack.c.l.b16 %v1004
    %v1782 = vunpack.c.h.b16 %v1004
    %v1783 = vpack.c.b16 %v1275, %v1271
    %v1784 = vpack.c.b16 %v1276, %v1272
    %v1785 = vpack.c.b16 %v1277, %v1273
    %v1786 = vpack.c.b16 %v1278, %v1274
    %v1787 = vpack.c.b16 %v1283, %v1279
    %v1788 = vpack.c.b16 %v1284, %v1280
    %v1789 = vpack.c.b16 %v1285, %v1281
    %v1790 = vpack.c.b16 %v1286, %v1282
    %v1791 = vpack.c.b16 %v1291, %v1287
    %v1792 = vpack.c.b16 %v1292, %v1288
    %v1793 = vpack.c.b16 %v1293, %v1289
    %v1794 = vpack.c.b16 %v1294, %v1290
    %v1795 = vpack.c.b16 %v1299, %v1295
    %v1796 = vpack.c.b16 %v1300, %v1296
    %v1797 = vpack.c.b16 %v1301, %v1297
    %v1798 = vpack.c.b16 %v1302, %v1298
    %v1799 = vpack.c.b16 %v1307, %v1303
    %v1800 = vpack.c.b16 %v1308, %v1304
    %v1801 = vpack.c.b16 %v1309, %v1305
    %v1802 = vpack.c.b16 %v1310, %v1306
    %v1803 = vpack.c.b16 %v1315, %v1311
    %v1804 = vpack.c.b16 %v1316, %v1312
    %v1805 = vpack.c.b16 %v1317, %v1313
    %v1806 = vpack.c.b16 %v1318, %v1314
    %v1807 = vpack.c.b16 %v1323, %v1319
    %v1808 = vpack.c.b16 %v1324, %v1320
    %v1809 = vpack.c.b16 %v1325, %v1321
    %v1810 = vpack.c.b16 %v1326, %v1322
    %v1811 = vpack.c.b16 %v1331, %v1327
    %v1812 = vpack.c.b16 %v1332, %v1328
    %v1813 = vpack.c.b16 %v1333, %v1329
    %v1814 = vpack.c.b16 %v1334, %v1330
    %v1815 = vpack.c.b16 %v1339, %v1335
    %v1816 = vpack.c.b16 %v1340, %v1336
    %v1817 = vpack.c.b16 %v1341, %v1337
    %v1818 = vpack.c.b16 %v1342, %v1338
    %v1819 = vpack.c.b16 %v1347, %v1343
    %v1820 = vpack.c.b16 %v1348, %v1344
    %v1821 = vpack.c.b16 %v1349, %v1345
    %v1822 = vpack.c.b16 %v1350, %v1346
    %v1823 = vpack.c.b16 %v1355, %v1351
    %v1824 = vpack.c.b16 %v1356, %v1352
    %v1825 = vpack.c.b16 %v1357, %v1353
    %v1826 = vpack.c.b16 %v1358, %v1354
    %v1827 = vpack.c.b16 %v1363, %v1359
    %v1828 = vpack.c.b16 %v1364, %v1360
    %v1829 = vpack.c.b16 %v1365, %v1361
    %v1830 = vpack.c.b16 %v1366, %v1362
    %v1831 = vpack.c.b16 %v1371, %v1367
    %v1832 = vpack.c.b16 %v1372, %v1368
    %v1833 = vpack.c.b16 %v1373, %v1369
    %v1834 = vpack.c.b16 %v1374, %v1370
    %v1835 = vpack.c.b16 %v1379, %v1375
    %v1836 = vpack.c.b16 %v1380, %v1376
    %v1837 = vpack.c.b16 %v1381, %v1377
    %v1838 = vpack.c.b16 %v1382, %v1378
    %v1839 = vpack.c.b16 %v1387, %v1383
    %v1840 = vpack.c.b16 %v1388, %v1384
    %v1841 = vpack.c.b16 %v1389, %v1385
    %v1842 = vpack.c.b16 %v1390, %v1386
    %v1843 = vpack.c.b16 %v1395, %v1391
    %v1844 = vpack.c.b16 %v1396, %v1392
    %v1845 = vpack.c.b16 %v1397, %v1393
    %v1846 = vpack.c.b16 %v1398, %v1394
    %v1847 = vpack.c.b16 %v1403, %v1399
    %v1848 = vpack.c.b16 %v1404, %v1400
    %v1849 = vpack.c.b16 %v1405, %v1401
    %v1850 = vpack.c.b16 %v1406, %v1402
    %v1851 = vpack.c.b16 %v1411, %v1407
    %v1852 = vpack.c.b16 %v1412, %v1408
    %v1853 = vpack.c.b16 %v1413, %v1409
    %v1854 = vpack.c.b16 %v1414, %v1410
    %v1855 = vpack.c.b16 %v1419, %v1415
    %v1856 = vpack.c.b16 %v1420, %v1416
    %v1857 = vpack.c.b16 %v1421, %v1417
    %v1858 = vpack.c.b16 %v1422, %v1418
    %v1859 = vpack.c.b16 %v1427, %v1423
    %v1860 = vpack.c.b16 %v1428, %v1424
    %v1861 = vpack.c.b16 %v1429, %v1425
    %v1862 = vpack.c.b16 %v1430, %v1426
    %v1863 = vpack.c.b16 %v1435, %v1431
    %v1864 = vpack.c.b16 %v1436, %v1432
    %v1865 = vpack.c.b16 %v1437, %v1433
    %v1866 = vpack.c.b16 %v1438, %v1434
    %v1867 = vpack.c.b16 %v1443, %v1439
    %v1868 = vpack.c.b16 %v1444, %v1440
    %v1869 = vpack.c.b16 %v1445, %v1441
    %v1870 = vpack.c.b16 %v1446, %v1442
    %v1871 = vpack.c.b16 %v1451, %v1447
    %v1872 = vpack.c.b16 %v1452, %v1448
    %v1873 = vpack.c.b16 %v1453, %v1449
    %v1874 = vpack.c.b16 %v1454, %v1450
    %v1875 = vpack.c.b16 %v1459, %v1455
    %v1876 = vpack.c.b16 %v1460, %v1456
    %v1877 = vpack.c.b16 %v1461, %v1457
    %v1878 = vpack.c.b16 %v1462, %v1458
    %v1879 = vpack.c.b16 %v1467, %v1463
    %v1880 = vpack.c.b16 %v1468, %v1464
    %v1881 = vpack.c.b16 %v1469, %v1465
    %v1882 = vpack.c.b16 %v1470, %v1466
    %v1883 = vpack.c.b16 %v1475, %v1471
    %v1884 = vpack.c.b16 %v1476, %v1472
    %v1885 = vpack.c.b16 %v1477, %v1473
    %v1886 = vpack.c.b16 %v1478, %v1474
    %v1887 = vpack.c.b16 %v1483, %v1479
    %v1888 = vpack.c.b16 %v1484, %v1480
    %v1889 = vpack.c.b16 %v1485, %v1481
    %v1890 = vpack.c.b16 %v1486, %v1482
    %v1891 = vpack.c.b16 %v1491, %v1487
    %v1892 = vpack.c.b16 %v1492, %v1488
    %v1893 = vpack.c.b16 %v1493, %v1489
    %v1894 = vpack.c.b16 %v1494, %v1490
    %v1895 = vpack.c.b16 %v1499, %v1495
    %v1896 = vpack.c.b16 %v1500, %v1496
    %v1897 = vpack.c.b16 %v1501, %v1497
    %v1898 = vpack.c.b16 %v1502, %v1498
    %v1899 = vpack.c.b16 %v1507, %v1503
    %v1900 = vpack.c.b16 %v1508, %v1504
    %v1901 = vpack.c.b16 %v1509, %v1505
    %v1902 = vpack.c.b16 %v1510, %v1506
    %v1903 = vpack.c.b16 %v1515, %v1511
    %v1904 = vpack.c.b16 %v1516, %v1512
    %v1905 = vpack.c.b16 %v1517, %v1513
    %v1906 = vpack.c.b16 %v1518, %v1514
    %v1907 = vpack.c.b16 %v1523, %v1519
    %v1908 = vpack.c.b16 %v1524, %v1520
    %v1909 = vpack.c.b16 %v1525, %v1521
    %v1910 = vpack.c.b16 %v1526, %v1522
    %v1911 = vpack.c.b16 %v1531, %v1527
    %v1912 = vpack.c.b16 %v1532, %v1528
    %v1913 = vpack.c.b16 %v1533, %v1529
    %v1914 = vpack.c.b16 %v1534, %v1530
    %v1915 = vpack.c.b16 %v1539, %v1535
    %v1916 = vpack.c.b16 %v1540, %v1536
    %v1917 = vpack.c.b16 %v1541, %v1537
    %v1918 = vpack.c.b16 %v1542, %v1538
    %v1919 = vpack.c.b16 %v1547, %v1543
    %v1920 = vpack.c.b16 %v1548, %v1544
    %v1921 = vpack.c.b16 %v1549, %v1545
    %v1922 = vpack.c.b16 %v1550, %v1546
    %v1923 = vpack.c.b16 %v1555, %v1551
    %v1924 = vpack.c.b16 %v1556, %v1552
    %v1925 = vpack.c.b16 %v1557, %v1553
    %v1926 = vpack.c.b16 %v1558, %v1554
    %v1927 = vpack.c.b16 %v1563, %v1559
    %v1928 = vpack.c.b16 %v1564, %v1560
    %v1929 = vpack.c.b16 %v1565, %v1561
    %v1930 = vpack.c.b16 %v1566, %v1562
    %v1931 = vpack.c.b16 %v1571, %v1567
    %v1932 = vpack.c.b16 %v1572, %v1568
    %v1933 = vpack.c.b16 %v1573, %v1569
    %v1934 = vpack.c.b16 %v1574, %v1570
    %v1935 = vpack.c.b16 %v1579, %v1575
    %v1936 = vpack.c.b16 %v1580, %v1576
    %v1937 = vpack.c.b16 %v1581, %v1577
    %v1938 = vpack.c.b16 %v1582, %v1578
    %v1939 = vpack.c.b16 %v1587, %v1583
    %v1940 = vpack.c.b16 %v1588, %v1584
    %v1941 = vpack.c.b16 %v1589, %v1585
    %v1942 = vpack.c.b16 %v1590, %v1586
    %v1943 = vpack.c.b16 %v1595, %v1591
    %v1944 = vpack.c.b16 %v1596, %v1592
    %v1945 = vpack.c.b16 %v1597, %v1593
    %v1946 = vpack.c.b16 %v1598, %v1594
    %v1947 = vpack.c.b16 %v1603, %v1599
    %v1948 = vpack.c.b16 %v1604, %v1600
    %v1949 = vpack.c.b16 %v1605, %v1601
    %v1950 = vpack.c.b16 %v1606, %v1602
    %v1951 = vpack.c.b16 %v1611, %v1607
    %v1952 = vpack.c.b16 %v1612, %v1608
    %v1953 = vpack.c.b16 %v1613, %v1609
    %v1954 = vpack.c.b16 %v1614, %v1610
    %v1955 = vpack.c.b16 %v1619, %v1615
    %v1956 = vpack.c.b16 %v1620, %v1616
    %v1957 = vpack.c.b16 %v1621, %v1617
    %v1958 = vpack.c.b16 %v1622, %v1618
    %v1959 = vpack.c.b16 %v1627, %v1623
    %v1960 = vpack.c.b16 %v1628, %v1624
    %v1961 = vpack.c.b16 %v1629, %v1625
    %v1962 = vpack.c.b16 %v1630, %v1626
    %v1963 = vpack.c.b16 %v1635, %v1631
    %v1964 = vpack.c.b16 %v1636, %v1632
    %v1965 = vpack.c.b16 %v1637, %v1633
    %v1966 = vpack.c.b16 %v1638, %v1634
    %v1967 = vpack.c.b16 %v1643, %v1639
    %v1968 = vpack.c.b16 %v1644, %v1640
    %v1969 = vpack.c.b16 %v1645, %v1641
    %v1970 = vpack.c.b16 %v1646, %v1642
    %v1971 = vpack.c.b16 %v1651, %v1647
    %v1972 = vpack.c.b16 %v1652, %v1648
    %v1973 = vpack.c.b16 %v1653, %v1649
    %v1974 = vpack.c.b16 %v1654, %v1650
    %v1975 = vpack.c.b16 %v1659, %v1655
    %v1976 = vpack.c.b16 %v1660, %v1656
    %v1977 = vpack.c.b16 %v1661, %v1657
    %v1978 = vpack.c.b16 %v1662, %v1658
    %v1979 = vpack.c.b16 %v1667, %v1663
    %v1980 = vpack.c.b16 %v1668, %v1664
    %v1981 = vpack.c.b16 %v1669, %v1665
    %v1982 = vpack.c.b16 %v1670, %v1666
    %v1983 = vpack.c.b16 %v1675, %v1671
    %v1984 = vpack.c.b16 %v1676, %v1672
    %v1985 = vpack.c.b16 %v1677, %v1673
    %v1986 = vpack.c.b16 %v1678, %v1674
    %v1987 = vpack.c.b16 %v1683, %v1679
    %v1988 = vpack.c.b16 %v1684, %v1680
    %v1989 = vpack.c.b16 %v1685, %v1681
    %v1990 = vpack.c.b16 %v1686, %v1682
    %v1991 = vpack.c.b16 %v1691, %v1687
    %v1992 = vpack.c.b16 %v1692, %v1688
    %v1993 = vpack.c.b16 %v1693, %v1689
    %v1994 = vpack.c.b16 %v1694, %v1690
    %v1995 = vpack.c.b16 %v1699, %v1695
    %v1996 = vpack.c.b16 %v1700, %v1696
    %v1997 = vpack.c.b16 %v1701, %v1697
    %v1998 = vpack.c.b16 %v1702, %v1698
    %v1999 = vpack.c.b16 %v1707, %v1703
    %v2000 = vpack.c.b16 %v1708, %v1704
    %v2001 = vpack.c.b16 %v1709, %v1705
    %v2002 = vpack.c.b16 %v1710, %v1706
    %v2003 = vpack.c.b16 %v1715, %v1711
    %v2004 = vpack.c.b16 %v1716, %v1712
    %v2005 = vpack.c.b16 %v1717, %v1713
    %v2006 = vpack.c.b16 %v1718, %v1714
    %v2007 = vpack.c.b16 %v1723, %v1719
    %v2008 = vpack.c.b16 %v1724, %v1720
    %v2009 = vpack.c.b16 %v1725, %v1721
    %v2010 = vpack.c.b16 %v1726, %v1722
    %v2011 = vpack.c.b16 %v1731, %v1727
    %v2012 = vpack.c.b16 %v1732, %v1728
    %v2013 = vpack.c.b16 %v1733, %v1729
    %v2014 = vpack.c.b16 %v1734, %v1730
    %v2015 = vpack.c.b16 %v1739, %v1735
    %v2016 = vpack.c.b16 %v1740, %v1736
    %v2017 = vpack.c.b16 %v1741, %v1737
    %v2018 = vpack.c.b16 %v1742, %v1738
    %v2019 = vpack.c.b16 %v1747, %v1743
    %v2020 = vpack.c.b16 %v1748, %v1744
    %v2021 = vpack.c.b16 %v1749, %v1745
    %v2022 = vpack.c.b16 %v1750, %v1746
    %v2023 = vpack.c.b16 %v1755, %v1751
    %v2024 = vpack.c.b16 %v1756, %v1752
    %v2025 = vpack.c.b16 %v1757, %v1753
    %v2026 = vpack.c.b16 %v1758, %v1754
    %v2027 = vpack.c.b16 %v1763, %v1759
    %v2028 = vpack.c.b16 %v1764, %v1760
    %v2029 = vpack.c.b16 %v1765, %v1761
    %v2030 = vpack.c.b16 %v1766, %v1762
    %v2031 = vpack.c.b16 %v1771, %v1767
    %v2032 = vpack.c.b16 %v1772, %v1768
    %v2033 = vpack.c.b16 %v1773, %v1769
    %v2034 = vpack.c.b16 %v1774, %v1770
    %v2035 = vpack.c.b16 %v1779, %v1775
    %v2036 = vpack.c.b16 %v1780, %v1776
    %v2037 = vpack.c.b16 %v1781, %v1777
    %v2038 = vpack.c.b16 %v1782, %v1778
    %2295 = vmatpush.bf16.msra.mxu0 %v1811
    %2296 = vmatpush.bf16.msra.mxu0 %v1807
    %2297 = vmatpush.bf16.msra.mxu0 %v1803
    %2298 = vmatpush.bf16.msra.mxu0 %v1799
    %2299 = vmatpush.bf16.msra.mxu0 %v1795
    %2300 = vmatpush.bf16.msra.mxu0 %v1791
    %2301 = vmatpush.bf16.msra.mxu0 %v1787
    %2302 = vmatpush.bf16.msra.mxu0 %v1783
    %2303 = vmatmul.bf16.gmra.mxu0 %v741
    %v2304 = vpop.f32.mrf.mxu0
    %v2305 = vadd.f32 %v1007, %v2304
    %v2306 = vpop.f32.mrf.mxu0
    %v2307 = vadd.f32 %v1007, %v2306
    %2308 = vdwg.mxu0
    %2309 = vmatpush.bf16.msra.mxu0 %v1843
    %2310 = vmatpush.bf16.msra.mxu0 %v1839
    %2311 = vmatpush.bf16.msra.mxu0 %v1835
    %2312 = vmatpush.bf16.msra.mxu0 %v1831
    %2313 = vmatpush.bf16.msra.mxu0 %v1827
    %2314 = vmatpush.bf16.msra.mxu0 %v1823
    %2315 = vmatpush.bf16.msra.mxu0 %v1819
    %2316 = vmatpush.bf16.msra.mxu0 %v1815
    %2317 = vmatmul.bf16.gmra.mxu0 %v742
    %v2318 = vpop.f32.mrf.mxu0
    %v2319 = vadd.f32 %v2305, %v2318
    %v2320 = vpop.f32.mrf.mxu0
    %v2321 = vadd.f32 %v2307, %v2320
    %2322 = vdwg.mxu0
    %2323 = vmatpush.bf16.msra.mxu0 %v1875
    %2324 = vmatpush.bf16.msra.mxu0 %v1871
    %2325 = vmatpush.bf16.msra.mxu0 %v1867
    %2326 = vmatpush.bf16.msra.mxu0 %v1863
    %2327 = vmatpush.bf16.msra.mxu0 %v1859
    %2328 = vmatpush.bf16.msra.mxu0 %v1855
    %2329 = vmatpush.bf16.msra.mxu0 %v1851
    %2330 = vmatpush.bf16.msra.mxu0 %v1847
    %2331 = vmatmul.bf16.gmra.mxu0 %v743
    %v2332 = vpop.f32.mrf.mxu0
    %v2333 = vadd.f32 %v2319, %v2332
    %v2334 = vpop.f32.mrf.mxu0
    %v2335 = vadd.f32 %v2321, %v2334
    %2336 = vdwg.mxu0
    %2337 = vmatpush.bf16.msra.mxu0 %v1907
    %2338 = vmatpush.bf16.msra.mxu0 %v1903
    %2339 = vmatpush.bf16.msra.mxu0 %v1899
    %2340 = vmatpush.bf16.msra.mxu0 %v1895
    %2341 = vmatpush.bf16.msra.mxu0 %v1891
    %2342 = vmatpush.bf16.msra.mxu0 %v1887
    %2343 = vmatpush.bf16.msra.mxu0 %v1883
    %2344 = vmatpush.bf16.msra.mxu0 %v1879
    %2345 = vmatmul.bf16.gmra.mxu0 %v744
    %v2346 = vpop.f32.mrf.mxu0
    %v2347 = vadd.f32 %v2333, %v2346
    %v2348 = vpop.f32.mrf.mxu0
    %v2349 = vadd.f32 %v2335, %v2348
    %2350 = vdwg.mxu0
    %2351 = vmatpush.bf16.msra.mxu0 %v1939
    %2352 = vmatpush.bf16.msra.mxu0 %v1935
    %2353 = vmatpush.bf16.msra.mxu0 %v1931
    %2354 = vmatpush.bf16.msra.mxu0 %v1927
    %2355 = vmatpush.bf16.msra.mxu0 %v1923
    %2356 = vmatpush.bf16.msra.mxu0 %v1919
    %2357 = vmatpush.bf16.msra.mxu0 %v1915
    %2358 = vmatpush.bf16.msra.mxu0 %v1911
    %2359 = vmatmul.bf16.gmra.mxu0 %v745
    %v2360 = vpop.f32.mrf.mxu0
    %v2361 = vadd.f32 %v2347, %v2360
    %v2362 = vpop.f32.mrf.mxu0
    %v2363 = vadd.f32 %v2349, %v2362
    %2364 = vdwg.mxu0
    %2365 = vmatpush.bf16.msra.mxu0 %v1971
    %2366 = vmatpush.bf16.msra.mxu0 %v1967
    %2367 = vmatpush.bf16.msra.mxu0 %v1963
    %2368 = vmatpush.bf16.msra.mxu0 %v1959
    %2369 = vmatpush.bf16.msra.mxu0 %v1955
    %2370 = vmatpush.bf16.msra.mxu0 %v1951
    %2371 = vmatpush.bf16.msra.mxu0 %v1947
    %2372 = vmatpush.bf16.msra.mxu0 %v1943
    %2373 = vmatmul.bf16.gmra.mxu0 %v746
    %v2374 = vpop.f32.mrf.mxu0
    %v2375 = vadd.f32 %v2361, %v2374
    %v2376 = vpop.f32.mrf.mxu0
    %v2377 = vadd.f32 %v2363, %v2376
    %2378 = vdwg.mxu0
    %2379 = vmatpush.bf16.msra.mxu0 %v2003
    %2380 = vmatpush.bf16.msra.mxu0 %v1999
    %2381 = vmatpush.bf16.msra.mxu0 %v1995
    %2382 = vmatpush.bf16.msra.mxu0 %v1991
    %2383 = vmatpush.bf16.msra.mxu0 %v1987
    %2384 = vmatpush.bf16.msra.mxu0 %v1983
    %2385 = vmatpush.bf16.msra.mxu0 %v1979
    %2386 = vmatpush.bf16.msra.mxu0 %v1975
    %2387 = vmatmul.bf16.gmra.mxu0 %v747
    %v2388 = vpop.f32.mrf.mxu0
    %v2389 = vadd.f32 %v2375, %v2388
    %v2390 = vpop.f32.mrf.mxu0
    %v2391 = vadd.f32 %v2377, %v2390
    %2392 = vdwg.mxu0
    %2393 = vmatpush.bf16.msra.mxu0 %v2035
    %2394 = vmatpush.bf16.msra.mxu0 %v2031
    %2395 = vmatpush.bf16.msra.mxu0 %v2027
    %2396 = vmatpush.bf16.msra.mxu0 %v2023
    %2397 = vmatpush.bf16.msra.mxu0 %v2019
    %2398 = vmatpush.bf16.msra.mxu0 %v2015
    %2399 = vmatpush.bf16.msra.mxu0 %v2011
    %2400 = vmatpush.bf16.msra.mxu0 %v2007
    %2401 = vmatmul.bf16.gmra.mxu0 %v748
    %v2402 = vpop.f32.mrf.mxu0
    %v2403 = vadd.f32 %v2389, %v2402
    %v2404 = vpop.f32.mrf.mxu0
    %v2405 = vadd.f32 %v2391, %v2404
    %2406 = vdwg.mxu0
    %2407 = vmatpush.bf16.msra.mxu0 %v1812
    %2408 = vmatpush.bf16.msra.mxu0 %v1808
    %2409 = vmatpush.bf16.msra.mxu0 %v1804
    %2410 = vmatpush.bf16.msra.mxu0 %v1800
    %2411 = vmatpush.bf16.msra.mxu0 %v1796
    %2412 = vmatpush.bf16.msra.mxu0 %v1792
    %2413 = vmatpush.bf16.msra.mxu0 %v1788
    %2414 = vmatpush.bf16.msra.mxu0 %v1784
    %2415 = vmatmul.bf16.gmra.mxu0 %v741
    %v2416 = vpop.f32.mrf.mxu0
    %v2417 = vadd.f32 %v1008, %v2416
    %v2418 = vpop.f32.mrf.mxu0
    %v2419 = vadd.f32 %v1008, %v2418
    %2420 = vdwg.mxu0
    %2421 = vmatpush.bf16.msra.mxu0 %v1844
    %2422 = vmatpush.bf16.msra.mxu0 %v1840
    %2423 = vmatpush.bf16.msra.mxu0 %v1836
    %2424 = vmatpush.bf16.msra.mxu0 %v1832
    %2425 = vmatpush.bf16.msra.mxu0 %v1828
    %2426 = vmatpush.bf16.msra.mxu0 %v1824
    %2427 = vmatpush.bf16.msra.mxu0 %v1820
    %2428 = vmatpush.bf16.msra.mxu0 %v1816
    %2429 = vmatmul.bf16.gmra.mxu0 %v742
    %v2430 = vpop.f32.mrf.mxu0
    %v2431 = vadd.f32 %v2417, %v2430
    %v2432 = vpop.f32.mrf.mxu0
    %v2433 = vadd.f32 %v2419, %v2432
    %2434 = vdwg.mxu0
    %2435 = vmatpush.bf16.msra.mxu0 %v1876
    %2436 = vmatpush.bf16.msra.mxu0 %v1872
    %2437 = vmatpush.bf16.msra.mxu0 %v1868
    %2438 = vmatpush.bf16.msra.mxu0 %v1864
    %2439 = vmatpush.bf16.msra.mxu0 %v1860
    %2440 = vmatpush.bf16.msra.mxu0 %v1856
    %2441 = vmatpush.bf16.msra.mxu0 %v1852
    %2442 = vmatpush.bf16.msra.mxu0 %v1848
    %2443 = vmatmul.bf16.gmra.mxu0 %v743
    %v2444 = vpop.f32.mrf.mxu0
    %v2445 = vadd.f32 %v2431, %v2444
    %v2446 = vpop.f32.mrf.mxu0
    %v2447 = vadd.f32 %v2433, %v2446
    %2448 = vdwg.mxu0
    %2449 = vmatpush.bf16.msra.mxu0 %v1908
    %2450 = vmatpush.bf16.msra.mxu0 %v1904
    %2451 = vmatpush.bf16.msra.mxu0 %v1900
    %2452 = vmatpush.bf16.msra.mxu0 %v1896
    %2453 = vmatpush.bf16.msra.mxu0 %v1892
    %2454 = vmatpush.bf16.msra.mxu0 %v1888
    %2455 = vmatpush.bf16.msra.mxu0 %v1884
    %2456 = vmatpush.bf16.msra.mxu0 %v1880
    %2457 = vmatmul.bf16.gmra.mxu0 %v744
    %v2458 = vpop.f32.mrf.mxu0
    %v2459 = vadd.f32 %v2445, %v2458
    %v2460 = vpop.f32.mrf.mxu0
    %v2461 = vadd.f32 %v2447, %v2460
    %2462 = vdwg.mxu0
    %2463 = vmatpush.bf16.msra.mxu0 %v1940
    %2464 = vmatpush.bf16.msra.mxu0 %v1936
    %2465 = vmatpush.bf16.msra.mxu0 %v1932
    %2466 = vmatpush.bf16.msra.mxu0 %v1928
    %2467 = vmatpush.bf16.msra.mxu0 %v1924
    %2468 = vmatpush.bf16.msra.mxu0 %v1920
    %2469 = vmatpush.bf16.msra.mxu0 %v1916
    %2470 = vmatpush.bf16.msra.mxu0 %v1912
    %2471 = vmatmul.bf16.gmra.mxu0 %v745
    %v2472 = vpop.f32.mrf.mxu0
    %v2473 = vadd.f32 %v2459, %v2472
    %v2474 = vpop.f32.mrf.mxu0
    %v2475 = vadd.f32 %v2461, %v2474
    %2476 = vdwg.mxu0
    %2477 = vmatpush.bf16.msra.mxu0 %v1972
    %2478 = vmatpush.bf16.msra.mxu0 %v1968
    %2479 = vmatpush.bf16.msra.mxu0 %v1964
    %2480 = vmatpush.bf16.msra.mxu0 %v1960
    %2481 = vmatpush.bf16.msra.mxu0 %v1956
    %2482 = vmatpush.bf16.msra.mxu0 %v1952
    %2483 = vmatpush.bf16.msra.mxu0 %v1948
    %2484 = vmatpush.bf16.msra.mxu0 %v1944
    %2485 = vmatmul.bf16.gmra.mxu0 %v746
    %v2486 = vpop.f32.mrf.mxu0
    %v2487 = vadd.f32 %v2473, %v2486
    %v2488 = vpop.f32.mrf.mxu0
    %v2489 = vadd.f32 %v2475, %v2488
    %2490 = vdwg.mxu0
    %2491 = vmatpush.bf16.msra.mxu0 %v2004
    %2492 = vmatpush.bf16.msra.mxu0 %v2000
    %2493 = vmatpush.bf16.msra.mxu0 %v1996
    %2494 = vmatpush.bf16.msra.mxu0 %v1992
    %2495 = vmatpush.bf16.msra.mxu0 %v1988
    %2496 = vmatpush.bf16.msra.mxu0 %v1984
    %2497 = vmatpush.bf16.msra.mxu0 %v1980
    %2498 = vmatpush.bf16.msra.mxu0 %v1976
    %2499 = vmatmul.bf16.gmra.mxu0 %v747
    %v2500 = vpop.f32.mrf.mxu0
    %v2501 = vadd.f32 %v2487, %v2500
    %v2502 = vpop.f32.mrf.mxu0
    %v2503 = vadd.f32 %v2489, %v2502
    %2504 = vdwg.mxu0
    %2505 = vmatpush.bf16.msra.mxu0 %v2036
    %2506 = vmatpush.bf16.msra.mxu0 %v2032
    %2507 = vmatpush.bf16.msra.mxu0 %v2028
    %2508 = vmatpush.bf16.msra.mxu0 %v2024
    %2509 = vmatpush.bf16.msra.mxu0 %v2020
    %2510 = vmatpush.bf16.msra.mxu0 %v2016
    %2511 = vmatpush.bf16.msra.mxu0 %v2012
    %2512 = vmatpush.bf16.msra.mxu0 %v2008
    %2513 = vmatmul.bf16.gmra.mxu0 %v748
    %v2514 = vpop.f32.mrf.mxu0
    %v2515 = vadd.f32 %v2501, %v2514
    %v2516 = vpop.f32.mrf.mxu0
    %v2517 = vadd.f32 %v2503, %v2516
    %2518 = vdwg.mxu0
    %2519 = vmatpush.bf16.msra.mxu0 %v1813
    %2520 = vmatpush.bf16.msra.mxu0 %v1809
    %2521 = vmatpush.bf16.msra.mxu0 %v1805
    %2522 = vmatpush.bf16.msra.mxu0 %v1801
    %2523 = vmatpush.bf16.msra.mxu0 %v1797
    %2524 = vmatpush.bf16.msra.mxu0 %v1793
    %2525 = vmatpush.bf16.msra.mxu0 %v1789
    %2526 = vmatpush.bf16.msra.mxu0 %v1785
    %2527 = vmatmul.bf16.gmra.mxu0 %v741
    %v2528 = vpop.f32.mrf.mxu0
    %v2529 = vadd.f32 %v1009, %v2528
    %v2530 = vpop.f32.mrf.mxu0
    %v2531 = vadd.f32 %v1009, %v2530
    %2532 = vdwg.mxu0
    %2533 = vmatpush.bf16.msra.mxu0 %v1845
    %2534 = vmatpush.bf16.msra.mxu0 %v1841
    %2535 = vmatpush.bf16.msra.mxu0 %v1837
    %2536 = vmatpush.bf16.msra.mxu0 %v1833
    %2537 = vmatpush.bf16.msra.mxu0 %v1829
    %2538 = vmatpush.bf16.msra.mxu0 %v1825
    %2539 = vmatpush.bf16.msra.mxu0 %v1821
    %2540 = vmatpush.bf16.msra.mxu0 %v1817
    %2541 = vmatmul.bf16.gmra.mxu0 %v742
    %v2542 = vpop.f32.mrf.mxu0
    %v2543 = vadd.f32 %v2529, %v2542
    %v2544 = vpop.f32.mrf.mxu0
    %v2545 = vadd.f32 %v2531, %v2544
    %2546 = vdwg.mxu0
    %2547 = vmatpush.bf16.msra.mxu0 %v1877
    %2548 = vmatpush.bf16.msra.mxu0 %v1873
    %2549 = vmatpush.bf16.msra.mxu0 %v1869
    %2550 = vmatpush.bf16.msra.mxu0 %v1865
    %2551 = vmatpush.bf16.msra.mxu0 %v1861
    %2552 = vmatpush.bf16.msra.mxu0 %v1857
    %2553 = vmatpush.bf16.msra.mxu0 %v1853
    %2554 = vmatpush.bf16.msra.mxu0 %v1849
    %2555 = vmatmul.bf16.gmra.mxu0 %v743
    %v2556 = vpop.f32.mrf.mxu0
    %v2557 = vadd.f32 %v2543, %v2556
    %v2558 = vpop.f32.mrf.mxu0
    %v2559 = vadd.f32 %v2545, %v2558
    %2560 = vdwg.mxu0
    %2561 = vmatpush.bf16.msra.mxu0 %v1909
    %2562 = vmatpush.bf16.msra.mxu0 %v1905
    %2563 = vmatpush.bf16.msra.mxu0 %v1901
    %2564 = vmatpush.bf16.msra.mxu0 %v1897
    %2565 = vmatpush.bf16.msra.mxu0 %v1893
    %2566 = vmatpush.bf16.msra.mxu0 %v1889
    %2567 = vmatpush.bf16.msra.mxu0 %v1885
    %2568 = vmatpush.bf16.msra.mxu0 %v1881
    %2569 = vmatmul.bf16.gmra.mxu0 %v744
    %v2570 = vpop.f32.mrf.mxu0
    %v2571 = vadd.f32 %v2557, %v2570
    %v2572 = vpop.f32.mrf.mxu0
    %v2573 = vadd.f32 %v2559, %v2572
    %2574 = vdwg.mxu0
    %2575 = vmatpush.bf16.msra.mxu0 %v1941
    %2576 = vmatpush.bf16.msra.mxu0 %v1937
    %2577 = vmatpush.bf16.msra.mxu0 %v1933
    %2578 = vmatpush.bf16.msra.mxu0 %v1929
    %2579 = vmatpush.bf16.msra.mxu0 %v1925
    %2580 = vmatpush.bf16.msra.mxu0 %v1921
    %2581 = vmatpush.bf16.msra.mxu0 %v1917
    %2582 = vmatpush.bf16.msra.mxu0 %v1913
    %2583 = vmatmul.bf16.gmra.mxu0 %v745
    %v2584 = vpop.f32.mrf.mxu0
    %v2585 = vadd.f32 %v2571, %v2584
    %v2586 = vpop.f32.mrf.mxu0
    %v2587 = vadd.f32 %v2573, %v2586
    %2588 = vdwg.mxu0
    %2589 = vmatpush.bf16.msra.mxu0 %v1973
    %2590 = vmatpush.bf16.msra.mxu0 %v1969
    %2591 = vmatpush.bf16.msra.mxu0 %v1965
    %2592 = vmatpush.bf16.msra.mxu0 %v1961
    %2593 = vmatpush.bf16.msra.mxu0 %v1957
    %2594 = vmatpush.bf16.msra.mxu0 %v1953
    %2595 = vmatpush.bf16.msra.mxu0 %v1949
    %2596 = vmatpush.bf16.msra.mxu0 %v1945
    %2597 = vmatmul.bf16.gmra.mxu0 %v746
    %v2598 = vpop.f32.mrf.mxu0
    %v2599 = vadd.f32 %v2585, %v2598
    %v2600 = vpop.f32.mrf.mxu0
    %v2601 = vadd.f32 %v2587, %v2600
    %2602 = vdwg.mxu0
    %2603 = vmatpush.bf16.msra.mxu0 %v2005
    %2604 = vmatpush.bf16.msra.mxu0 %v2001
    %2605 = vmatpush.bf16.msra.mxu0 %v1997
    %2606 = vmatpush.bf16.msra.mxu0 %v1993
    %2607 = vmatpush.bf16.msra.mxu0 %v1989
    %2608 = vmatpush.bf16.msra.mxu0 %v1985
    %2609 = vmatpush.bf16.msra.mxu0 %v1981
    %2610 = vmatpush.bf16.msra.mxu0 %v1977
    %2611 = vmatmul.bf16.gmra.mxu0 %v747
    %v2612 = vpop.f32.mrf.mxu0
    %v2613 = vadd.f32 %v2599, %v2612
    %v2614 = vpop.f32.mrf.mxu0
    %v2615 = vadd.f32 %v2601, %v2614
    %2616 = vdwg.mxu0
    %2617 = vmatpush.bf16.msra.mxu0 %v2037
    %2618 = vmatpush.bf16.msra.mxu0 %v2033
    %2619 = vmatpush.bf16.msra.mxu0 %v2029
    %2620 = vmatpush.bf16.msra.mxu0 %v2025
    %2621 = vmatpush.bf16.msra.mxu0 %v2021
    %2622 = vmatpush.bf16.msra.mxu0 %v2017
    %2623 = vmatpush.bf16.msra.mxu0 %v2013
    %2624 = vmatpush.bf16.msra.mxu0 %v2009
    %2625 = vmatmul.bf16.gmra.mxu0 %v748
    %v2626 = vpop.f32.mrf.mxu0
    %v2627 = vadd.f32 %v2613, %v2626
    %v2628 = vpop.f32.mrf.mxu0
    %v2629 = vadd.f32 %v2615, %v2628
    %2630 = vdwg.mxu0
    %2631 = vmatpush.bf16.msra.mxu0 %v1814
    %2632 = vmatpush.bf16.msra.mxu0 %v1810
    %2633 = vmatpush.bf16.msra.mxu0 %v1806
    %2634 = vmatpush.bf16.msra.mxu0 %v1802
    %2635 = vmatpush.bf16.msra.mxu0 %v1798
    %2636 = vmatpush.bf16.msra.mxu0 %v1794
    %2637 = vmatpush.bf16.msra.mxu0 %v1790
    %2638 = vmatpush.bf16.msra.mxu0 %v1786
    %2639 = vmatmul.bf16.gmra.mxu0 %v741
    %v2640 = vpop.f32.mrf.mxu0
    %v2641 = vadd.f32 %v1010, %v2640
    %v2642 = vpop.f32.mrf.mxu0
    %v2643 = vadd.f32 %v1010, %v2642
    %2644 = vdwg.mxu0
    %2645 = vmatpush.bf16.msra.mxu0 %v1846
    %2646 = vmatpush.bf16.msra.mxu0 %v1842
    %2647 = vmatpush.bf16.msra.mxu0 %v1838
    %2648 = vmatpush.bf16.msra.mxu0 %v1834
    %2649 = vmatpush.bf16.msra.mxu0 %v1830
    %2650 = vmatpush.bf16.msra.mxu0 %v1826
    %2651 = vmatpush.bf16.msra.mxu0 %v1822
    %2652 = vmatpush.bf16.msra.mxu0 %v1818
    %2653 = vmatmul.bf16.gmra.mxu0 %v742
    %v2654 = vpop.f32.mrf.mxu0
    %v2655 = vadd.f32 %v2641, %v2654
    %v2656 = vpop.f32.mrf.mxu0
    %v2657 = vadd.f32 %v2643, %v2656
    %2658 = vdwg.mxu0
    %2659 = vmatpush.bf16.msra.mxu0 %v1878
    %2660 = vmatpush.bf16.msra.mxu0 %v1874
    %2661 = vmatpush.bf16.msra.mxu0 %v1870
    %2662 = vmatpush.bf16.msra.mxu0 %v1866
    %2663 = vmatpush.bf16.msra.mxu0 %v1862
    %2664 = vmatpush.bf16.msra.mxu0 %v1858
    %2665 = vmatpush.bf16.msra.mxu0 %v1854
    %2666 = vmatpush.bf16.msra.mxu0 %v1850
    %2667 = vmatmul.bf16.gmra.mxu0 %v743
    %v2668 = vpop.f32.mrf.mxu0
    %v2669 = vadd.f32 %v2655, %v2668
    %v2670 = vpop.f32.mrf.mxu0
    %v2671 = vadd.f32 %v2657, %v2670
    %2672 = vdwg.mxu0
    %2673 = vmatpush.bf16.msra.mxu0 %v1910
    %2674 = vmatpush.bf16.msra.mxu0 %v1906
    %2675 = vmatpush.bf16.msra.mxu0 %v1902
    %2676 = vmatpush.bf16.msra.mxu0 %v1898
    %2677 = vmatpush.bf16.msra.mxu0 %v1894
    %2678 = vmatpush.bf16.msra.mxu0 %v1890
    %2679 = vmatpush.bf16.msra.mxu0 %v1886
    %2680 = vmatpush.bf16.msra.mxu0 %v1882
    %2681 = vmatmul.bf16.gmra.mxu0 %v744
    %v2682 = vpop.f32.mrf.mxu0
    %v2683 = vadd.f32 %v2669, %v2682
    %v2684 = vpop.f32.mrf.mxu0
    %v2685 = vadd.f32 %v2671, %v2684
    %2686 = vdwg.mxu0
    %2687 = vmatpush.bf16.msra.mxu0 %v1942
    %2688 = vmatpush.bf16.msra.mxu0 %v1938
    %2689 = vmatpush.bf16.msra.mxu0 %v1934
    %2690 = vmatpush.bf16.msra.mxu0 %v1930
    %2691 = vmatpush.bf16.msra.mxu0 %v1926
    %2692 = vmatpush.bf16.msra.mxu0 %v1922
    %2693 = vmatpush.bf16.msra.mxu0 %v1918
    %2694 = vmatpush.bf16.msra.mxu0 %v1914
    %2695 = vmatmul.bf16.gmra.mxu0 %v745
    %v2696 = vpop.f32.mrf.mxu0
    %v2697 = vadd.f32 %v2683, %v2696
    %v2698 = vpop.f32.mrf.mxu0
    %v2699 = vadd.f32 %v2685, %v2698
    %2700 = vdwg.mxu0
    %2701 = vmatpush.bf16.msra.mxu0 %v1974
    %2702 = vmatpush.bf16.msra.mxu0 %v1970
    %2703 = vmatpush.bf16.msra.mxu0 %v1966
    %2704 = vmatpush.bf16.msra.mxu0 %v1962
    %2705 = vmatpush.bf16.msra.mxu0 %v1958
    %2706 = vmatpush.bf16.msra.mxu0 %v1954
    %2707 = vmatpush.bf16.msra.mxu0 %v1950
    %2708 = vmatpush.bf16.msra.mxu0 %v1946
    %2709 = vmatmul.bf16.gmra.mxu0 %v746
    %v2710 = vpop.f32.mrf.mxu0
    %v2711 = vadd.f32 %v2697, %v2710
    %v2712 = vpop.f32.mrf.mxu0
    %v2713 = vadd.f32 %v2699, %v2712
    %2714 = vdwg.mxu0
    %2715 = vmatpush.bf16.msra.mxu0 %v2006
    %2716 = vmatpush.bf16.msra.mxu0 %v2002
    %2717 = vmatpush.bf16.msra.mxu0 %v1998
    %2718 = vmatpush.bf16.msra.mxu0 %v1994
    %2719 = vmatpush.bf16.msra.mxu0 %v1990
    %2720 = vmatpush.bf16.msra.mxu0 %v1986
    %2721 = vmatpush.bf16.msra.mxu0 %v1982
    %2722 = vmatpush.bf16.msra.mxu0 %v1978
    %2723 = vmatmul.bf16.gmra.mxu0 %v747
    %v2724 = vpop.f32.mrf.mxu0
    %v2725 = vadd.f32 %v2711, %v2724
    %v2726 = vpop.f32.mrf.mxu0
    %v2727 = vadd.f32 %v2713, %v2726
    %2728 = vdwg.mxu0
    %2729 = vmatpush.bf16.msra.mxu0 %v2038
    %2730 = vmatpush.bf16.msra.mxu0 %v2034
    %2731 = vmatpush.bf16.msra.mxu0 %v2030
    %2732 = vmatpush.bf16.msra.mxu0 %v2026
    %2733 = vmatpush.bf16.msra.mxu0 %v2022
    %2734 = vmatpush.bf16.msra.mxu0 %v2018
    %2735 = vmatpush.bf16.msra.mxu0 %v2014
    %2736 = vmatpush.bf16.msra.mxu0 %v2010
    %2737 = vmatmul.bf16.gmra.mxu0 %v748
    %v2738 = vpop.f32.mrf.mxu0
    %v2739 = vadd.f32 %v2725, %v2738
    %v2740 = vpop.f32.mrf.mxu0
    %v2741 = vadd.f32 %v2727, %v2740
    %2742 = vdwg.mxu0
    %v2743 = vmax.f32 %v2403, 0.0
    %v2744 = vmax.f32 %v2515, 0.0
    %v2745 = vmax.f32 %v2627, 0.0
    %v2746 = vmax.f32 %v2739, 0.0
    %v2747 = vmax.f32 %v2405, 0.0
    %v2748 = vmax.f32 %v2517, 0.0
    %v2749 = vmax.f32 %v2629, 0.0
    %v2750 = vmax.f32 %v2741, 0.0
    %v2751 = vpack.c.bf16 %v2747, %v2743
    %v2752 = vpack.c.bf16 %v2748, %v2744
    %v2753 = vpack.c.bf16 %v2749, %v2745
    %v2754 = vpack.c.bf16 %v2750, %v2746
    %v2755 = vld [vmem:[#allocation8] sm:$0xff]
    %v2756 = vld [vmem:[#allocation8 + $0x8] sm:$0xff]
    %v2757 = vld [vmem:[#allocation8 + $0x10] sm:$0xff]
    %v2758 = vld [vmem:[#allocation8 + $0x18] sm:$0xff]
    %v2759 = vld [vmem:[#allocation8 + $0x20] sm:$0xff]
    %v2760 = vld [vmem:[#allocation8 + $0x28] sm:$0xff]
    %v2761 = vld [vmem:[#allocation8 + $0x30] sm:$0xff]
    %v2762 = vld [vmem:[#allocation8 + $0x38] sm:$0xff]
    %v2763 = vld [vmem:[#allocation8 + $0x40] sm:$0xff]
    %v2764 = vld [vmem:[#allocation8 + $0x48] sm:$0xff]
    %v2765 = vld [vmem:[#allocation8 + $0x50] sm:$0xff]
    %v2766 = vld [vmem:[#allocation8 + $0x58] sm:$0xff]
    %v2767 = vld [vmem:[#allocation8 + $0x60] sm:$0xff]
    %v2768 = vld [vmem:[#allocation8 + $0x68] sm:$0xff]
    %v2769 = vld [vmem:[#allocation8 + $0x70] sm:$0xff]
    %v2770 = vld [vmem:[#allocation8 + $0x78] sm:$0xff]
    %v2771 = vld [vmem:[#allocation8 + $0x80] sm:$0xff]
    %v2772 = vld [vmem:[#allocation8 + $0x88] sm:$0xff]
    %v2773 = vld [vmem:[#allocation8 + $0x90] sm:$0xff]
    %v2774 = vld [vmem:[#allocation8 + $0x98] sm:$0xff]
    %v2775 = vld [vmem:[#allocation8 + $0xa0] sm:$0xff]
    %v2776 = vld [vmem:[#allocation8 + $0xa8] sm:$0xff]
    %v2777 = vld [vmem:[#allocation8 + $0xb0] sm:$0xff]
    %v2778 = vld [vmem:[#allocation8 + $0xb8] sm:$0xff]
    %v2779 = vld [vmem:[#allocation8 + $0xc0] sm:$0xff]
    %v2780 = vld [vmem:[#allocation8 + $0xc8] sm:$0xff]
    %v2781 = vld [vmem:[#allocation8 + $0xd0] sm:$0xff]
    %v2782 = vld [vmem:[#allocation8 + $0xd8] sm:$0xff]
    %v2783 = vld [vmem:[#allocation8 + $0xe0] sm:$0xff]
    %v2784 = vld [vmem:[#allocation8 + $0xe8] sm:$0xff]
    %v2785 = vld [vmem:[#allocation8 + $0xf0] sm:$0xff]
    %v2786 = vld [vmem:[#allocation8 + $0xf8] sm:$0xff]
    %v2787 = vld [vmem:[#allocation8 + $0x100] sm:$0xff]
    %v2788 = vld [vmem:[#allocation8 + $0x108] sm:$0xff]
    %v2789 = vld [vmem:[#allocation8 + $0x110] sm:$0xff]
    %v2790 = vld [vmem:[#allocation8 + $0x118] sm:$0xff]
    %v2791 = vld [vmem:[#allocation8 + $0x120] sm:$0xff]
    %v2792 = vld [vmem:[#allocation8 + $0x128] sm:$0xff]
    %v2793 = vld [vmem:[#allocation8 + $0x130] sm:$0xff]
    %v2794 = vld [vmem:[#allocation8 + $0x138] sm:$0xff]
    %v2795 = vld [vmem:[#allocation8 + $0x140] sm:$0xff]
    %v2796 = vld [vmem:[#allocation8 + $0x148] sm:$0xff]
    %v2797 = vld [vmem:[#allocation8 + $0x150] sm:$0xff]
    %v2798 = vld [vmem:[#allocation8 + $0x158] sm:$0xff]
    %v2799 = vld [vmem:[#allocation8 + $0x160] sm:$0xff]
    %v2800 = vld [vmem:[#allocation8 + $0x168] sm:$0xff]
    %v2801 = vld [vmem:[#allocation8 + $0x170] sm:$0xff]
    %v2802 = vld [vmem:[#allocation8 + $0x178] sm:$0xff]
    %v2803 = vld [vmem:[#allocation8 + $0x180] sm:$0xff]
    %v2804 = vld [vmem:[#allocation8 + $0x188] sm:$0xff]
    %v2805 = vld [vmem:[#allocation8 + $0x190] sm:$0xff]
    %v2806 = vld [vmem:[#allocation8 + $0x198] sm:$0xff]
    %v2807 = vld [vmem:[#allocation8 + $0x1a0] sm:$0xff]
    %v2808 = vld [vmem:[#allocation8 + $0x1a8] sm:$0xff]
    %v2809 = vld [vmem:[#allocation8 + $0x1b0] sm:$0xff]
    %v2810 = vld [vmem:[#allocation8 + $0x1b8] sm:$0xff]
    %v2811 = vld [vmem:[#allocation8 + $0x1c0] sm:$0xff]
    %v2812 = vld [vmem:[#allocation8 + $0x1c8] sm:$0xff]
    %v2813 = vld [vmem:[#allocation8 + $0x1d0] sm:$0xff]
    %v2814 = vld [vmem:[#allocation8 + $0x1d8] sm:$0xff]
    %v2815 = vld [vmem:[#allocation8 + $0x1e0] sm:$0xff]
    %v2816 = vld [vmem:[#allocation8 + $0x1e8] sm:$0xff]
    %v2817 = vld [vmem:[#allocation8 + $0x1f0] sm:$0xff]
    %v2818 = vld [vmem:[#allocation8 + $0x1f8] sm:$0xff]
    %v2819 = vld [vmem:[%s10] sm:$0x3]
    %v2821 = vperm.slane %v2819, 0
    %v2822 = vperm.slane %v2819, 1
    %v2889 = vunpack.c.l.b16 %v2755
    %v2890 = vunpack.c.h.b16 %v2755
    %v2891 = vunpack.c.l.b16 %v2756
    %v2892 = vunpack.c.h.b16 %v2756
    %v2893 = vunpack.c.l.b16 %v2757
    %v2894 = vunpack.c.h.b16 %v2757
    %v2895 = vunpack.c.l.b16 %v2758
    %v2896 = vunpack.c.h.b16 %v2758
    %v2897 = vunpack.c.l.b16 %v2759
    %v2898 = vunpack.c.h.b16 %v2759
    %v2899 = vunpack.c.l.b16 %v2760
    %v2900 = vunpack.c.h.b16 %v2760
    %v2901 = vunpack.c.l.b16 %v2761
    %v2902 = vunpack.c.h.b16 %v2761
    %v2903 = vunpack.c.l.b16 %v2762
    %v2904 = vunpack.c.h.b16 %v2762
    %v2905 = vunpack.c.l.b16 %v2763
    %v2906 = vunpack.c.h.b16 %v2763
    %v2907 = vunpack.c.l.b16 %v2764
    %v2908 = vunpack.c.h.b16 %v2764
    %v2909 = vunpack.c.l.b16 %v2765
    %v2910 = vunpack.c.h.b16 %v2765
    %v2911 = vunpack.c.l.b16 %v2766
    %v2912 = vunpack.c.h.b16 %v2766
    %v2913 = vunpack.c.l.b16 %v2767
    %v2914 = vunpack.c.h.b16 %v2767
    %v2915 = vunpack.c.l.b16 %v2768
    %v2916 = vunpack.c.h.b16 %v2768
    %v2917 = vunpack.c.l.b16 %v2769
    %v2918 = vunpack.c.h.b16 %v2769
    %v2919 = vunpack.c.l.b16 %v2770
    %v2920 = vunpack.c.h.b16 %v2770
    %v2921 = vunpack.c.l.b16 %v2771
    %v2922 = vunpack.c.h.b16 %v2771
    %v2923 = vunpack.c.l.b16 %v2772
    %v2924 = vunpack.c.h.b16 %v2772
    %v2925 = vunpack.c.l.b16 %v2773
    %v2926 = vunpack.c.h.b16 %v2773
    %v2927 = vunpack.c.l.b16 %v2774
    %v2928 = vunpack.c.h.b16 %v2774
    %v2929 = vunpack.c.l.b16 %v2775
    %v2930 = vunpack.c.h.b16 %v2775
    %v2931 = vunpack.c.l.b16 %v2776
    %v2932 = vunpack.c.h.b16 %v2776
    %v2933 = vunpack.c.l.b16 %v2777
    %v2934 = vunpack.c.h.b16 %v2777
    %v2935 = vunpack.c.l.b16 %v2778
    %v2936 = vunpack.c.h.b16 %v2778
    %v2937 = vunpack.c.l.b16 %v2779
    %v2938 = vunpack.c.h.b16 %v2779
    %v2939 = vunpack.c.l.b16 %v2780
    %v2940 = vunpack.c.h.b16 %v2780
    %v2941 = vunpack.c.l.b16 %v2781
    %v2942 = vunpack.c.h.b16 %v2781
    %v2943 = vunpack.c.l.b16 %v2782
    %v2944 = vunpack.c.h.b16 %v2782
    %v2945 = vunpack.c.l.b16 %v2783
    %v2946 = vunpack.c.h.b16 %v2783
    %v2947 = vunpack.c.l.b16 %v2784
    %v2948 = vunpack.c.h.b16 %v2784
    %v2949 = vunpack.c.l.b16 %v2785
    %v2950 = vunpack.c.h.b16 %v2785
    %v2951 = vunpack.c.l.b16 %v2786
    %v2952 = vunpack.c.h.b16 %v2786
    %v2953 = vunpack.c.l.b16 %v2787
    %v2954 = vunpack.c.h.b16 %v2787
    %v2955 = vunpack.c.l.b16 %v2788
    %v2956 = vunpack.c.h.b16 %v2788
    %v2957 = vunpack.c.l.b16 %v2789
    %v2958 = vunpack.c.h.b16 %v2789
    %v2959 = vunpack.c.l.b16 %v2790
    %v2960 = vunpack.c.h.b16 %v2790
    %v2961 = vunpack.c.l.b16 %v2791
    %v2962 = vunpack.c.h.b16 %v2791
    %v2963 = vunpack.c.l.b16 %v2792
    %v2964 = vunpack.c.h.b16 %v2792
    %v2965 = vunpack.c.l.b16 %v2793
    %v2966 = vunpack.c.h.b16 %v2793
    %v2967 = vunpack.c.l.b16 %v2794
    %v2968 = vunpack.c.h.b16 %v2794
    %v2969 = vunpack.c.l.b16 %v2795
    %v2970 = vunpack.c.h.b16 %v2795
    %v2971 = vunpack.c.l.b16 %v2796
    %v2972 = vunpack.c.h.b16 %v2796
    %v2973 = vunpack.c.l.b16 %v2797
    %v2974 = vunpack.c.h.b16 %v2797
    %v2975 = vunpack.c.l.b16 %v2798
    %v2976 = vunpack.c.h.b16 %v2798
    %v2977 = vunpack.c.l.b16 %v2799
    %v2978 = vunpack.c.h.b16 %v2799
    %v2979 = vunpack.c.l.b16 %v2800
    %v2980 = vunpack.c.h.b16 %v2800
    %v2981 = vunpack.c.l.b16 %v2801
    %v2982 = vunpack.c.h.b16 %v2801
    %v2983 = vunpack.c.l.b16 %v2802
    %v2984 = vunpack.c.h.b16 %v2802
    %v2985 = vunpack.c.l.b16 %v2803
    %v2986 = vunpack.c.h.b16 %v2803
    %v2987 = vunpack.c.l.b16 %v2804
    %v2988 = vunpack.c.h.b16 %v2804
    %v2989 = vunpack.c.l.b16 %v2805
    %v2990 = vunpack.c.h.b16 %v2805
    %v2991 = vunpack.c.l.b16 %v2806
    %v2992 = vunpack.c.h.b16 %v2806
    %v2993 = vunpack.c.l.b16 %v2807
    %v2994 = vunpack.c.h.b16 %v2807
    %v2995 = vunpack.c.l.b16 %v2808
    %v2996 = vunpack.c.h.b16 %v2808
    %v2997 = vunpack.c.l.b16 %v2809
    %v2998 = vunpack.c.h.b16 %v2809
    %v2999 = vunpack.c.l.b16 %v2810
    %v3000 = vunpack.c.h.b16 %v2810
    %v3001 = vunpack.c.l.b16 %v2811
    %v3002 = vunpack.c.h.b16 %v2811
    %v3003 = vunpack.c.l.b16 %v2812
    %v3004 = vunpack.c.h.b16 %v2812
    %v3005 = vunpack.c.l.b16 %v2813
    %v3006 = vunpack.c.h.b16 %v2813
    %v3007 = vunpack.c.l.b16 %v2814
    %v3008 = vunpack.c.h.b16 %v2814
    %v3009 = vunpack.c.l.b16 %v2815
    %v3010 = vunpack.c.h.b16 %v2815
    %v3011 = vunpack.c.l.b16 %v2816
    %v3012 = vunpack.c.h.b16 %v2816
    %v3013 = vunpack.c.l.b16 %v2817
    %v3014 = vunpack.c.h.b16 %v2817
    %v3015 = vunpack.c.l.b16 %v2818
    %v3016 = vunpack.c.h.b16 %v2818
    %v3017 = vpack.c.b16 %v2891, %v2889
    %v3018 = vpack.c.b16 %v2892, %v2890
    %v3019 = vpack.c.b16 %v2895, %v2893
    %v3020 = vpack.c.b16 %v2896, %v2894
    %v3021 = vpack.c.b16 %v2899, %v2897
    %v3022 = vpack.c.b16 %v2900, %v2898
    %v3023 = vpack.c.b16 %v2903, %v2901
    %v3024 = vpack.c.b16 %v2904, %v2902
    %v3025 = vpack.c.b16 %v2907, %v2905
    %v3026 = vpack.c.b16 %v2908, %v2906
    %v3027 = vpack.c.b16 %v2911, %v2909
    %v3028 = vpack.c.b16 %v2912, %v2910
    %v3029 = vpack.c.b16 %v2915, %v2913
    %v3030 = vpack.c.b16 %v2916, %v2914
    %v3031 = vpack.c.b16 %v2919, %v2917
    %v3032 = vpack.c.b16 %v2920, %v2918
    %v3033 = vpack.c.b16 %v2923, %v2921
    %v3034 = vpack.c.b16 %v2924, %v2922
    %v3035 = vpack.c.b16 %v2927, %v2925
    %v3036 = vpack.c.b16 %v2928, %v2926
    %v3037 = vpack.c.b16 %v2931, %v2929
    %v3038 = vpack.c.b16 %v2932, %v2930
    %v3039 = vpack.c.b16 %v2935, %v2933
    %v3040 = vpack.c.b16 %v2936, %v2934
    %v3041 = vpack.c.b16 %v2939, %v2937
    %v3042 = vpack.c.b16 %v2940, %v2938
    %v3043 = vpack.c.b16 %v2943, %v2941
    %v3044 = vpack.c.b16 %v2944, %v2942
    %v3045 = vpack.c.b16 %v2947, %v2945
    %v3046 = vpack.c.b16 %v2948, %v2946
    %v3047 = vpack.c.b16 %v2951, %v2949
    %v3048 = vpack.c.b16 %v2952, %v2950
    %v3049 = vpack.c.b16 %v2955, %v2953
    %v3050 = vpack.c.b16 %v2956, %v2954
    %v3051 = vpack.c.b16 %v2959, %v2957
    %v3052 = vpack.c.b16 %v2960, %v2958
    %v3053 = vpack.c.b16 %v2963, %v2961
    %v3054 = vpack.c.b16 %v2964, %v2962
    %v3055 = vpack.c.b16 %v2967, %v2965
    %v3056 = vpack.c.b16 %v2968, %v2966
    %v3057 = vpack.c.b16 %v2971, %v2969
    %v3058 = vpack.c.b16 %v2972, %v2970
    %v3059 = vpack.c.b16 %v2975, %v2973
    %v3060 = vpack.c.b16 %v2976, %v2974
    %v3061 = vpack.c.b16 %v2979, %v2977
    %v3062 = vpack.c.b16 %v2980, %v2978
    %v3063 = vpack.c.b16 %v2983, %v2981
    %v3064 = vpack.c.b16 %v2984, %v2982
    %v3065 = vpack.c.b16 %v2987, %v2985
    %v3066 = vpack.c.b16 %v2988, %v2986
    %v3067 = vpack.c.b16 %v2991, %v2989
    %v3068 = vpack.c.b16 %v2992, %v2990
    %v3069 = vpack.c.b16 %v2995, %v2993
    %v3070 = vpack.c.b16 %v2996, %v2994
    %v3071 = vpack.c.b16 %v2999, %v2997
    %v3072 = vpack.c.b16 %v3000, %v2998
    %v3073 = vpack.c.b16 %v3003, %v3001
    %v3074 = vpack.c.b16 %v3004, %v3002
    %v3075 = vpack.c.b16 %v3007, %v3005
    %v3076 = vpack.c.b16 %v3008, %v3006
    %v3077 = vpack.c.b16 %v3011, %v3009
    %v3078 = vpack.c.b16 %v3012, %v3010
    %v3079 = vpack.c.b16 %v3015, %v3013
    %v3080 = vpack.c.b16 %v3016, %v3014
    %3145 = vmatpush.bf16.msra.mxu0 %v3031
    %3146 = vmatpush.bf16.msra.mxu0 %v3029
    %3147 = vmatpush.bf16.msra.mxu0 %v3027
    %3148 = vmatpush.bf16.msra.mxu0 %v3025
    %3149 = vmatpush.bf16.msra.mxu0 %v3023
    %3150 = vmatpush.bf16.msra.mxu0 %v3021
    %3151 = vmatpush.bf16.msra.mxu0 %v3019
    %3152 = vmatpush.bf16.msra.mxu0 %v3017
    %3153 = vmatmul.bf16.gmra.mxu0 %v2751
    %v3154 = vpop.f32.mrf.mxu0
    %v3155 = vadd.f32 %v2821, %v3154
    %v3156 = vpop.f32.mrf.mxu0
    %v3157 = vadd.f32 %v2821, %v3156
    %3158 = vdwg.mxu0
    %3159 = vmatpush.bf16.msra.mxu0 %v3047
    %3160 = vmatpush.bf16.msra.mxu0 %v3045
    %3161 = vmatpush.bf16.msra.mxu0 %v3043
    %3162 = vmatpush.bf16.msra.mxu0 %v3041
    %3163 = vmatpush.bf16.msra.mxu0 %v3039
    %3164 = vmatpush.bf16.msra.mxu0 %v3037
    %3165 = vmatpush.bf16.msra.mxu0 %v3035
    %3166 = vmatpush.bf16.msra.mxu0 %v3033
    %3167 = vmatmul.bf16.gmra.mxu0 %v2752
    %v3168 = vpop.f32.mrf.mxu0
    %v3169 = vadd.f32 %v3155, %v3168
    %v3170 = vpop.f32.mrf.mxu0
    %v3171 = vadd.f32 %v3157, %v3170
    %3172 = vdwg.mxu0
    %3173 = vmatpush.bf16.msra.mxu0 %v3063
    %3174 = vmatpush.bf16.msra.mxu0 %v3061
    %3175 = vmatpush.bf16.msra.mxu0 %v3059
    %3176 = vmatpush.bf16.msra.mxu0 %v3057
    %3177 = vmatpush.bf16.msra.mxu0 %v3055
    %3178 = vmatpush.bf16.msra.mxu0 %v3053
    %3179 = vmatpush.bf16.msra.mxu0 %v3051
    %3180 = vmatpush.bf16.msra.mxu0 %v3049
    %3181 = vmatmul.bf16.gmra.mxu0 %v2753
    %v3182 = vpop.f32.mrf.mxu0
    %v3183 = vadd.f32 %v3169, %v3182
    %v3184 = vpop.f32.mrf.mxu0
    %v3185 = vadd.f32 %v3171, %v3184
    %3186 = vdwg.mxu0
    %3187 = vmatpush.bf16.msra.mxu0 %v3079
    %3188 = vmatpush.bf16.msra.mxu0 %v3077
    %3189 = vmatpush.bf16.msra.mxu0 %v3075
    %3190 = vmatpush.bf16.msra.mxu0 %v3073
    %3191 = vmatpush.bf16.msra.mxu0 %v3071
    %3192 = vmatpush.bf16.msra.mxu0 %v3069
    %3193 = vmatpush.bf16.msra.mxu0 %v3067
    %3194 = vmatpush.bf16.msra.mxu0 %v3065
    %3195 = vmatmul.bf16.gmra.mxu0 %v2754
    %v3196 = vpop.f32.mrf.mxu0
    %v3197 = vadd.f32 %v3183, %v3196
    %v3198 = vpop.f32.mrf.mxu0
    %v3199 = vadd.f32 %v3185, %v3198
    %3200 = vdwg.mxu0
    %3201 = vmatpush.bf16.msra.mxu0 %v3032
    %3202 = vmatpush.bf16.msra.mxu0 %v3030
    %3203 = vmatpush.bf16.msra.mxu0 %v3028
    %3204 = vmatpush.bf16.msra.mxu0 %v3026
    %3205 = vmatpush.bf16.msra.mxu0 %v3024
    %3206 = vmatpush.bf16.msra.mxu0 %v3022
    %3207 = vmatpush.bf16.msra.mxu0 %v3020
    %3208 = vmatpush.bf16.msra.mxu0 %v3018
    %3209 = vmatmul.bf16.gmra.mxu0 %v2751
    %v3210 = vpop.f32.mrf.mxu0
    %v3211 = vadd.f32 %v2822, %v3210
    %v3212 = vpop.f32.mrf.mxu0
    %v3213 = vadd.f32 %v2822, %v3212
    %3214 = vdwg.mxu0
    %3215 = vmatpush.bf16.msra.mxu0 %v3048
    %3216 = vmatpush.bf16.msra.mxu0 %v3046
    %3217 = vmatpush.bf16.msra.mxu0 %v3044
    %3218 = vmatpush.bf16.msra.mxu0 %v3042
    %3219 = vmatpush.bf16.msra.mxu0 %v3040
    %3220 = vmatpush.bf16.msra.mxu0 %v3038
    %3221 = vmatpush.bf16.msra.mxu0 %v3036
    %3222 = vmatpush.bf16.msra.mxu0 %v3034
    %3223 = vmatmul.bf16.gmra.mxu0 %v2752
    %v3224 = vpop.f32.mrf.mxu0
    %v3225 = vadd.f32 %v3211, %v3224
    %v3226 = vpop.f32.mrf.mxu0
    %v3227 = vadd.f32 %v3213, %v3226
    %3228 = vdwg.mxu0
    %3229 = vmatpush.bf16.msra.mxu0 %v3064
    %3230 = vmatpush.bf16.msra.mxu0 %v3062
    %3231 = vmatpush.bf16.msra.mxu0 %v3060
    %3232 = vmatpush.bf16.msra.mxu0 %v3058
    %3233 = vmatpush.bf16.msra.mxu0 %v3056
    %3234 = vmatpush.bf16.msra.mxu0 %v3054
    %3235 = vmatpush.bf16.msra.mxu0 %v3052
    %3236 = vmatpush.bf16.msra.mxu0 %v3050
    %3237 = vmatmul.bf16.gmra.mxu0 %v2753
    %v3238 = vpop.f32.mrf.mxu0
    %v3239 = vadd.f32 %v3225, %v3238
    %v3240 = vpop.f32.mrf.mxu0
    %v3241 = vadd.f32 %v3227, %v3240
    %3242 = vdwg.mxu0
    %3243 = vmatpush.bf16.msra.mxu0 %v3080
    %3244 = vmatpush.bf16.msra.mxu0 %v3078
    %3245 = vmatpush.bf16.msra.mxu0 %v3076
    %3246 = vmatpush.bf16.msra.mxu0 %v3074
    %3247 = vmatpush.bf16.msra.mxu0 %v3072
    %3248 = vmatpush.bf16.msra.mxu0 %v3070
    %3249 = vmatpush.bf16.msra.mxu0 %v3068
    %3250 = vmatpush.bf16.msra.mxu0 %v3066
    %3251 = vmatmul.bf16.gmra.mxu0 %v2754
    %v3252 = vpop.f32.mrf.mxu0
    %v3253 = vadd.f32 %v3239, %v3252
    %v3254 = vpop.f32.mrf.mxu0
    %v3255 = vadd.f32 %v3241, %v3254
    %3256 = vdwg.mxu0
    %3257 = vst [vmem:[#allocation10] sm:$0xff] %v3197
    %3258 = vst [vmem:[#allocation10 + $0x8] sm:$0xff] %v3253
    %3259 = vst [vmem:[#allocation10 + $0x10] sm:$0xff] %v3199
    %3260 = vst [vmem:[#allocation10 + $0x18] sm:$0xff] %v3255
    // Predicated region
    $region62: #{tpu_custom_call.1} parent=1 // pred_check
      _
    $region63: #{tpu_custom_call.1} parent=1 // pred_check_branch
      %3262 = sbr.rel (0) target = $region65
    $region64: #{tpu_custom_call.1} parent=1 // pred_region
      %3264 = vsyncadd [#allocation4], 0
      %s3265 = sshll.u32 [#allocation10], 4
      %s3266 = int_to_ptr.vmem [resolvable:$true] %s3265
      %s3267 = sshll.u32 %s11, 4
      %s3268 = int_to_ptr.hbm [resolvable:$true] %s3267
      %3273 = dma.vmem_to_hbm [thread:$0]  %s3266, 512, %s3268, [#allocation4], 256, 256, 16
    $region65: #{tpu_custom_call.1} parent=1 // pred_fallthru
      _
    // Predicated region
    $region66: #{tpu_custom_call.1} parent=1 // pred_check
      _
    $region67: #{tpu_custom_call.1} parent=1 // pred_check_branch
      %3275 = sbr.rel (0) target = $region69
    $region68: #{tpu_custom_call.1} parent=1 // pred_region
      %3277 = dma.done [#allocation4], 512
    $region69: #{tpu_custom_call.1} parent=1 // pred_fallthru
      _
    %3278 = vsyncpa [#allocation3], 1
    %3279 = vsyncpa [#allocation6], 1
    %3280 = vsyncpa [#allocation9], 1
    %3281 = vsyncpa [#allocation4], 1

// kernel: tpu_custom_call.1
$region0: #{tpu_custom_call.1}
  #allocation0 [shape = 'u32[]', space=smem, size = 0x4, offset = 0x4, fixed_abs, tag = 'smem constant byte address 0x4 - core index']
  #allocation1 [shape = 'u32[72,128]{1,0:T(1,128)}', space=vmem, size = 0x9000, scoped, tag = 'internal scratch']
  %s0 = inlined_call_operand.vmem [shape: f32[16,3], index: 0, kind: input, shape index: {}]
  %s1 = inlined_call_operand.vmem [shape: f32[3,64], index: 1, kind: input, shape index: {}]
  %s2 = inlined_call_operand.vmem [shape: f32[1,64], index: 2, kind: input, shape index: {}]
  %s3 = inlined_call_operand.hbm [shape: bf16[64,128], index: 3, kind: input, shape index: {}]
  %s4 = inlined_call_operand.vmem [shape: f32[1,128], index: 4, kind: input, shape index: {}]
  %s5 = inlined_call_operand.hbm [shape: bf16[128,1024], index: 5, kind: input, shape index: {}]
  %s6 = inlined_call_operand.vmem [shape: f32[1,1024], index: 6, kind: input, shape index: {}]
  %s7 = inlined_call_operand.hbm [shape: bf16[1024,512], index: 7, kind: input, shape index: {}]
  %s8 = inlined_call_operand.vmem [shape: f32[1,512], index: 8, kind: input, shape index: {}]
  %s9 = inlined_call_operand.hbm [shape: bf16[512,256], index: 9, kind: input, shape index: {}]
  %s10 = inlined_call_operand.vmem [shape: f32[1,256], index: 10, kind: input, shape index: {}]
  %s11 = inlined_call_operand.hbm [shape: f32[16,256], index: 11, kind: output, shape index: {}]
  %s12 = sld [smem:[#allocation0]]
  $region70: #{tpu_custom_call.1} parent=0
    _
  %s14 = ssub.s32 1, %s12
  %s15 = scalar_select 0, %s14, %s12
  $region1: #{tpu_custom_call.1} parent=0
    #allocation2 [shape = 'u8[16384]{0}', space=vmem, size = 0x4000, scoped, tag = 'input window, operand 3, single buffered']
    #allocation3 [shape = 's32[1]{0}', space=sflag, size = 0x4, scoped, tag = 'scoped memory for tpu_custom_call.1']
    #allocation4 [shape = 's32[1]{0}', space=sflag, size = 0x4, scoped, tag = 'scoped memory for tpu_custom_call.1']
    #allocation5 [shape = 'u8[262144]{0}', space=vmem, size = 0x40000, scoped, tag = 'input window, operand 5, single buffered']
    #allocation6 [shape = 's32[1]{0}', space=sflag, size = 0x4, scoped, tag = 'scoped memory for tpu_custom_call.1']
    #allocation7 [shape = 'u8[1048576]{0}', space=vmem, size = 0x100000, scoped, tag = 'input window, operand 7, single buffered']
    #allocation8 [shape = 'u8[262144]{0}', space=vmem, size = 0x40000, scoped, tag = 'input window, operand 9, single buffered']
    #allocation9 [shape = 's32[1]{0}', space=sflag, size = 0x4, scoped, tag = 'scoped memory for tpu_custom_call.1']
    #allocation10 [shape = 'u8[16384]{0}', space=vmem, size = 0x4000, scoped, tag = 'output window, operand 0, single buffered']
    %16 = vsyncpa [#allocation3], 0
    %17 = vsyncpa [#allocation6], 0
    %18 = vsyncpa [#allocation9], 0
    %19 = vsyncpa [#allocation4], 0
    // Predicated region
    $region2: #{tpu_custom_call.1} parent=1 // pred_check
      _
    $region3: #{tpu_custom_call.1} parent=1 // pred_check_branch
      %21 = sbr.rel (0) target = $region5
    $region4: #{tpu_custom_call.1} parent=1 // pred_region
      _
    $region5: #{tpu_custom_call.1} parent=1 // pred_fallthru
      _
    // Predicated region
    $region6: #{tpu_custom_call.1} parent=1 // pred_check
      _
    $region7: #{tpu_custom_call.1} parent=1 // pred_check_branch
      %23 = sbr.rel (0) target = $region9
    $region8: #{tpu_custom_call.1} parent=1 // pred_region
      _
    $region9: #{tpu_custom_call.1} parent=1 // pred_fallthru
      _
    // Predicated region
    $region10: #{tpu_custom_call.1} parent=1 // pred_check
      _
    $region11: #{tpu_custom_call.1} parent=1 // pred_check_branch
      %25 = sbr.rel (0) target = $region13
    $region12: #{tpu_custom_call.1} parent=1 // pred_region
      _
    $region13: #{tpu_custom_call.1} parent=1 // pred_fallthru
      _
    // Predicated region
    $region14: #{tpu_custom_call.1} parent=1 // pred_check
      _
    $region15: #{tpu_custom_call.1} parent=1 // pred_check_branch
      %27 = sbr.rel (0) target = $region17
    $region16: #{tpu_custom_call.1} parent=1 // pred_region
      %29 = vsyncadd [#allocation3], 0
      %s30 = sshll.u32 %s3, 4
      %s31 = int_to_ptr.hbm [resolvable:$true] %s30
      %s32 = sshll.u32 [#allocation2], 4
      %s33 = int_to_ptr.vmem [resolvable:$true] %s32
      %38 = dma.hbm_to_vmem [thread:$0]  %s31, 512, %s33, [#allocation3], 64, 64, 4
    $region17: #{tpu_custom_call.1} parent=1 // pred_fallthru
      _
    // Predicated region
    $region18: #{tpu_custom_call.1} parent=1 // pred_check
      _
    $region19: #{tpu_custom_call.1} parent=1 // pred_check_branch
      %40 = sbr.rel (0) target = $region21
    $region20: #{tpu_custom_call.1} parent=1 // pred_region
      _
    $region21: #{tpu_custom_call.1} parent=1 // pred_fallthru
      _
    // Predicated region
    $region22: #{tpu_custom_call.1} parent=1 // pred_check
      _
    $region23: #{tpu_custom_call.1} parent=1 // pred_check_branch
      %42 = sbr.rel (0) target = $region25
    $region24: #{tpu_custom_call.1} parent=1 // pred_region
      %44 = vsyncadd [#allocation6], 0
      %s45 = sshll.u32 %s5, 4
      %s46 = int_to_ptr.hbm [resolvable:$true] %s45
      %s47 = sshll.u32 [#allocation5], 4
      %s48 = int_to_ptr.vmem [resolvable:$true] %s47
      %53 = dma.hbm_to_vmem [thread:$0]  %s46, 8192, %s48, [#allocation6], 512, 512, 32
    $region25: #{tpu_custom_call.1} parent=1 // pred_fallthru
      _
    // Predicated region
    $region26: #{tpu_custom_call.1} parent=1 // pred_check
      _
    $region27: #{tpu_custom_call.1} parent=1 // pred_check_branch
      %55 = sbr.rel (0) target = $region29
    $region28: #{tpu_custom_call.1} parent=1 // pred_region
      _
    $region29: #{tpu_custom_call.1} parent=1 // pred_fallthru
      _
    // Predicated region
    $region30: #{tpu_custom_call.1} parent=1 // pred_check
      _
    $region31: #{tpu_custom_call.1} parent=1 // pred_check_branch
      %57 = sbr.rel (0) target = $region33
    $region32: #{tpu_custom_call.1} parent=1 // pred_region
      %59 = vsyncadd [#allocation6], 0
      %s60 = sshll.u32 %s7, 4
      %s61 = int_to_ptr.hbm [resolvable:$true] %s60
      %s62 = sshll.u32 [#allocation7], 4
      %s63 = int_to_ptr.vmem [resolvable:$true] %s62
      %68 = dma.hbm_to_vmem [thread:$0]  %s61, 32768, %s63, [#allocation6], 256, 256, 16
    $region33: #{tpu_custom_call.1} parent=1 // pred_fallthru
      _
    // Predicated region
    $region34: #{tpu_custom_call.1} parent=1 // pred_check
      _
    $region35: #{tpu_custom_call.1} parent=1 // pred_check_branch
      %70 = sbr.rel (0) target = $region37
    $region36: #{tpu_custom_call.1} parent=1 // pred_region
      _
    $region37: #{tpu_custom_call.1} parent=1 // pred_fallthru
      _
    // Predicated region
    $region38: #{tpu_custom_call.1} parent=1 // pred_check
      _
    $region39: #{tpu_custom_call.1} parent=1 // pred_check_branch
      %72 = sbr.rel (0) target = $region41
    $region40: #{tpu_custom_call.1} parent=1 // pred_region
      %74 = vsyncadd [#allocation9], 0
      %s75 = sshll.u32 %s9, 4
      %s76 = int_to_ptr.hbm [resolvable:$true] %s75
      %s77 = sshll.u32 [#allocation8], 4
      %s78 = int_to_ptr.vmem [resolvable:$true] %s77
      %83 = dma.hbm_to_vmem [thread:$0]  %s76, 8192, %s78, [#allocation9], 128, 128, 8
    $region41: #{tpu_custom_call.1} parent=1 // pred_fallthru
      _
    // Predicated region
    $region42: #{tpu_custom_call.1} parent=1 // pred_check
      _
    $region43: #{tpu_custom_call.1} parent=1 // pred_check_branch
      %85 = sbr.rel (0) target = $region45
    $region44: #{tpu_custom_call.1} parent=1 // pred_region
      _
    $region45: #{tpu_custom_call.1} parent=1 // pred_fallthru
      _
    // Predicated region
    $region46: #{tpu_custom_call.1} parent=1 // pred_check
      _
    $region47: #{tpu_custom_call.1} parent=1 // pred_check_branch
      %87 = sbr.rel (0) target = $region49
    $region48: #{tpu_custom_call.1} parent=1 // pred_region
      %89 = dma.done [#allocation3], 512
    $region49: #{tpu_custom_call.1} parent=1 // pred_fallthru
      _
    // Predicated region
    $region50: #{tpu_custom_call.1} parent=1 // pred_check
      _
    $region51: #{tpu_custom_call.1} parent=1 // pred_check_branch
      %91 = sbr.rel (0) target = $region53
    $region52: #{tpu_custom_call.1} parent=1 // pred_region
      %93 = dma.done [#allocation6], 8192
    $region53: #{tpu_custom_call.1} parent=1 // pred_fallthru
      _
    // Predicated region
    $region54: #{tpu_custom_call.1} parent=1 // pred_check
      _
    $region55: #{tpu_custom_call.1} parent=1 // pred_check_branch
      %95 = sbr.rel (0) target = $region57
    $region56: #{tpu_custom_call.1} parent=1 // pred_region
      %97 = dma.done [#allocation6], 32768
    $region57: #{tpu_custom_call.1} parent=1 // pred_fallthru
      _
    // Predicated region
    $region58: #{tpu_custom_call.1} parent=1 // pred_check
      _
    $region59: #{tpu_custom_call.1} parent=1 // pred_check_branch
      %99 = sbr.rel (0) target = $region61
    $region60: #{tpu_custom_call.1} parent=1 // pred_region
      %101 = dma.done [#allocation9], 8192
    $region61: #{tpu_custom_call.1} parent=1 // pred_fallthru
      _
    %v103 = vld [vmem:[%s0] sm:$0xff]
    %v104 = vld [vmem:[%s0 + $0x8] sm:$0xff]
    %v105 = vld [vmem:[%s1] sm:$0x7]
    %107 = vset.pattern.permute.xlu0 0
    %108 = vperm.xlu0 %107, %v103
    %v109 = vpop.permute.xlu0 %108
    %112 = vset.pattern.permute.xlu0 0
    %113 = vperm.xlu0 %112, %v104
    %v114 = vpop.permute.xlu0 %113
    %v116 = vperm.slane %v105, 0
    %v117 = vmul.f32 %v109, %v116
    %v118 = vmul.f32 %v114, %v116
    %119 = vset.pattern.permute.xlu0 1
    %120 = vperm.xlu0 %119, %v103
    %v121 = vpop.permute.xlu0 %120
    %123 = vset.pattern.permute.xlu0 1
    %124 = vperm.xlu0 %123, %v104
    %v125 = vpop.permute.xlu0 %124
    %v127 = vperm.slane %v105, 1
    %v128 = vmul.f32 %v121, %v127
    %v129 = vmul.f32 %v125, %v127
    %v130 = vadd.f32 %v117, %v128
    %v131 = vadd.f32 %v118, %v129
    %132 = vset.pattern.permute.xlu0 2
    %133 = vperm.xlu0 %132, %v103
    %v134 = vpop.permute.xlu0 %133
    %136 = vset.pattern.permute.xlu0 2
    %137 = vperm.xlu0 %136, %v104
    %v138 = vpop.permute.xlu0 %137
    %v140 = vperm.slane %v105, 2
    %v141 = vmul.f32 %v134, %v140
    %v142 = vmul.f32 %v138, %v140
    %v143 = vadd.f32 %v130, %v141
    %v144 = vadd.f32 %v131, %v142
    %v145 = vld [vmem:[%s2] sm:$0x1]
    %v147 = vperm.slane %v145, 0
    %v149 = vadd.f32 %v143, %v147
    %v150 = vadd.f32 %v144, %v147
    %v151 = vmax.f32 %v149, 0.0
    %v152 = vmax.f32 %v150, 0.0
    %v153 = vpack.c.bf16 %v152, %v151
    %v154 = vld [vmem:[#allocation2] sm:$0xf]
    %v155 = vld [vmem:[#allocation2 + $0x4] sm:$0xf]
    %v156 = vld [vmem:[#allocation2 + $0x8] sm:$0xf]
    %v157 = vld [vmem:[#allocation2 + $0xc] sm:$0xf]
    %v158 = vld [vmem:[#allocation2 + $0x10] sm:$0xf]
    %v159 = vld [vmem:[#allocation2 + $0x14] sm:$0xf]
    %v160 = vld [vmem:[#allocation2 + $0x18] sm:$0xf]
    %v161 = vld [vmem:[#allocation2 + $0x1c] sm:$0xf]
    %v162 = vld [vmem:[%s4] sm:$0x1]
    %v164 = vperm.slane %v162, 0
    %v174 = vunpack.c.l.b16 %v154
    %v175 = vunpack.c.l.b16 %v155
    %v176 = vunpack.c.l.b16 %v156
    %v177 = vunpack.c.l.b16 %v157
    %v178 = vunpack.c.l.b16 %v158
    %v179 = vunpack.c.l.b16 %v159
    %v180 = vunpack.c.l.b16 %v160
    %v181 = vunpack.c.l.b16 %v161
    %v182 = vpack.c.b16 %v175, %v174
    %v183 = vpack.c.b16 %v177, %v176
    %v184 = vpack.c.b16 %v179, %v178
    %v185 = vpack.c.b16 %v181, %v180
    %vm190 = vcmask 523264
    %v192 = vsel %vm190, %v153, 0
    %194 = vmatpush.bf16.msra.mxu0 0
    %195 = vmatpush.bf16.msra.mxu0 0
    %196 = vmatpush.bf16.msra.mxu0 0
    %197 = vmatpush.bf16.msra.mxu0 0
    %198 = vmatpush.bf16.msra.mxu0 %v185
    %199 = vmatpush.bf16.msra.mxu0 %v184
    %200 = vmatpush.bf16.msra.mxu0 %v183
    %201 = vmatpush.bf16.msra.mxu0 %v182
    %202 = vmatmul.bf16.gmra.mxu0 %v192
    %v203 = vpop.f32.mrf.mxu0
    %v204 = vadd.f32 %v164, %v203
    %v205 = vpop.f32.mrf.mxu0
    %v206 = vadd.f32 %v164, %v205
    %207 = vdwg.mxu0
    %v208 = vmax.f32 %v204, 0.0
    %v209 = vmax.f32 %v206, 0.0
    %v210 = vpack.c.bf16 %v209, %v208
    %v211 = vld [vmem:[#allocation5] sm:$0xff]
    %v212 = vld [vmem:[#allocation5 + $0x8] sm:$0xff]
    %v213 = vld [vmem:[#allocation5 + $0x10] sm:$0xff]
    %v214 = vld [vmem:[#allocation5 + $0x18] sm:$0xff]
    %v215 = vld [vmem:[#allocation5 + $0x20] sm:$0xff]
    %v216 = vld [vmem:[#allocation5 + $0x28] sm:$0xff]
    %v217 = vld [vmem:[#allocation5 + $0x30] sm:$0xff]
    %v218 = vld [vmem:[#allocation5 + $0x38] sm:$0xff]
    %v219 = vld [vmem:[#allocation5 + $0x40] sm:$0xff]
    %v220 = vld [vmem:[#allocation5 + $0x48] sm:$0xff]
    %v221 = vld [vmem:[#allocation5 + $0x50] sm:$0xff]
    %v222 = vld [vmem:[#allocation5 + $0x58] sm:$0xff]
    %v223 = vld [vmem:[#allocation5 + $0x60] sm:$0xff]
    %v224 = vld [vmem:[#allocation5 + $0x68] sm:$0xff]
    %v225 = vld [vmem:[#allocation5 + $0x70] sm:$0xff]
    %v226 = vld [vmem:[#allocation5 + $0x78] sm:$0xff]
    %v227 = vld [vmem:[#allocation5 + $0x80] sm:$0xff]
    %v228 = vld [vmem:[#allocation5 + $0x88] sm:$0xff]
    %v229 = vld [vmem:[#allocation5 + $0x90] sm:$0xff]
    %v230 = vld [vmem:[#allocation5 + $0x98] sm:$0xff]
    %v231 = vld [vmem:[#allocation5 + $0xa0] sm:$0xff]
    %v232 = vld [vmem:[#allocation5 + $0xa8] sm:$0xff]
    %v233 = vld [vmem:[#allocation5 + $0xb0] sm:$0xff]
    %v234 = vld [vmem:[#allocation5 + $0xb8] sm:$0xff]
    %v235 = vld [vmem:[#allocation5 + $0xc0] sm:$0xff]
    %v236 = vld [vmem:[#allocation5 + $0xc8] sm:$0xff]
    %v237 = vld [vmem:[#allocation5 + $0xd0] sm:$0xff]
    %v238 = vld [vmem:[#allocation5 + $0xd8] sm:$0xff]
    %v239 = vld [vmem:[#allocation5 + $0xe0] sm:$0xff]
    %v240 = vld [vmem:[#allocation5 + $0xe8] sm:$0xff]
    %v241 = vld [vmem:[#allocation5 + $0xf0] sm:$0xff]
    %v242 = vld [vmem:[#allocation5 + $0xf8] sm:$0xff]
    %v243 = vld [vmem:[#allocation5 + $0x100] sm:$0xff]
    %v244 = vld [vmem:[#allocation5 + $0x108] sm:$0xff]
    %v245 = vld [vmem:[#allocation5 + $0x110] sm:$0xff]
    %v246 = vld [vmem:[#allocation5 + $0x118] sm:$0xff]
    %v247 = vld [vmem:[#allocation5 + $0x120] sm:$0xff]
    %v248 = vld [vmem:[#allocation5 + $0x128] sm:$0xff]
    %v249 = vld [vmem:[#allocation5 + $0x130] sm:$0xff]
    %v250 = vld [vmem:[#allocation5 + $0x138] sm:$0xff]
    %v251 = vld [vmem:[#allocation5 + $0x140] sm:$0xff]
    %v252 = vld [vmem:[#allocation5 + $0x148] sm:$0xff]
    %v253 = vld [vmem:[#allocation5 + $0x150] sm:$0xff]
    %v254 = vld [vmem:[#allocation5 + $0x158] sm:$0xff]
    %v255 = vld [vmem:[#allocation5 + $0x160] sm:$0xff]
    %v256 = vld [vmem:[#allocation5 + $0x168] sm:$0xff]
    %v257 = vld [vmem:[#allocation5 + $0x170] sm:$0xff]
    %v258 = vld [vmem:[#allocation5 + $0x178] sm:$0xff]
    %v259 = vld [vmem:[#allocation5 + $0x180] sm:$0xff]
    %v260 = vld [vmem:[#allocation5 + $0x188] sm:$0xff]
    %v261 = vld [vmem:[#allocation5 + $0x190] sm:$0xff]
    %v262 = vld [vmem:[#allocation5 + $0x198] sm:$0xff]
    %v263 = vld [vmem:[#allocation5 + $0x1a0] sm:$0xff]
    %v264 = vld [vmem:[#allocation5 + $0x1a8] sm:$0xff]
    %v265 = vld [vmem:[#allocation5 + $0x1b0] sm:$0xff]
    %v266 = vld [vmem:[#allocation5 + $0x1b8] sm:$0xff]
    %v267 = vld [vmem:[#allocation5 + $0x1c0] sm:$0xff]
    %v268 = vld [vmem:[#allocation5 + $0x1c8] sm:$0xff]
    %v269 = vld [vmem:[#allocation5 + $0x1d0] sm:$0xff]
    %v270 = vld [vmem:[#allocation5 + $0x1d8] sm:$0xff]
    %v271 = vld [vmem:[#allocation5 + $0x1e0] sm:$0xff]
    %v272 = vld [vmem:[#allocation5 + $0x1e8] sm:$0xff]
    %v273 = vld [vmem:[#allocation5 + $0x1f0] sm:$0xff]
    %v274 = vld [vmem:[#allocation5 + $0x1f8] sm:$0xff]
    %v275 = vld [vmem:[%s6] sm:$0xff]
    %v277 = vperm.slane %v275, 0
    %v278 = vperm.slane %v275, 1
    %v279 = vperm.slane %v275, 2
    %v280 = vperm.slane %v275, 3
    %v281 = vperm.slane %v275, 4
    %v282 = vperm.slane %v275, 5
    %v283 = vperm.slane %v275, 6
    %v284 = vperm.slane %v275, 7
    %v357 = vunpack.c.l.b16 %v211
    %v358 = vunpack.c.h.b16 %v211
    %v359 = vunpack.c.l.b16 %v212
    %v360 = vunpack.c.h.b16 %v212
    %v361 = vunpack.c.l.b16 %v213
    %v362 = vunpack.c.h.b16 %v213
    %v363 = vunpack.c.l.b16 %v214
    %v364 = vunpack.c.h.b16 %v214
    %v365 = vunpack.c.l.b16 %v215
    %v366 = vunpack.c.h.b16 %v215
    %v367 = vunpack.c.l.b16 %v216
    %v368 = vunpack.c.h.b16 %v216
    %v369 = vunpack.c.l.b16 %v217
    %v370 = vunpack.c.h.b16 %v217
    %v371 = vunpack.c.l.b16 %v218
    %v372 = vunpack.c.h.b16 %v218
    %v373 = vunpack.c.l.b16 %v219
    %v374 = vunpack.c.h.b16 %v219
    %v375 = vunpack.c.l.b16 %v220
    %v376 = vunpack.c.h.b16 %v220
    %v377 = vunpack.c.l.b16 %v221
    %v378 = vunpack.c.h.b16 %v221
    %v379 = vunpack.c.l.b16 %v222
    %v380 = vunpack.c.h.b16 %v222
    %v381 = vunpack.c.l.b16 %v223
    %v382 = vunpack.c.h.b16 %v223
    %v383 = vunpack.c.l.b16 %v224
    %v384 = vunpack.c.h.b16 %v224
    %v385 = vunpack.c.l.b16 %v225
    %v386 = vunpack.c.h.b16 %v225
    %v387 = vunpack.c.l.b16 %v226
    %v388 = vunpack.c.h.b16 %v226
    %v389 = vunpack.c.l.b16 %v227
    %v390 = vunpack.c.h.b16 %v227
    %v391 = vunpack.c.l.b16 %v228
    %v392 = vunpack.c.h.b16 %v228
    %v393 = vunpack.c.l.b16 %v229
    %v394 = vunpack.c.h.b16 %v229
    %v395 = vunpack.c.l.b16 %v230
    %v396 = vunpack.c.h.b16 %v230
    %v397 = vunpack.c.l.b16 %v231
    %v398 = vunpack.c.h.b16 %v231
    %v399 = vunpack.c.l.b16 %v232
    %v400 = vunpack.c.h.b16 %v232
    %v401 = vunpack.c.l.b16 %v233
    %v402 = vunpack.c.h.b16 %v233
    %v403 = vunpack.c.l.b16 %v234
    %v404 = vunpack.c.h.b16 %v234
    %v405 = vunpack.c.l.b16 %v235
    %v406 = vunpack.c.h.b16 %v235
    %v407 = vunpack.c.l.b16 %v236
    %v408 = vunpack.c.h.b16 %v236
    %v409 = vunpack.c.l.b16 %v237
    %v410 = vunpack.c.h.b16 %v237
    %v411 = vunpack.c.l.b16 %v238
    %v412 = vunpack.c.h.b16 %v238
    %v413 = vunpack.c.l.b16 %v239
    %v414 = vunpack.c.h.b16 %v239
    %v415 = vunpack.c.l.b16 %v240
    %v416 = vunpack.c.h.b16 %v240
    %v417 = vunpack.c.l.b16 %v241
    %v418 = vunpack.c.h.b16 %v241
    %v419 = vunpack.c.l.b16 %v242
    %v420 = vunpack.c.h.b16 %v242
    %v421 = vunpack.c.l.b16 %v243
    %v422 = vunpack.c.h.b16 %v243
    %v423 = vunpack.c.l.b16 %v244
    %v424 = vunpack.c.h.b16 %v244
    %v425 = vunpack.c.l.b16 %v245
    %v426 = vunpack.c.h.b16 %v245
    %v427 = vunpack.c.l.b16 %v246
    %v428 = vunpack.c.h.b16 %v246
    %v429 = vunpack.c.l.b16 %v247
    %v430 = vunpack.c.h.b16 %v247
    %v431 = vunpack.c.l.b16 %v248
    %v432 = vunpack.c.h.b16 %v248
    %v433 = vunpack.c.l.b16 %v249
    %v434 = vunpack.c.h.b16 %v249
    %v435 = vunpack.c.l.b16 %v250
    %v436 = vunpack.c.h.b16 %v250
    %v437 = vunpack.c.l.b16 %v251
    %v438 = vunpack.c.h.b16 %v251
    %v439 = vunpack.c.l.b16 %v252
    %v440 = vunpack.c.h.b16 %v252
    %v441 = vunpack.c.l.b16 %v253
    %v442 = vunpack.c.h.b16 %v253
    %v443 = vunpack.c.l.b16 %v254
    %v444 = vunpack.c.h.b16 %v254
    %v445 = vunpack.c.l.b16 %v255
    %v446 = vunpack.c.h.b16 %v255
    %v447 = vunpack.c.l.b16 %v256
    %v448 = vunpack.c.h.b16 %v256
    %v449 = vunpack.c.l.b16 %v257
    %v450 = vunpack.c.h.b16 %v257
    %v451 = vunpack.c.l.b16 %v258
    %v452 = vunpack.c.h.b16 %v258
    %v453 = vunpack.c.l.b16 %v259
    %v454 = vunpack.c.h.b16 %v259
    %v455 = vunpack.c.l.b16 %v260
    %v456 = vunpack.c.h.b16 %v260
    %v457 = vunpack.c.l.b16 %v261
    %v458 = vunpack.c.h.b16 %v261
    %v459 = vunpack.c.l.b16 %v262
    %v460 = vunpack.c.h.b16 %v262
    %v461 = vunpack.c.l.b16 %v263
    %v462 = vunpack.c.h.b16 %v263
    %v463 = vunpack.c.l.b16 %v264
    %v464 = vunpack.c.h.b16 %v264
    %v465 = vunpack.c.l.b16 %v265
    %v466 = vunpack.c.h.b16 %v265
    %v467 = vunpack.c.l.b16 %v266
    %v468 = vunpack.c.h.b16 %v266
    %v469 = vunpack.c.l.b16 %v267
    %v470 = vunpack.c.h.b16 %v267
    %v471 = vunpack.c.l.b16 %v268
    %v472 = vunpack.c.h.b16 %v268
    %v473 = vunpack.c.l.b16 %v269
    %v474 = vunpack.c.h.b16 %v269
    %v475 = vunpack.c.l.b16 %v270
    %v476 = vunpack.c.h.b16 %v270
    %v477 = vunpack.c.l.b16 %v271
    %v478 = vunpack.c.h.b16 %v271
    %v479 = vunpack.c.l.b16 %v272
    %v480 = vunpack.c.h.b16 %v272
    %v481 = vunpack.c.l.b16 %v273
    %v482 = vunpack.c.h.b16 %v273
    %v483 = vunpack.c.l.b16 %v274
    %v484 = vunpack.c.h.b16 %v274
    %v485 = vpack.c.b16 %v365, %v357
    %v486 = vpack.c.b16 %v366, %v358
    %v487 = vpack.c.b16 %v367, %v359
    %v488 = vpack.c.b16 %v368, %v360
    %v489 = vpack.c.b16 %v369, %v361
    %v490 = vpack.c.b16 %v370, %v362
    %v491 = vpack.c.b16 %v371, %v363
    %v492 = vpack.c.b16 %v372, %v364
    %v493 = vpack.c.b16 %v381, %v373
    %v494 = vpack.c.b16 %v382, %v374
    %v495 = vpack.c.b16 %v383, %v375
    %v496 = vpack.c.b16 %v384, %v376
    %v497 = vpack.c.b16 %v385, %v377
    %v498 = vpack.c.b16 %v386, %v378
    %v499 = vpack.c.b16 %v387, %v379
    %v500 = vpack.c.b16 %v388, %v380
    %v501 = vpack.c.b16 %v397, %v389
    %v502 = vpack.c.b16 %v398, %v390
    %v503 = vpack.c.b16 %v399, %v391
    %v504 = vpack.c.b16 %v400, %v392
    %v505 = vpack.c.b16 %v401, %v393
    %v506 = vpack.c.b16 %v402, %v394
    %v507 = vpack.c.b16 %v403, %v395
    %v508 = vpack.c.b16 %v404, %v396
    %v509 = vpack.c.b16 %v413, %v405
    %v510 = vpack.c.b16 %v414, %v406
    %v511 = vpack.c.b16 %v415, %v407
    %v512 = vpack.c.b16 %v416, %v408
    %v513 = vpack.c.b16 %v417, %v409
    %v514 = vpack.c.b16 %v418, %v410
    %v515 = vpack.c.b16 %v419, %v411
    %v516 = vpack.c.b16 %v420, %v412
    %v517 = vpack.c.b16 %v429, %v421
    %v518 = vpack.c.b16 %v430, %v422
    %v519 = vpack.c.b16 %v431, %v423
    %v520 = vpack.c.b16 %v432, %v424
    %v521 = vpack.c.b16 %v433, %v425
    %v522 = vpack.c.b16 %v434, %v426
    %v523 = vpack.c.b16 %v435, %v427
    %v524 = vpack.c.b16 %v436, %v428
    %v525 = vpack.c.b16 %v445, %v437
    %v526 = vpack.c.b16 %v446, %v438
    %v527 = vpack.c.b16 %v447, %v439
    %v528 = vpack.c.b16 %v448, %v440
    %v529 = vpack.c.b16 %v449, %v441
    %v530 = vpack.c.b16 %v450, %v442
    %v531 = vpack.c.b16 %v451, %v443
    %v532 = vpack.c.b16 %v452, %v444
    %v533 = vpack.c.b16 %v461, %v453
    %v534 = vpack.c.b16 %v462, %v454
    %v535 = vpack.c.b16 %v463, %v455
    %v536 = vpack.c.b16 %v464, %v456
    %v537 = vpack.c.b16 %v465, %v457
    %v538 = vpack.c.b16 %v466, %v458
    %v539 = vpack.c.b16 %v467, %v459
    %v540 = vpack.c.b16 %v468, %v460
    %v541 = vpack.c.b16 %v477, %v469
    %v542 = vpack.c.b16 %v478, %v470
    %v543 = vpack.c.b16 %v479, %v471
    %v544 = vpack.c.b16 %v480, %v472
    %v545 = vpack.c.b16 %v481, %v473
    %v546 = vpack.c.b16 %v482, %v474
    %v547 = vpack.c.b16 %v483, %v475
    %v548 = vpack.c.b16 %v484, %v476
    %613 = vmatpush.bf16.msra.mxu0 %v541
    %614 = vmatpush.bf16.msra.mxu0 %v533
    %615 = vmatpush.bf16.msra.mxu0 %v525
    %616 = vmatpush.bf16.msra.mxu0 %v517
    %617 = vmatpush.bf16.msra.mxu0 %v509
    %618 = vmatpush.bf16.msra.mxu0 %v501
    %619 = vmatpush.bf16.msra.mxu0 %v493
    %620 = vmatpush.bf16.msra.mxu0 %v485
    %621 = vmatmul.bf16.gmra.mxu0 %v210
    %v622 = vpop.f32.mrf.mxu0
    %v623 = vadd.f32 %v277, %v622
    %v624 = vpop.f32.mrf.mxu0
    %v625 = vadd.f32 %v277, %v624
    %626 = vdwg.mxu0
    %627 = vmatpush.bf16.msra.mxu0 %v542
    %628 = vmatpush.bf16.msra.mxu0 %v534
    %629 = vmatpush.bf16.msra.mxu0 %v526
    %630 = vmatpush.bf16.msra.mxu0 %v518
    %631 = vmatpush.bf16.msra.mxu0 %v510
    %632 = vmatpush.bf16.msra.mxu0 %v502
    %633 = vmatpush.bf16.msra.mxu0 %v494
    %634 = vmatpush.bf16.msra.mxu0 %v486
    %635 = vmatmul.bf16.gmra.mxu0 %v210
    %v636 = vpop.f32.mrf.mxu0
    %v637 = vadd.f32 %v278, %v636
    %v638 = vpop.f32.mrf.mxu0
    %v639 = vadd.f32 %v278, %v638
    %640 = vdwg.mxu0
    %641 = vmatpush.bf16.msra.mxu0 %v543
    %642 = vmatpush.bf16.msra.mxu0 %v535
    %643 = vmatpush.bf16.msra.mxu0 %v527
    %644 = vmatpush.bf16.msra.mxu0 %v519
    %645 = vmatpush.bf16.msra.mxu0 %v511
    %646 = vmatpush.bf16.msra.mxu0 %v503
    %647 = vmatpush.bf16.msra.mxu0 %v495
    %648 = vmatpush.bf16.msra.mxu0 %v487
    %649 = vmatmul.bf16.gmra.mxu0 %v210
    %v650 = vpop.f32.mrf.mxu0
    %v651 = vadd.f32 %v279, %v650
    %v652 = vpop.f32.mrf.mxu0
    %v653 = vadd.f32 %v279, %v652
    %654 = vdwg.mxu0
    %655 = vmatpush.bf16.msra.mxu0 %v544
    %656 = vmatpush.bf16.msra.mxu0 %v536
    %657 = vmatpush.bf16.msra.mxu0 %v528
    %658 = vmatpush.bf16.msra.mxu0 %v520
    %659 = vmatpush.bf16.msra.mxu0 %v512
    %660 = vmatpush.bf16.msra.mxu0 %v504
    %661 = vmatpush.bf16.msra.mxu0 %v496
    %662 = vmatpush.bf16.msra.mxu0 %v488
    %663 = vmatmul.bf16.gmra.mxu0 %v210
    %v664 = vpop.f32.mrf.mxu0
    %v665 = vadd.f32 %v280, %v664
    %v666 = vpop.f32.mrf.mxu0
    %v667 = vadd.f32 %v280, %v666
    %668 = vdwg.mxu0
    %669 = vmatpush.bf16.msra.mxu0 %v545
    %670 = vmatpush.bf16.msra.mxu0 %v537
    %671 = vmatpush.bf16.msra.mxu0 %v529
    %672 = vmatpush.bf16.msra.mxu0 %v521
    %673 = vmatpush.bf16.msra.mxu0 %v513
    %674 = vmatpush.bf16.msra.mxu0 %v505
    %675 = vmatpush.bf16.msra.mxu0 %v497
    %676 = vmatpush.bf16.msra.mxu0 %v489
    %677 = vmatmul.bf16.gmra.mxu0 %v210
    %v678 = vpop.f32.mrf.mxu0
    %v679 = vadd.f32 %v281, %v678
    %v680 = vpop.f32.mrf.mxu0
    %v681 = vadd.f32 %v281, %v680
    %682 = vdwg.mxu0
    %683 = vmatpush.bf16.msra.mxu0 %v546
    %684 = vmatpush.bf16.msra.mxu0 %v538
    %685 = vmatpush.bf16.msra.mxu0 %v530
    %686 = vmatpush.bf16.msra.mxu0 %v522
    %687 = vmatpush.bf16.msra.mxu0 %v514
    %688 = vmatpush.bf16.msra.mxu0 %v506
    %689 = vmatpush.bf16.msra.mxu0 %v498
    %690 = vmatpush.bf16.msra.mxu0 %v490
    %691 = vmatmul.bf16.gmra.mxu0 %v210
    %v692 = vpop.f32.mrf.mxu0
    %v693 = vadd.f32 %v282, %v692
    %v694 = vpop.f32.mrf.mxu0
    %v695 = vadd.f32 %v282, %v694
    %696 = vdwg.mxu0
    %697 = vmatpush.bf16.msra.mxu0 %v547
    %698 = vmatpush.bf16.msra.mxu0 %v539
    %699 = vmatpush.bf16.msra.mxu0 %v531
    %700 = vmatpush.bf16.msra.mxu0 %v523
    %701 = vmatpush.bf16.msra.mxu0 %v515
    %702 = vmatpush.bf16.msra.mxu0 %v507
    %703 = vmatpush.bf16.msra.mxu0 %v499
    %704 = vmatpush.bf16.msra.mxu0 %v491
    %705 = vmatmul.bf16.gmra.mxu0 %v210
    %v706 = vpop.f32.mrf.mxu0
    %v707 = vadd.f32 %v283, %v706
    %v708 = vpop.f32.mrf.mxu0
    %v709 = vadd.f32 %v283, %v708
    %710 = vdwg.mxu0
    %711 = vmatpush.bf16.msra.mxu0 %v548
    %712 = vmatpush.bf16.msra.mxu0 %v540
    %713 = vmatpush.bf16.msra.mxu0 %v532
    %714 = vmatpush.bf16.msra.mxu0 %v524
    %715 = vmatpush.bf16.msra.mxu0 %v516
    %716 = vmatpush.bf16.msra.mxu0 %v508
    %717 = vmatpush.bf16.msra.mxu0 %v500
    %718 = vmatpush.bf16.msra.mxu0 %v492
    %719 = vmatmul.bf16.gmra.mxu0 %v210
    %v720 = vpop.f32.mrf.mxu0
    %v721 = vadd.f32 %v284, %v720
    %v722 = vpop.f32.mrf.mxu0
    %v723 = vadd.f32 %v284, %v722
    %724 = vdwg.mxu0
    %v725 = vmax.f32 %v623, 0.0
    %v726 = vmax.f32 %v637, 0.0
    %v727 = vmax.f32 %v651, 0.0
    %v728 = vmax.f32 %v665, 0.0
    %v729 = vmax.f32 %v679, 0.0
    %v730 = vmax.f32 %v693, 0.0
    %v731 = vmax.f32 %v707, 0.0
    %v732 = vmax.f32 %v721, 0.0
    %v733 = vmax.f32 %v625, 0.0
    %v734 = vmax.f32 %v639, 0.0
    %v735 = vmax.f32 %v653, 0.0
    %v736 = vmax.f32 %v667, 0.0
    %v737 = vmax.f32 %v681, 0.0
    %v738 = vmax.f32 %v695, 0.0
    %v739 = vmax.f32 %v709, 0.0
    %v740 = vmax.f32 %v723, 0.0
    %v741 = vpack.c.bf16 %v733, %v725
    %v742 = vpack.c.bf16 %v734, %v726
    %v743 = vpack.c.bf16 %v735, %v727
    %v744 = vpack.c.bf16 %v736, %v728
    %v745 = vpack.c.bf16 %v737, %v729
    %v746 = vpack.c.bf16 %v738, %v730
    %v747 = vpack.c.bf16 %v739, %v731
    %v748 = vpack.c.bf16 %v740, %v732
    %v749 = vld [vmem:[#allocation7] sm:$0xff]
    %v750 = vld [vmem:[#allocation7 + $0x8] sm:$0xff]
    %v751 = vld [vmem:[#allocation7 + $0x10] sm:$0xff]
    %v752 = vld [vmem:[#allocation7 + $0x18] sm:$0xff]
    %v753 = vld [vmem:[#allocation7 + $0x20] sm:$0xff]
    %v754 = vld [vmem:[#allocation7 + $0x28] sm:$0xff]
    %v755 = vld [vmem:[#allocation7 + $0x30] sm:$0xff]
    %v756 = vld [vmem:[#allocation7 + $0x38] sm:$0xff]
    %v757 = vld [vmem:[#allocation7 + $0x40] sm:$0xff]
    %v758 = vld [vmem:[#allocation7 + $0x48] sm:$0xff]
    %v759 = vld [vmem:[#allocation7 + $0x50] sm:$0xff]
    %v760 = vld [vmem:[#allocation7 + $0x58] sm:$0xff]
    %v761 = vld [vmem:[#allocation7 + $0x60] sm:$0xff]
    %v762 = vld [vmem:[#allocation7 + $0x68] sm:$0xff]
    %v763 = vld [vmem:[#allocation7 + $0x70] sm:$0xff]
    %v764 = vld [vmem:[#allocation7 + $0x78] sm:$0xff]
    %v765 = vld [vmem:[#allocation7 + $0x80] sm:$0xff]
    %v766 = vld [vmem:[#allocation7 + $0x88] sm:$0xff]
    %v767 = vld [vmem:[#allocation7 + $0x90] sm:$0xff]
    %v768 = vld [vmem:[#allocation7 + $0x98] sm:$0xff]
    %v769 = vld [vmem:[#allocation7 + $0xa0] sm:$0xff]
    %v770 = vld [vmem:[#allocation7 + $0xa8] sm:$0xff]
    %v771 = vld [vmem:[#allocation7 + $0xb0] sm:$0xff]
    %v772 = vld [vmem:[#allocation7 + $0xb8] sm:$0xff]
    %v773 = vld [vmem:[#allocation7 + $0xc0] sm:$0xff]
    %v774 = vld [vmem:[#allocation7 + $0xc8] sm:$0xff]
    %v775 = vld [vmem:[#allocation7 + $0xd0] sm:$0xff]
    %v776 = vld [vmem:[#allocation7 + $0xd8] sm:$0xff]
    %v777 = vld [vmem:[#allocation7 + $0xe0] sm:$0xff]
    %v778 = vld [vmem:[#allocation7 + $0xe8] sm:$0xff]
    %v779 = vld [vmem:[#allocation7 + $0xf0] sm:$0xff]
    %v780 = vld [vmem:[#allocation7 + $0xf8] sm:$0xff]
    %v781 = vld [vmem:[#allocation7 + $0x100] sm:$0xff]
    %v782 = vld [vmem:[#allocation7 + $0x108] sm:$0xff]
    %v783 = vld [vmem:[#allocation7 + $0x110] sm:$0xff]
    %v784 = vld [vmem:[#allocation7 + $0x118] sm:$0xff]
    %v785 = vld [vmem:[#allocation7 + $0x120] sm:$0xff]
    %v786 = vld [vmem:[#allocation7 + $0x128] sm:$0xff]
    %v787 = vld [vmem:[#allocation7 + $0x130] sm:$0xff]
    %v788 = vld [vmem:[#allocation7 + $0x138] sm:$0xff]
    %v789 = vld [vmem:[#allocation7 + $0x140] sm:$0xff]
    %v790 = vld [vmem:[#allocation7 + $0x148] sm:$0xff]
    %v791 = vld [vmem:[#allocation7 + $0x150] sm:$0xff]
    %v792 = vld [vmem:[#allocation7 + $0x158] sm:$0xff]
    %v793 = vld [vmem:[#allocation7 + $0x160] sm:$0xff]
    %v794 = vld [vmem:[#allocation7 + $0x168] sm:$0xff]
    %v795 = vld [vmem:[#allocation7 + $0x170] sm:$0xff]
    %v796 = vld [vmem:[#allocation7 + $0x178] sm:$0xff]
    %v797 = vld [vmem:[#allocation7 + $0x180] sm:$0xff]
    %v798 = vld [vmem:[#allocation7 + $0x188] sm:$0xff]
    %v799 = vld [vmem:[#allocation7 + $0x190] sm:$0xff]
    %v800 = vld [vmem:[#allocation7 + $0x198] sm:$0xff]
    %v801 = vld [vmem:[#allocation7 + $0x1a0] sm:$0xff]
    %v802 = vld [vmem:[#allocation7 + $0x1a8] sm:$0xff]
    %v803 = vld [vmem:[#allocation7 + $0x1b0] sm:$0xff]
    %v804 = vld [vmem:[#allocation7 + $0x1b8] sm:$0xff]
    %v805 = vld [vmem:[#allocation7 + $0x1c0] sm:$0xff]
    %v806 = vld [vmem:[#allocation7 + $0x1c8] sm:$0xff]
    %v807 = vld [vmem:[#allocation7 + $0x1d0] sm:$0xff]
    %v808 = vld [vmem:[#allocation7 + $0x1d8] sm:$0xff]
    %v809 = vld [vmem:[#allocation7 + $0x1e0] sm:$0xff]
    %v810 = vld [vmem:[#allocation7 + $0x1e8] sm:$0xff]
    %v811 = vld [vmem:[#allocation7 + $0x1f0] sm:$0xff]
    %v812 = vld [vmem:[#allocation7 + $0x1f8] sm:$0xff]
    %v813 = vld [vmem:[#allocation7 + $0x200] sm:$0xff]
    %v814 = vld [vmem:[#allocation7 + $0x208] sm:$0xff]
    %v815 = vld [vmem:[#allocation7 + $0x210] sm:$0xff]
    %v816 = vld [vmem:[#allocation7 + $0x218] sm:$0xff]
    %v817 = vld [vmem:[#allocation7 + $0x220] sm:$0xff]
    %v818 = vld [vmem:[#allocation7 + $0x228] sm:$0xff]
    %v819 = vld [vmem:[#allocation7 + $0x230] sm:$0xff]
    %v820 = vld [vmem:[#allocation7 + $0x238] sm:$0xff]
    %v821 = vld [vmem:[#allocation7 + $0x240] sm:$0xff]
    %v822 = vld [vmem:[#allocation7 + $0x248] sm:$0xff]
    %v823 = vld [vmem:[#allocation7 + $0x250] sm:$0xff]
    %v824 = vld [vmem:[#allocation7 + $0x258] sm:$0xff]
    %v825 = vld [vmem:[#allocation7 + $0x260] sm:$0xff]
    %v826 = vld [vmem:[#allocation7 + $0x268] sm:$0xff]
    %v827 = vld [vmem:[#allocation7 + $0x270] sm:$0xff]
    %v828 = vld [vmem:[#allocation7 + $0x278] sm:$0xff]
    %v829 = vld [vmem:[#allocation7 + $0x280] sm:$0xff]
    %v830 = vld [vmem:[#allocation7 + $0x288] sm:$0xff]
    %v831 = vld [vmem:[#allocation7 + $0x290] sm:$0xff]
    %v832 = vld [vmem:[#allocation7 + $0x298] sm:$0xff]
    %v833 = vld [vmem:[#allocation7 + $0x2a0] sm:$0xff]
    %v834 = vld [vmem:[#allocation7 + $0x2a8] sm:$0xff]
    %v835 = vld [vmem:[#allocation7 + $0x2b0] sm:$0xff]
    %v836 = vld [vmem:[#allocation7 + $0x2b8] sm:$0xff]
    %v837 = vld [vmem:[#allocation7 + $0x2c0] sm:$0xff]
    %v838 = vld [vmem:[#allocation7 + $0x2c8] sm:$0xff]
    %v839 = vld [vmem:[#allocation7 + $0x2d0] sm:$0xff]
    %v840 = vld [vmem:[#allocation7 + $0x2d8] sm:$0xff]
    %v841 = vld [vmem:[#allocation7 + $0x2e0] sm:$0xff]
    %v842 = vld [vmem:[#allocation7 + $0x2e8] sm:$0xff]
    %v843 = vld [vmem:[#allocation7 + $0x2f0] sm:$0xff]
    %v844 = vld [vmem:[#allocation7 + $0x2f8] sm:$0xff]
    %v845 = vld [vmem:[#allocation7 + $0x300] sm:$0xff]
    %v846 = vld [vmem:[#allocation7 + $0x308] sm:$0xff]
    %v847 = vld [vmem:[#allocation7 + $0x310] sm:$0xff]
    %v848 = vld [vmem:[#allocation7 + $0x318] sm:$0xff]
    %v849 = vld [vmem:[#allocation7 + $0x320] sm:$0xff]
    %v850 = vld [vmem:[#allocation7 + $0x328] sm:$0xff]
    %v851 = vld [vmem:[#allocation7 + $0x330] sm:$0xff]
    %v852 = vld [vmem:[#allocation7 + $0x338] sm:$0xff]
    %v853 = vld [vmem:[#allocation7 + $0x340] sm:$0xff]
    %v854 = vld [vmem:[#allocation7 + $0x348] sm:$0xff]
    %v855 = vld [vmem:[#allocation7 + $0x350] sm:$0xff]
    %v856 = vld [vmem:[#allocation7 + $0x358] sm:$0xff]
    %v857 = vld [vmem:[#allocation7 + $0x360] sm:$0xff]
    %v858 = vld [vmem:[#allocation7 + $0x368] sm:$0xff]
    %v859 = vld [vmem:[#allocation7 + $0x370] sm:$0xff]
    %v860 = vld [vmem:[#allocation7 + $0x378] sm:$0xff]
    %v861 = vld [vmem:[#allocation7 + $0x380] sm:$0xff]
    %v862 = vld [vmem:[#allocation7 + $0x388] sm:$0xff]
    %v863 = vld [vmem:[#allocation7 + $0x390] sm:$0xff]
    %v864 = vld [vmem:[#allocation7 + $0x398] sm:$0xff]
    %v865 = vld [vmem:[#allocation7 + $0x3a0] sm:$0xff]
    %v866 = vld [vmem:[#allocation7 + $0x3a8] sm:$0xff]
    %v867 = vld [vmem:[#allocation7 + $0x3b0] sm:$0xff]
    %v868 = vld [vmem:[#allocation7 + $0x3b8] sm:$0xff]
    %v869 = vld [vmem:[#allocation7 + $0x3c0] sm:$0xff]
    %v870 = vld [vmem:[#allocation7 + $0x3c8] sm:$0xff]
    %v871 = vld [vmem:[#allocation7 + $0x3d0] sm:$0xff]
    %v872 = vld [vmem:[#allocation7 + $0x3d8] sm:$0xff]
    %v873 = vld [vmem:[#allocation7 + $0x3e0] sm:$0xff]
    %v874 = vld [vmem:[#allocation7 + $0x3e8] sm:$0xff]
    %v875 = vld [vmem:[#allocation7 + $0x3f0] sm:$0xff]
    %v876 = vld [vmem:[#allocation7 + $0x3f8] sm:$0xff]
    %v877 = vld [vmem:[#allocation7 + $0x400] sm:$0xff]
    %v878 = vld [vmem:[#allocation7 + $0x408] sm:$0xff]
    %v879 = vld [vmem:[#allocation7 + $0x410] sm:$0xff]
    %v880 = vld [vmem:[#allocation7 + $0x418] sm:$0xff]
    %v881 = vld [vmem:[#allocation7 + $0x420] sm:$0xff]
    %v882 = vld [vmem:[#allocation7 + $0x428] sm:$0xff]
    %v883 = vld [vmem:[#allocation7 + $0x430] sm:$0xff]
    %v884 = vld [vmem:[#allocation7 + $0x438] sm:$0xff]
    %v885 = vld [vmem:[#allocation7 + $0x440] sm:$0xff]
    %v886 = vld [vmem:[#allocation7 + $0x448] sm:$0xff]
    %v887 = vld [vmem:[#allocation7 + $0x450] sm:$0xff]
    %v888 = vld [vmem:[#allocation7 + $0x458] sm:$0xff]
    %v889 = vld [vmem:[#allocation7 + $0x460] sm:$0xff]
    %v890 = vld [vmem:[#allocation7 + $0x468] sm:$0xff]
    %v891 = vld [vmem:[#allocation7 + $0x470] sm:$0xff]
    %v892 = vld [vmem:[#allocation7 + $0x478] sm:$0xff]
    %v893 = vld [vmem:[#allocation7 + $0x480] sm:$0xff]
    %v894 = vld [vmem:[#allocation7 + $0x488] sm:$0xff]
    %v895 = vld [vmem:[#allocation7 + $0x490] sm:$0xff]
    %v896 = vld [vmem:[#allocation7 + $0x498] sm:$0xff]
    %v897 = vld [vmem:[#allocation7 + $0x4a0] sm:$0xff]
    %v898 = vld [vmem:[#allocation7 + $0x4a8] sm:$0xff]
    %v899 = vld [vmem:[#allocation7 + $0x4b0] sm:$0xff]
    %v900 = vld [vmem:[#allocation7 + $0x4b8] sm:$0xff]
    %v901 = vld [vmem:[#allocation7 + $0x4c0] sm:$0xff]
    %v902 = vld [vmem:[#allocation7 + $0x4c8] sm:$0xff]
    %v903 = vld [vmem:[#allocation7 + $0x4d0] sm:$0xff]
    %v904 = vld [vmem:[#allocation7 + $0x4d8] sm:$0xff]
    %v905 = vld [vmem:[#allocation7 + $0x4e0] sm:$0xff]
    %v906 = vld [vmem:[#allocation7 + $0x4e8] sm:$0xff]
    %v907 = vld [vmem:[#allocation7 + $0x4f0] sm:$0xff]
    %v908 = vld [vmem:[#allocation7 + $0x4f8] sm:$0xff]
    %v909 = vld [vmem:[#allocation7 + $0x500] sm:$0xff]
    %v910 = vld [vmem:[#allocation7 + $0x508] sm:$0xff]
    %v911 = vld [vmem:[#allocation7 + $0x510] sm:$0xff]
    %v912 = vld [vmem:[#allocation7 + $0x518] sm:$0xff]
    %v913 = vld [vmem:[#allocation7 + $0x520] sm:$0xff]
    %v914 = vld [vmem:[#allocation7 + $0x528] sm:$0xff]
    %v915 = vld [vmem:[#allocation7 + $0x530] sm:$0xff]
    %v916 = vld [vmem:[#allocation7 + $0x538] sm:$0xff]
    %v917 = vld [vmem:[#allocation7 + $0x540] sm:$0xff]
    %v918 = vld [vmem:[#allocation7 + $0x548] sm:$0xff]
    %v919 = vld [vmem:[#allocation7 + $0x550] sm:$0xff]
    %v920 = vld [vmem:[#allocation7 + $0x558] sm:$0xff]
    %v921 = vld [vmem:[#allocation7 + $0x560] sm:$0xff]
    %v922 = vld [vmem:[#allocation7 + $0x568] sm:$0xff]
    %v923 = vld [vmem:[#allocation7 + $0x570] sm:$0xff]
    %v924 = vld [vmem:[#allocation7 + $0x578] sm:$0xff]
    %v925 = vld [vmem:[#allocation7 + $0x580] sm:$0xff]
    %v926 = vld [vmem:[#allocation7 + $0x588] sm:$0xff]
    %v927 = vld [vmem:[#allocation7 + $0x590] sm:$0xff]
    %v928 = vld [vmem:[#allocation7 + $0x598] sm:$0xff]
    %v929 = vld [vmem:[#allocation7 + $0x5a0] sm:$0xff]
    %v930 = vld [vmem:[#allocation7 + $0x5a8] sm:$0xff]
    %v931 = vld [vmem:[#allocation7 + $0x5b0] sm:$0xff]
    %v932 = vld [vmem:[#allocation7 + $0x5b8] sm:$0xff]
    %v933 = vld [vmem:[#allocation7 + $0x5c0] sm:$0xff]
    %v934 = vld [vmem:[#allocation7 + $0x5c8] sm:$0xff]
    %v935 = vld [vmem:[#allocation7 + $0x5d0] sm:$0xff]
    %v936 = vld [vmem:[#allocation7 + $0x5d8] sm:$0xff]
    %v937 = vld [vmem:[#allocation7 + $0x5e0] sm:$0xff]
    %v938 = vld [vmem:[#allocation7 + $0x5e8] sm:$0xff]
    %v939 = vld [vmem:[#allocation7 + $0x5f0] sm:$0xff]
    %v940 = vld [vmem:[#allocation7 + $0x5f8] sm:$0xff]
    %v941 = vld [vmem:[#allocation7 + $0x600] sm:$0xff]
    %v942 = vld [vmem:[#allocation7 + $0x608] sm:$0xff]
    %v943 = vld [vmem:[#allocation7 + $0x610] sm:$0xff]
    %v944 = vld [vmem:[#allocation7 + $0x618] sm:$0xff]
    %v945 = vld [vmem:[#allocation7 + $0x620] sm:$0xff]
    %v946 = vld [vmem:[#allocation7 + $0x628] sm:$0xff]
    %v947 = vld [vmem:[#allocation7 + $0x630] sm:$0xff]
    %v948 = vld [vmem:[#allocation7 + $0x638] sm:$0xff]
    %v949 = vld [vmem:[#allocation7 + $0x640] sm:$0xff]
    %v950 = vld [vmem:[#allocation7 + $0x648] sm:$0xff]
    %v951 = vld [vmem:[#allocation7 + $0x650] sm:$0xff]
    %v952 = vld [vmem:[#allocation7 + $0x658] sm:$0xff]
    %v953 = vld [vmem:[#allocation7 + $0x660] sm:$0xff]
    %v954 = vld [vmem:[#allocation7 + $0x668] sm:$0xff]
    %v955 = vld [vmem:[#allocation7 + $0x670] sm:$0xff]
    %v956 = vld [vmem:[#allocation7 + $0x678] sm:$0xff]
    %v957 = vld [vmem:[#allocation7 + $0x680] sm:$0xff]
    %v958 = vld [vmem:[#allocation7 + $0x688] sm:$0xff]
    %v959 = vld [vmem:[#allocation7 + $0x690] sm:$0xff]
    %v960 = vld [vmem:[#allocation7 + $0x698] sm:$0xff]
    %v961 = vld [vmem:[#allocation7 + $0x6a0] sm:$0xff]
    %v962 = vld [vmem:[#allocation7 + $0x6a8] sm:$0xff]
    %v963 = vld [vmem:[#allocation7 + $0x6b0] sm:$0xff]
    %v964 = vld [vmem:[#allocation7 + $0x6b8] sm:$0xff]
    %v965 = vld [vmem:[#allocation7 + $0x6c0] sm:$0xff]
    %v966 = vld [vmem:[#allocation7 + $0x6c8] sm:$0xff]
    %v967 = vld [vmem:[#allocation7 + $0x6d0] sm:$0xff]
    %v968 = vld [vmem:[#allocation7 + $0x6d8] sm:$0xff]
    %v969 = vld [vmem:[#allocation7 + $0x6e0] sm:$0xff]
    %v970 = vld [vmem:[#allocation7 + $0x6e8] sm:$0xff]
    %v971 = vld [vmem:[#allocation7 + $0x6f0] sm:$0xff]
    %v972 = vld [vmem:[#allocation7 + $0x6f8] sm:$0xff]
    %v973 = vld [vmem:[#allocation7 + $0x700] sm:$0xff]
    %v974 = vld [vmem:[#allocation7 + $0x708] sm:$0xff]
    %v975 = vld [vmem:[#allocation7 + $0x710] sm:$0xff]
    %v976 = vld [vmem:[#allocation7 + $0x718] sm:$0xff]
    %v977 = vld [vmem:[#allocation7 + $0x720] sm:$0xff]
    %v978 = vld [vmem:[#allocation7 + $0x728] sm:$0xff]
    %v979 = vld [vmem:[#allocation7 + $0x730] sm:$0xff]
    %v980 = vld [vmem:[#allocation7 + $0x738] sm:$0xff]
    %v981 = vld [vmem:[#allocation7 + $0x740] sm:$0xff]
    %v982 = vld [vmem:[#allocation7 + $0x748] sm:$0xff]
    %v983 = vld [vmem:[#allocation7 + $0x750] sm:$0xff]
    %v984 = vld [vmem:[#allocation7 + $0x758] sm:$0xff]
    %v985 = vld [vmem:[#allocation7 + $0x760] sm:$0xff]
    %v986 = vld [vmem:[#allocation7 + $0x768] sm:$0xff]
    %v987 = vld [vmem:[#allocation7 + $0x770] sm:$0xff]
    %v988 = vld [vmem:[#allocation7 + $0x778] sm:$0xff]
    %v989 = vld [vmem:[#allocation7 + $0x780] sm:$0xff]
    %v990 = vld [vmem:[#allocation7 + $0x788] sm:$0xff]
    %v991 = vld [vmem:[#allocation7 + $0x790] sm:$0xff]
    %v992 = vld [vmem:[#allocation7 + $0x798] sm:$0xff]
    %v993 = vld [vmem:[#allocation7 + $0x7a0] sm:$0xff]
    %v994 = vld [vmem:[#allocation7 + $0x7a8] sm:$0xff]
    %v995 = vld [vmem:[#allocation7 + $0x7b0] sm:$0xff]
    %v996 = vld [vmem:[#allocation7 + $0x7b8] sm:$0xff]
    %v997 = vld [vmem:[#allocation7 + $0x7c0] sm:$0xff]
    %v998 = vld [vmem:[#allocation7 + $0x7c8] sm:$0xff]
    %v999 = vld [vmem:[#allocation7 + $0x7d0] sm:$0xff]
    %v1000 = vld [vmem:[#allocation7 + $0x7d8] sm:$0xff]
    %v1001 = vld [vmem:[#allocation7 + $0x7e0] sm:$0xff]
    %v1002 = vld [vmem:[#allocation7 + $0x7e8] sm:$0xff]
    %v1003 = vld [vmem:[#allocation7 + $0x7f0] sm:$0xff]
    %v1004 = vld [vmem:[#allocation7 + $0x7f8] sm:$0xff]
    %v1005 = vld [vmem:[%s8] sm:$0xf]
    %v1007 = vperm.slane %v1005, 0
    %v1008 = vperm.slane %v1005, 1
    %v1009 = vperm.slane %v1005, 2
    %v1010 = vperm.slane %v1005, 3
    %v1271 = vunpack.c.l.b16 %v749
    %v1272 = vunpack.c.h.b16 %v749
    %v1273 = vunpack.c.l.b16 %v750
    %v1274 = vunpack.c.h.b16 %v750
    %v1275 = vunpack.c.l.b16 %v751
    %v1276 = vunpack.c.h.b16 %v751
    %v1277 = vunpack.c.l.b16 %v752
    %v1278 = vunpack.c.h.b16 %v752
    %v1279 = vunpack.c.l.b16 %v753
    %v1280 = vunpack.c.h.b16 %v753
    %v1281 = vunpack.c.l.b16 %v754
    %v1282 = vunpack.c.h.b16 %v754
    %v1283 = vunpack.c.l.b16 %v755
    %v1284 = vunpack.c.h.b16 %v755
    %v1285 = vunpack.c.l.b16 %v756
    %v1286 = vunpack.c.h.b16 %v756
    %v1287 = vunpack.c.l.b16 %v757
    %v1288 = vunpack.c.h.b16 %v757
    %v1289 = vunpack.c.l.b16 %v758
    %v1290 = vunpack.c.h.b16 %v758
    %v1291 = vunpack.c.l.b16 %v759
    %v1292 = vunpack.c.h.b16 %v759
    %v1293 = vunpack.c.l.b16 %v760
    %v1294 = vunpack.c.h.b16 %v760
    %v1295 = vunpack.c.l.b16 %v761
    %v1296 = vunpack.c.h.b16 %v761
    %v1297 = vunpack.c.l.b16 %v762
    %v1298 = vunpack.c.h.b16 %v762
    %v1299 = vunpack.c.l.b16 %v763
    %v1300 = vunpack.c.h.b16 %v763
    %v1301 = vunpack.c.l.b16 %v764
    %v1302 = vunpack.c.h.b16 %v764
    %v1303 = vunpack.c.l.b16 %v765
    %v1304 = vunpack.c.h.b16 %v765
    %v1305 = vunpack.c.l.b16 %v766
    %v1306 = vunpack.c.h.b16 %v766
    %v1307 = vunpack.c.l.b16 %v767
    %v1308 = vunpack.c.h.b16 %v767
    %v1309 = vunpack.c.l.b16 %v768
    %v1310 = vunpack.c.h.b16 %v768
    %v1311 = vunpack.c.l.b16 %v769
    %v1312 = vunpack.c.h.b16 %v769
    %v1313 = vunpack.c.l.b16 %v770
    %v1314 = vunpack.c.h.b16 %v770
    %v1315 = vunpack.c.l.b16 %v771
    %v1316 = vunpack.c.h.b16 %v771
    %v1317 = vunpack.c.l.b16 %v772
    %v1318 = vunpack.c.h.b16 %v772
    %v1319 = vunpack.c.l.b16 %v773
    %v1320 = vunpack.c.h.b16 %v773
    %v1321 = vunpack.c.l.b16 %v774
    %v1322 = vunpack.c.h.b16 %v774
    %v1323 = vunpack.c.l.b16 %v775
    %v1324 = vunpack.c.h.b16 %v775
    %v1325 = vunpack.c.l.b16 %v776
    %v1326 = vunpack.c.h.b16 %v776
    %v1327 = vunpack.c.l.b16 %v777
    %v1328 = vunpack.c.h.b16 %v777
    %v1329 = vunpack.c.l.b16 %v778
    %v1330 = vunpack.c.h.b16 %v778
    %v1331 = vunpack.c.l.b16 %v779
    %v1332 = vunpack.c.h.b16 %v779
    %v1333 = vunpack.c.l.b16 %v780
    %v1334 = vunpack.c.h.b16 %v780
    %v1335 = vunpack.c.l.b16 %v781
    %v1336 = vunpack.c.h.b16 %v781
    %v1337 = vunpack.c.l.b16 %v782
    %v1338 = vunpack.c.h.b16 %v782
    %v1339 = vunpack.c.l.b16 %v783
    %v1340 = vunpack.c.h.b16 %v783
    %v1341 = vunpack.c.l.b16 %v784
    %v1342 = vunpack.c.h.b16 %v784
    %v1343 = vunpack.c.l.b16 %v785
    %v1344 = vunpack.c.h.b16 %v785
    %v1345 = vunpack.c.l.b16 %v786
    %v1346 = vunpack.c.h.b16 %v786
    %v1347 = vunpack.c.l.b16 %v787
    %v1348 = vunpack.c.h.b16 %v787
    %v1349 = vunpack.c.l.b16 %v788
    %v1350 = vunpack.c.h.b16 %v788
    %v1351 = vunpack.c.l.b16 %v789
    %v1352 = vunpack.c.h.b16 %v789
    %v1353 = vunpack.c.l.b16 %v790
    %v1354 = vunpack.c.h.b16 %v790
    %v1355 = vunpack.c.l.b16 %v791
    %v1356 = vunpack.c.h.b16 %v791
    %v1357 = vunpack.c.l.b16 %v792
    %v1358 = vunpack.c.h.b16 %v792
    %v1359 = vunpack.c.l.b16 %v793
    %v1360 = vunpack.c.h.b16 %v793
    %v1361 = vunpack.c.l.b16 %v794
    %v1362 = vunpack.c.h.b16 %v794
    %v1363 = vunpack.c.l.b16 %v795
    %v1364 = vunpack.c.h.b16 %v795
    %v1365 = vunpack.c.l.b16 %v796
    %v1366 = vunpack.c.h.b16 %v796
    %v1367 = vunpack.c.l.b16 %v797
    %v1368 = vunpack.c.h.b16 %v797
    %v1369 = vunpack.c.l.b16 %v798
    %v1370 = vunpack.c.h.b16 %v798
    %v1371 = vunpack.c.l.b16 %v799
    %v1372 = vunpack.c.h.b16 %v799
    %v1373 = vunpack.c.l.b16 %v800
    %v1374 = vunpack.c.h.b16 %v800
    %v1375 = vunpack.c.l.b16 %v801
    %v1376 = vunpack.c.h.b16 %v801
    %v1377 = vunpack.c.l.b16 %v802
    %v1378 = vunpack.c.h.b16 %v802
    %v1379 = vunpack.c.l.b16 %v803
    %v1380 = vunpack.c.h.b16 %v803
    %v1381 = vunpack.c.l.b16 %v804
    %v1382 = vunpack.c.h.b16 %v804
    %v1383 = vunpack.c.l.b16 %v805
    %v1384 = vunpack.c.h.b16 %v805
    %v1385 = vunpack.c.l.b16 %v806
    %v1386 = vunpack.c.h.b16 %v806
    %v1387 = vunpack.c.l.b16 %v807
    %v1388 = vunpack.c.h.b16 %v807
    %v1389 = vunpack.c.l.b16 %v808
    %v1390 = vunpack.c.h.b16 %v808
    %v1391 = vunpack.c.l.b16 %v809
    %v1392 = vunpack.c.h.b16 %v809
    %v1393 = vunpack.c.l.b16 %v810
    %v1394 = vunpack.c.h.b16 %v810
    %v1395 = vunpack.c.l.b16 %v811
    %v1396 = vunpack.c.h.b16 %v811
    %v1397 = vunpack.c.l.b16 %v812
    %v1398 = vunpack.c.h.b16 %v812
    %v1399 = vunpack.c.l.b16 %v813
    %v1400 = vunpack.c.h.b16 %v813
    %v1401 = vunpack.c.l.b16 %v814
    %v1402 = vunpack.c.h.b16 %v814
    %v1403 = vunpack.c.l.b16 %v815
    %v1404 = vunpack.c.h.b16 %v815
    %v1405 = vunpack.c.l.b16 %v816
    %v1406 = vunpack.c.h.b16 %v816
    %v1407 = vunpack.c.l.b16 %v817
    %v1408 = vunpack.c.h.b16 %v817
    %v1409 = vunpack.c.l.b16 %v818
    %v1410 = vunpack.c.h.b16 %v818
    %v1411 = vunpack.c.l.b16 %v819
    %v1412 = vunpack.c.h.b16 %v819
    %v1413 = vunpack.c.l.b16 %v820
    %v1414 = vunpack.c.h.b16 %v820
    %v1415 = vunpack.c.l.b16 %v821
    %v1416 = vunpack.c.h.b16 %v821
    %v1417 = vunpack.c.l.b16 %v822
    %v1418 = vunpack.c.h.b16 %v822
    %v1419 = vunpack.c.l.b16 %v823
    %v1420 = vunpack.c.h.b16 %v823
    %v1421 = vunpack.c.l.b16 %v824
    %v1422 = vunpack.c.h.b16 %v824
    %v1423 = vunpack.c.l.b16 %v825
    %v1424 = vunpack.c.h.b16 %v825
    %v1425 = vunpack.c.l.b16 %v826
    %v1426 = vunpack.c.h.b16 %v826
    %v1427 = vunpack.c.l.b16 %v827
    %v1428 = vunpack.c.h.b16 %v827
    %v1429 = vunpack.c.l.b16 %v828
    %v1430 = vunpack.c.h.b16 %v828
    %v1431 = vunpack.c.l.b16 %v829
    %v1432 = vunpack.c.h.b16 %v829
    %v1433 = vunpack.c.l.b16 %v830
    %v1434 = vunpack.c.h.b16 %v830
    %v1435 = vunpack.c.l.b16 %v831
    %v1436 = vunpack.c.h.b16 %v831
    %v1437 = vunpack.c.l.b16 %v832
    %v1438 = vunpack.c.h.b16 %v832
    %v1439 = vunpack.c.l.b16 %v833
    %v1440 = vunpack.c.h.b16 %v833
    %v1441 = vunpack.c.l.b16 %v834
    %v1442 = vunpack.c.h.b16 %v834
    %v1443 = vunpack.c.l.b16 %v835
    %v1444 = vunpack.c.h.b16 %v835
    %v1445 = vunpack.c.l.b16 %v836
    %v1446 = vunpack.c.h.b16 %v836
    %v1447 = vunpack.c.l.b16 %v837
    %v1448 = vunpack.c.h.b16 %v837
    %v1449 = vunpack.c.l.b16 %v838
    %v1450 = vunpack.c.h.b16 %v838
    %v1451 = vunpack.c.l.b16 %v839
    %v1452 = vunpack.c.h.b16 %v839
    %v1453 = vunpack.c.l.b16 %v840
    %v1454 = vunpack.c.h.b16 %v840
    %v1455 = vunpack.c.l.b16 %v841
    %v1456 = vunpack.c.h.b16 %v841
    %v1457 = vunpack.c.l.b16 %v842
    %v1458 = vunpack.c.h.b16 %v842
    %v1459 = vunpack.c.l.b16 %v843
    %v1460 = vunpack.c.h.b16 %v843
    %v1461 = vunpack.c.l.b16 %v844
    %v1462 = vunpack.c.h.b16 %v844
    %v1463 = vunpack.c.l.b16 %v845
    %v1464 = vunpack.c.h.b16 %v845
    %v1465 = vunpack.c.l.b16 %v846
    %v1466 = vunpack.c.h.b16 %v846
    %v1467 = vunpack.c.l.b16 %v847
    %v1468 = vunpack.c.h.b16 %v847
    %v1469 = vunpack.c.l.b16 %v848
    %v1470 = vunpack.c.h.b16 %v848
    %v1471 = vunpack.c.l.b16 %v849
    %v1472 = vunpack.c.h.b16 %v849
    %v1473 = vunpack.c.l.b16 %v850
    %v1474 = vunpack.c.h.b16 %v850
    %v1475 = vunpack.c.l.b16 %v851
    %v1476 = vunpack.c.h.b16 %v851
    %v1477 = vunpack.c.l.b16 %v852
    %v1478 = vunpack.c.h.b16 %v852
    %v1479 = vunpack.c.l.b16 %v853
    %v1480 = vunpack.c.h.b16 %v853
    %v1481 = vunpack.c.l.b16 %v854
    %v1482 = vunpack.c.h.b16 %v854
    %v1483 = vunpack.c.l.b16 %v855
    %v1484 = vunpack.c.h.b16 %v855
    %v1485 = vunpack.c.l.b16 %v856
    %v1486 = vunpack.c.h.b16 %v856
    %v1487 = vunpack.c.l.b16 %v857
    %v1488 = vunpack.c.h.b16 %v857
    %v1489 = vunpack.c.l.b16 %v858
    %v1490 = vunpack.c.h.b16 %v858
    %v1491 = vunpack.c.l.b16 %v859
    %v1492 = vunpack.c.h.b16 %v859
    %v1493 = vunpack.c.l.b16 %v860
    %v1494 = vunpack.c.h.b16 %v860
    %v1495 = vunpack.c.l.b16 %v861
    %v1496 = vunpack.c.h.b16 %v861
    %v1497 = vunpack.c.l.b16 %v862
    %v1498 = vunpack.c.h.b16 %v862
    %v1499 = vunpack.c.l.b16 %v863
    %v1500 = vunpack.c.h.b16 %v863
    %v1501 = vunpack.c.l.b16 %v864
    %v1502 = vunpack.c.h.b16 %v864
    %v1503 = vunpack.c.l.b16 %v865
    %v1504 = vunpack.c.h.b16 %v865
    %v1505 = vunpack.c.l.b16 %v866
    %v1506 = vunpack.c.h.b16 %v866
    %v1507 = vunpack.c.l.b16 %v867
    %v1508 = vunpack.c.h.b16 %v867
    %v1509 = vunpack.c.l.b16 %v868
    %v1510 = vunpack.c.h.b16 %v868
    %v1511 = vunpack.c.l.b16 %v869
    %v1512 = vunpack.c.h.b16 %v869
    %v1513 = vunpack.c.l.b16 %v870
    %v1514 = vunpack.c.h.b16 %v870
    %v1515 = vunpack.c.l.b16 %v871
    %v1516 = vunpack.c.h.b16 %v871
    %v1517 = vunpack.c.l.b16 %v872
    %v1518 = vunpack.c.h.b16 %v872
    %v1519 = vunpack.c.l.b16 %v873
    %v1520 = vunpack.c.h.b16 %v873
    %v1521 = vunpack.c.l.b16 %v874
    %v1522 = vunpack.c.h.b16 %v874
    %v1523 = vunpack.c.l.b16 %v875
    %v1524 = vunpack.c.h.b16 %v875
    %v1525 = vunpack.c.l.b16 %v876
    %v1526 = vunpack.c.h.b16 %v876
    %v1527 = vunpack.c.l.b16 %v877
    %v1528 = vunpack.c.h.b16 %v877
    %v1529 = vunpack.c.l.b16 %v878
    %v1530 = vunpack.c.h.b16 %v878
    %v1531 = vunpack.c.l.b16 %v879
    %v1532 = vunpack.c.h.b16 %v879
    %v1533 = vunpack.c.l.b16 %v880
    %v1534 = vunpack.c.h.b16 %v880
    %v1535 = vunpack.c.l.b16 %v881
    %v1536 = vunpack.c.h.b16 %v881
    %v1537 = vunpack.c.l.b16 %v882
    %v1538 = vunpack.c.h.b16 %v882
    %v1539 = vunpack.c.l.b16 %v883
    %v1540 = vunpack.c.h.b16 %v883
    %v1541 = vunpack.c.l.b16 %v884
    %v1542 = vunpack.c.h.b16 %v884
    %v1543 = vunpack.c.l.b16 %v885
    %v1544 = vunpack.c.h.b16 %v885
    %v1545 = vunpack.c.l.b16 %v886
    %v1546 = vunpack.c.h.b16 %v886
    %v1547 = vunpack.c.l.b16 %v887
    %v1548 = vunpack.c.h.b16 %v887
    %v1549 = vunpack.c.l.b16 %v888
    %v1550 = vunpack.c.h.b16 %v888
    %v1551 = vunpack.c.l.b16 %v889
    %v1552 = vunpack.c.h.b16 %v889
    %v1553 = vunpack.c.l.b16 %v890
    %v1554 = vunpack.c.h.b16 %v890
    %v1555 = vunpack.c.l.b16 %v891
    %v1556 = vunpack.c.h.b16 %v891
    %v1557 = vunpack.c.l.b16 %v892
    %v1558 = vunpack.c.h.b16 %v892
    %v1559 = vunpack.c.l.b16 %v893
    %v1560 = vunpack.c.h.b16 %v893
    %v1561 = vunpack.c.l.b16 %v894
    %v1562 = vunpack.c.h.b16 %v894
    %v1563 = vunpack.c.l.b16 %v895
    %v1564 = vunpack.c.h.b16 %v895
    %v1565 = vunpack.c.l.b16 %v896
    %v1566 = vunpack.c.h.b16 %v896
    %v1567 = vunpack.c.l.b16 %v897
    %v1568 = vunpack.c.h.b16 %v897
    %v1569 = vunpack.c.l.b16 %v898
    %v1570 = vunpack.c.h.b16 %v898
    %v1571 = vunpack.c.l.b16 %v899
    %v1572 = vunpack.c.h.b16 %v899
    %v1573 = vunpack.c.l.b16 %v900
    %v1574 = vunpack.c.h.b16 %v900
    %v1575 = vunpack.c.l.b16 %v901
    %v1576 = vunpack.c.h.b16 %v901
    %v1577 = vunpack.c.l.b16 %v902
    %v1578 = vunpack.c.h.b16 %v902
    %v1579 = vunpack.c.l.b16 %v903
    %v1580 = vunpack.c.h.b16 %v903
    %v1581 = vunpack.c.l.b16 %v904
    %v1582 = vunpack.c.h.b16 %v904
    %v1583 = vunpack.c.l.b16 %v905
    %v1584 = vunpack.c.h.b16 %v905
    %v1585 = vunpack.c.l.b16 %v906
    %v1586 = vunpack.c.h.b16 %v906
    %v1587 = vunpack.c.l.b16 %v907
    %v1588 = vunpack.c.h.b16 %v907
    %v1589 = vunpack.c.l.b16 %v908
    %v1590 = vunpack.c.h.b16 %v908
    %v1591 = vunpack.c.l.b16 %v909
    %v1592 = vunpack.c.h.b16 %v909
    %v1593 = vunpack.c.l.b16 %v910
    %v1594 = vunpack.c.h.b16 %v910
    %v1595 = vunpack.c.l.b16 %v911
    %v1596 = vunpack.c.h.b16 %v911
    %v1597 = vunpack.c.l.b16 %v912
    %v1598 = vunpack.c.h.b16 %v912
    %v1599 = vunpack.c.l.b16 %v913
    %v1600 = vunpack.c.h.b16 %v913
    %v1601 = vunpack.c.l.b16 %v914
    %v1602 = vunpack.c.h.b16 %v914
    %v1603 = vunpack.c.l.b16 %v915
    %v1604 = vunpack.c.h.b16 %v915
    %v1605 = vunpack.c.l.b16 %v916
    %v1606 = vunpack.c.h.b16 %v916
    %v1607 = vunpack.c.l.b16 %v917
    %v1608 = vunpack.c.h.b16 %v917
    %v1609 = vunpack.c.l.b16 %v918
    %v1610 = vunpack.c.h.b16 %v918
    %v1611 = vunpack.c.l.b16 %v919
    %v1612 = vunpack.c.h.b16 %v919
    %v1613 = vunpack.c.l.b16 %v920
    %v1614 = vunpack.c.h.b16 %v920
    %v1615 = vunpack.c.l.b16 %v921
    %v1616 = vunpack.c.h.b16 %v921
    %v1617 = vunpack.c.l.b16 %v922
    %v1618 = vunpack.c.h.b16 %v922
    %v1619 = vunpack.c.l.b16 %v923
    %v1620 = vunpack.c.h.b16 %v923
    %v1621 = vunpack.c.l.b16 %v924
    %v1622 = vunpack.c.h.b16 %v924
    %v1623 = vunpack.c.l.b16 %v925
    %v1624 = vunpack.c.h.b16 %v925
    %v1625 = vunpack.c.l.b16 %v926
    %v1626 = vunpack.c.h.b16 %v926
    %v1627 = vunpack.c.l.b16 %v927
    %v1628 = vunpack.c.h.b16 %v927
    %v1629 = vunpack.c.l.b16 %v928
    %v1630 = vunpack.c.h.b16 %v928
    %v1631 = vunpack.c.l.b16 %v929
    %v1632 = vunpack.c.h.b16 %v929
    %v1633 = vunpack.c.l.b16 %v930
    %v1634 = vunpack.c.h.b16 %v930
    %v1635 = vunpack.c.l.b16 %v931
    %v1636 = vunpack.c.h.b16 %v931
    %v1637 = vunpack.c.l.b16 %v932
    %v1638 = vunpack.c.h.b16 %v932
    %v1639 = vunpack.c.l.b16 %v933
    %v1640 = vunpack.c.h.b16 %v933
    %v1641 = vunpack.c.l.b16 %v934
    %v1642 = vunpack.c.h.b16 %v934
    %v1643 = vunpack.c.l.b16 %v935
    %v1644 = vunpack.c.h.b16 %v935
    %v1645 = vunpack.c.l.b16 %v936
    %v1646 = vunpack.c.h.b16 %v936
    %v1647 = vunpack.c.l.b16 %v937
    %v1648 = vunpack.c.h.b16 %v937
    %v1649 = vunpack.c.l.b16 %v938
    %v1650 = vunpack.c.h.b16 %v938
    %v1651 = vunpack.c.l.b16 %v939
    %v1652 = vunpack.c.h.b16 %v939
    %v1653 = vunpack.c.l.b16 %v940
    %v1654 = vunpack.c.h.b16 %v940
    %v1655 = vunpack.c.l.b16 %v941
    %v1656 = vunpack.c.h.b16 %v941
    %v1657 = vunpack.c.l.b16 %v942
    %v1658 = vunpack.c.h.b16 %v942
    %v1659 = vunpack.c.l.b16 %v943
    %v1660 = vunpack.c.h.b16 %v943
    %v1661 = vunpack.c.l.b16 %v944
    %v1662 = vunpack.c.h.b16 %v944
    %v1663 = vunpack.c.l.b16 %v945
    %v1664 = vunpack.c.h.b16 %v945
    %v1665 = vunpack.c.l.b16 %v946
    %v1666 = vunpack.c.h.b16 %v946
    %v1667 = vunpack.c.l.b16 %v947
    %v1668 = vunpack.c.h.b16 %v947
    %v1669 = vunpack.c.l.b16 %v948
    %v1670 = vunpack.c.h.b16 %v948
    %v1671 = vunpack.c.l.b16 %v949
    %v1672 = vunpack.c.h.b16 %v949
    %v1673 = vunpack.c.l.b16 %v950
    %v1674 = vunpack.c.h.b16 %v950
    %v1675 = vunpack.c.l.b16 %v951
    %v1676 = vunpack.c.h.b16 %v951
    %v1677 = vunpack.c.l.b16 %v952
    %v1678 = vunpack.c.h.b16 %v952
    %v1679 = vunpack.c.l.b16 %v953
    %v1680 = vunpack.c.h.b16 %v953
    %v1681 = vunpack.c.l.b16 %v954
    %v1682 = vunpack.c.h.b16 %v954
    %v1683 = vunpack.c.l.b16 %v955
    %v1684 = vunpack.c.h.b16 %v955
    %v1685 = vunpack.c.l.b16 %v956
    %v1686 = vunpack.c.h.b16 %v956
    %v1687 = vunpack.c.l.b16 %v957
    %v1688 = vunpack.c.h.b16 %v957
    %v1689 = vunpack.c.l.b16 %v958
    %v1690 = vunpack.c.h.b16 %v958
    %v1691 = vunpack.c.l.b16 %v959
    %v1692 = vunpack.c.h.b16 %v959
    %v1693 = vunpack.c.l.b16 %v960
    %v1694 = vunpack.c.h.b16 %v960
    %v1695 = vunpack.c.l.b16 %v961
    %v1696 = vunpack.c.h.b16 %v961
    %v1697 = vunpack.c.l.b16 %v962
    %v1698 = vunpack.c.h.b16 %v962
    %v1699 = vunpack.c.l.b16 %v963
    %v1700 = vunpack.c.h.b16 %v963
    %v1701 = vunpack.c.l.b16 %v964
    %v1702 = vunpack.c.h.b16 %v964
    %v1703 = vunpack.c.l.b16 %v965
    %v1704 = vunpack.c.h.b16 %v965
    %v1705 = vunpack.c.l.b16 %v966
    %v1706 = vunpack.c.h.b16 %v966
    %v1707 = vunpack.c.l.b16 %v967
    %v1708 = vunpack.c.h.b16 %v967
    %v1709 = vunpack.c.l.b16 %v968
    %v1710 = vunpack.c.h.b16 %v968
    %v1711 = vunpack.c.l.b16 %v969
    %v1712 = vunpack.c.h.b16 %v969
    %v1713 = vunpack.c.l.b16 %v970
    %v1714 = vunpack.c.h.b16 %v970
    %v1715 = vunpack.c.l.b16 %v971
    %v1716 = vunpack.c.h.b16 %v971
    %v1717 = vunpack.c.l.b16 %v972
    %v1718 = vunpack.c.h.b16 %v972
    %v1719 = vunpack.c.l.b16 %v973
    %v1720 = vunpack.c.h.b16 %v973
    %v1721 = vunpack.c.l.b16 %v974
    %v1722 = vunpack.c.h.b16 %v974
    %v1723 = vunpack.c.l.b16 %v975
    %v1724 = vunpack.c.h.b16 %v975
    %v1725 = vunpack.c.l.b16 %v976
    %v1726 = vunpack.c.h.b16 %v976
    %v1727 = vunpack.c.l.b16 %v977
    %v1728 = vunpack.c.h.b16 %v977
    %v1729 = vunpack.c.l.b16 %v978
    %v1730 = vunpack.c.h.b16 %v978
    %v1731 = vunpack.c.l.b16 %v979
    %v1732 = vunpack.c.h.b16 %v979
    %v1733 = vunpack.c.l.b16 %v980
    %v1734 = vunpack.c.h.b16 %v980
    %v1735 = vunpack.c.l.b16 %v981
    %v1736 = vunpack.c.h.b16 %v981
    %v1737 = vunpack.c.l.b16 %v982
    %v1738 = vunpack.c.h.b16 %v982
    %v1739 = vunpack.c.l.b16 %v983
    %v1740 = vunpack.c.h.b16 %v983
    %v1741 = vunpack.c.l.b16 %v984
    %v1742 = vunpack.c.h.b16 %v984
    %v1743 = vunpack.c.l.b16 %v985
    %v1744 = vunpack.c.h.b16 %v985
    %v1745 = vunpack.c.l.b16 %v986
    %v1746 = vunpack.c.h.b16 %v986
    %v1747 = vunpack.c.l.b16 %v987
    %v1748 = vunpack.c.h.b16 %v987
    %v1749 = vunpack.c.l.b16 %v988
    %v1750 = vunpack.c.h.b16 %v988
    %v1751 = vunpack.c.l.b16 %v989
    %v1752 = vunpack.c.h.b16 %v989
    %v1753 = vunpack.c.l.b16 %v990
    %v1754 = vunpack.c.h.b16 %v990
    %v1755 = vunpack.c.l.b16 %v991
    %v1756 = vunpack.c.h.b16 %v991
    %v1757 = vunpack.c.l.b16 %v992
    %v1758 = vunpack.c.h.b16 %v992
    %v1759 = vunpack.c.l.b16 %v993
    %v1760 = vunpack.c.h.b16 %v993
    %v1761 = vunpack.c.l.b16 %v994
    %v1762 = vunpack.c.h.b16 %v994
    %v1763 = vunpack.c.l.b16 %v995
    %v1764 = vunpack.c.h.b16 %v995
    %v1765 = vunpack.c.l.b16 %v996
    %v1766 = vunpack.c.h.b16 %v996
    %v1767 = vunpack.c.l.b16 %v997
    %v1768 = vunpack.c.h.b16 %v997
    %v1769 = vunpack.c.l.b16 %v998
    %v1770 = vunpack.c.h.b16 %v998
    %v1771 = vunpack.c.l.b16 %v999
    %v1772 = vunpack.c.h.b16 %v999
    %v1773 = vunpack.c.l.b16 %v1000
    %v1774 = vunpack.c.h.b16 %v1000
    %v1775 = vunpack.c.l.b16 %v1001
    %v1776 = vunpack.c.h.b16 %v1001
    %v1777 = vunpack.c.l.b16 %v1002
    %v1778 = vunpack.c.h.b16 %v1002
    %v1779 = vunpack.c.l.b16 %v1003
    %v1780 = vunpack.c.h.b16 %v1003
    %v1781 = vunpack.c.l.b16 %v1004
    %v1782 = vunpack.c.h.b16 %v1004
    %v1783 = vpack.c.b16 %v1275, %v1271
    %v1784 = vpack.c.b16 %v1276, %v1272
    %v1785 = vpack.c.b16 %v1277, %v1273
    %v1786 = vpack.c.b16 %v1278, %v1274
    %v1787 = vpack.c.b16 %v1283, %v1279
    %v1788 = vpack.c.b16 %v1284, %v1280
    %v1789 = vpack.c.b16 %v1285, %v1281
    %v1790 = vpack.c.b16 %v1286, %v1282
    %v1791 = vpack.c.b16 %v1291, %v1287
    %v1792 = vpack.c.b16 %v1292, %v1288
    %v1793 = vpack.c.b16 %v1293, %v1289
    %v1794 = vpack.c.b16 %v1294, %v1290
    %v1795 = vpack.c.b16 %v1299, %v1295
    %v1796 = vpack.c.b16 %v1300, %v1296
    %v1797 = vpack.c.b16 %v1301, %v1297
    %v1798 = vpack.c.b16 %v1302, %v1298
    %v1799 = vpack.c.b16 %v1307, %v1303
    %v1800 = vpack.c.b16 %v1308, %v1304
    %v1801 = vpack.c.b16 %v1309, %v1305
    %v1802 = vpack.c.b16 %v1310, %v1306
    %v1803 = vpack.c.b16 %v1315, %v1311
    %v1804 = vpack.c.b16 %v1316, %v1312
    %v1805 = vpack.c.b16 %v1317, %v1313
    %v1806 = vpack.c.b16 %v1318, %v1314
    %v1807 = vpack.c.b16 %v1323, %v1319
    %v1808 = vpack.c.b16 %v1324, %v1320
    %v1809 = vpack.c.b16 %v1325, %v1321
    %v1810 = vpack.c.b16 %v1326, %v1322
    %v1811 = vpack.c.b16 %v1331, %v1327
    %v1812 = vpack.c.b16 %v1332, %v1328
    %v1813 = vpack.c.b16 %v1333, %v1329
    %v1814 = vpack.c.b16 %v1334, %v1330
    %v1815 = vpack.c.b16 %v1339, %v1335
    %v1816 = vpack.c.b16 %v1340, %v1336
    %v1817 = vpack.c.b16 %v1341, %v1337
    %v1818 = vpack.c.b16 %v1342, %v1338
    %v1819 = vpack.c.b16 %v1347, %v1343
    %v1820 = vpack.c.b16 %v1348, %v1344
    %v1821 = vpack.c.b16 %v1349, %v1345
    %v1822 = vpack.c.b16 %v1350, %v1346
    %v1823 = vpack.c.b16 %v1355, %v1351
    %v1824 = vpack.c.b16 %v1356, %v1352
    %v1825 = vpack.c.b16 %v1357, %v1353
    %v1826 = vpack.c.b16 %v1358, %v1354
    %v1827 = vpack.c.b16 %v1363, %v1359
    %v1828 = vpack.c.b16 %v1364, %v1360
    %v1829 = vpack.c.b16 %v1365, %v1361
    %v1830 = vpack.c.b16 %v1366, %v1362
    %v1831 = vpack.c.b16 %v1371, %v1367
    %v1832 = vpack.c.b16 %v1372, %v1368
    %v1833 = vpack.c.b16 %v1373, %v1369
    %v1834 = vpack.c.b16 %v1374, %v1370
    %v1835 = vpack.c.b16 %v1379, %v1375
    %v1836 = vpack.c.b16 %v1380, %v1376
    %v1837 = vpack.c.b16 %v1381, %v1377
    %v1838 = vpack.c.b16 %v1382, %v1378
    %v1839 = vpack.c.b16 %v1387, %v1383
    %v1840 = vpack.c.b16 %v1388, %v1384
    %v1841 = vpack.c.b16 %v1389, %v1385
    %v1842 = vpack.c.b16 %v1390, %v1386
    %v1843 = vpack.c.b16 %v1395, %v1391
    %v1844 = vpack.c.b16 %v1396, %v1392
    %v1845 = vpack.c.b16 %v1397, %v1393
    %v1846 = vpack.c.b16 %v1398, %v1394
    %v1847 = vpack.c.b16 %v1403, %v1399
    %v1848 = vpack.c.b16 %v1404, %v1400
    %v1849 = vpack.c.b16 %v1405, %v1401
    %v1850 = vpack.c.b16 %v1406, %v1402
    %v1851 = vpack.c.b16 %v1411, %v1407
    %v1852 = vpack.c.b16 %v1412, %v1408
    %v1853 = vpack.c.b16 %v1413, %v1409
    %v1854 = vpack.c.b16 %v1414, %v1410
    %v1855 = vpack.c.b16 %v1419, %v1415
    %v1856 = vpack.c.b16 %v1420, %v1416
    %v1857 = vpack.c.b16 %v1421, %v1417
    %v1858 = vpack.c.b16 %v1422, %v1418
    %v1859 = vpack.c.b16 %v1427, %v1423
    %v1860 = vpack.c.b16 %v1428, %v1424
    %v1861 = vpack.c.b16 %v1429, %v1425
    %v1862 = vpack.c.b16 %v1430, %v1426
    %v1863 = vpack.c.b16 %v1435, %v1431
    %v1864 = vpack.c.b16 %v1436, %v1432
    %v1865 = vpack.c.b16 %v1437, %v1433
    %v1866 = vpack.c.b16 %v1438, %v1434
    %v1867 = vpack.c.b16 %v1443, %v1439
    %v1868 = vpack.c.b16 %v1444, %v1440
    %v1869 = vpack.c.b16 %v1445, %v1441
    %v1870 = vpack.c.b16 %v1446, %v1442
    %v1871 = vpack.c.b16 %v1451, %v1447
    %v1872 = vpack.c.b16 %v1452, %v1448
    %v1873 = vpack.c.b16 %v1453, %v1449
    %v1874 = vpack.c.b16 %v1454, %v1450
    %v1875 = vpack.c.b16 %v1459, %v1455
    %v1876 = vpack.c.b16 %v1460, %v1456
    %v1877 = vpack.c.b16 %v1461, %v1457
    %v1878 = vpack.c.b16 %v1462, %v1458
    %v1879 = vpack.c.b16 %v1467, %v1463
    %v1880 = vpack.c.b16 %v1468, %v1464
    %v1881 = vpack.c.b16 %v1469, %v1465
    %v1882 = vpack.c.b16 %v1470, %v1466
    %v1883 = vpack.c.b16 %v1475, %v1471
    %v1884 = vpack.c.b16 %v1476, %v1472
    %v1885 = vpack.c.b16 %v1477, %v1473
    %v1886 = vpack.c.b16 %v1478, %v1474
    %v1887 = vpack.c.b16 %v1483, %v1479
    %v1888 = vpack.c.b16 %v1484, %v1480
    %v1889 = vpack.c.b16 %v1485, %v1481
    %v1890 = vpack.c.b16 %v1486, %v1482
    %v1891 = vpack.c.b16 %v1491, %v1487
    %v1892 = vpack.c.b16 %v1492, %v1488
    %v1893 = vpack.c.b16 %v1493, %v1489
    %v1894 = vpack.c.b16 %v1494, %v1490
    %v1895 = vpack.c.b16 %v1499, %v1495
    %v1896 = vpack.c.b16 %v1500, %v1496
    %v1897 = vpack.c.b16 %v1501, %v1497
    %v1898 = vpack.c.b16 %v1502, %v1498
    %v1899 = vpack.c.b16 %v1507, %v1503
    %v1900 = vpack.c.b16 %v1508, %v1504
    %v1901 = vpack.c.b16 %v1509, %v1505
    %v1902 = vpack.c.b16 %v1510, %v1506
    %v1903 = vpack.c.b16 %v1515, %v1511
    %v1904 = vpack.c.b16 %v1516, %v1512
    %v1905 = vpack.c.b16 %v1517, %v1513
    %v1906 = vpack.c.b16 %v1518, %v1514
    %v1907 = vpack.c.b16 %v1523, %v1519
    %v1908 = vpack.c.b16 %v1524, %v1520
    %v1909 = vpack.c.b16 %v1525, %v1521
    %v1910 = vpack.c.b16 %v1526, %v1522
    %v1911 = vpack.c.b16 %v1531, %v1527
    %v1912 = vpack.c.b16 %v1532, %v1528
    %v1913 = vpack.c.b16 %v1533, %v1529
    %v1914 = vpack.c.b16 %v1534, %v1530
    %v1915 = vpack.c.b16 %v1539, %v1535
    %v1916 = vpack.c.b16 %v1540, %v1536
    %v1917 = vpack.c.b16 %v1541, %v1537
    %v1918 = vpack.c.b16 %v1542, %v1538
    %v1919 = vpack.c.b16 %v1547, %v1543
    %v1920 = vpack.c.b16 %v1548, %v1544
    %v1921 = vpack.c.b16 %v1549, %v1545
    %v1922 = vpack.c.b16 %v1550, %v1546
    %v1923 = vpack.c.b16 %v1555, %v1551
    %v1924 = vpack.c.b16 %v1556, %v1552
    %v1925 = vpack.c.b16 %v1557, %v1553
    %v1926 = vpack.c.b16 %v1558, %v1554
    %v1927 = vpack.c.b16 %v1563, %v1559
    %v1928 = vpack.c.b16 %v1564, %v1560
    %v1929 = vpack.c.b16 %v1565, %v1561
    %v1930 = vpack.c.b16 %v1566, %v1562
    %v1931 = vpack.c.b16 %v1571, %v1567
    %v1932 = vpack.c.b16 %v1572, %v1568
    %v1933 = vpack.c.b16 %v1573, %v1569
    %v1934 = vpack.c.b16 %v1574, %v1570
    %v1935 = vpack.c.b16 %v1579, %v1575
    %v1936 = vpack.c.b16 %v1580, %v1576
    %v1937 = vpack.c.b16 %v1581, %v1577
    %v1938 = vpack.c.b16 %v1582, %v1578
    %v1939 = vpack.c.b16 %v1587, %v1583
    %v1940 = vpack.c.b16 %v1588, %v1584
    %v1941 = vpack.c.b16 %v1589, %v1585
    %v1942 = vpack.c.b16 %v1590, %v1586
    %v1943 = vpack.c.b16 %v1595, %v1591
    %v1944 = vpack.c.b16 %v1596, %v1592
    %v1945 = vpack.c.b16 %v1597, %v1593
    %v1946 = vpack.c.b16 %v1598, %v1594
    %v1947 = vpack.c.b16 %v1603, %v1599
    %v1948 = vpack.c.b16 %v1604, %v1600
    %v1949 = vpack.c.b16 %v1605, %v1601
    %v1950 = vpack.c.b16 %v1606, %v1602
    %v1951 = vpack.c.b16 %v1611, %v1607
    %v1952 = vpack.c.b16 %v1612, %v1608
    %v1953 = vpack.c.b16 %v1613, %v1609
    %v1954 = vpack.c.b16 %v1614, %v1610
    %v1955 = vpack.c.b16 %v1619, %v1615
    %v1956 = vpack.c.b16 %v1620, %v1616
    %v1957 = vpack.c.b16 %v1621, %v1617
    %v1958 = vpack.c.b16 %v1622, %v1618
    %v1959 = vpack.c.b16 %v1627, %v1623
    %v1960 = vpack.c.b16 %v1628, %v1624
    %v1961 = vpack.c.b16 %v1629, %v1625
    %v1962 = vpack.c.b16 %v1630, %v1626
    %v1963 = vpack.c.b16 %v1635, %v1631
    %v1964 = vpack.c.b16 %v1636, %v1632
    %v1965 = vpack.c.b16 %v1637, %v1633
    %v1966 = vpack.c.b16 %v1638, %v1634
    %v1967 = vpack.c.b16 %v1643, %v1639
    %v1968 = vpack.c.b16 %v1644, %v1640
    %v1969 = vpack.c.b16 %v1645, %v1641
    %v1970 = vpack.c.b16 %v1646, %v1642
    %v1971 = vpack.c.b16 %v1651, %v1647
    %v1972 = vpack.c.b16 %v1652, %v1648
    %v1973 = vpack.c.b16 %v1653, %v1649
    %v1974 = vpack.c.b16 %v1654, %v1650
    %v1975 = vpack.c.b16 %v1659, %v1655
    %v1976 = vpack.c.b16 %v1660, %v1656
    %v1977 = vpack.c.b16 %v1661, %v1657
    %v1978 = vpack.c.b16 %v1662, %v1658
    %v1979 = vpack.c.b16 %v1667, %v1663
    %v1980 = vpack.c.b16 %v1668, %v1664
    %v1981 = vpack.c.b16 %v1669, %v1665
    %v1982 = vpack.c.b16 %v1670, %v1666
    %v1983 = vpack.c.b16 %v1675, %v1671
    %v1984 = vpack.c.b16 %v1676, %v1672
    %v1985 = vpack.c.b16 %v1677, %v1673
    %v1986 = vpack.c.b16 %v1678, %v1674
    %v1987 = vpack.c.b16 %v1683, %v1679
    %v1988 = vpack.c.b16 %v1684, %v1680
    %v1989 = vpack.c.b16 %v1685, %v1681
    %v1990 = vpack.c.b16 %v1686, %v1682
    %v1991 = vpack.c.b16 %v1691, %v1687
    %v1992 = vpack.c.b16 %v1692, %v1688
    %v1993 = vpack.c.b16 %v1693, %v1689
    %v1994 = vpack.c.b16 %v1694, %v1690
    %v1995 = vpack.c.b16 %v1699, %v1695
    %v1996 = vpack.c.b16 %v1700, %v1696
    %v1997 = vpack.c.b16 %v1701, %v1697
    %v1998 = vpack.c.b16 %v1702, %v1698
    %v1999 = vpack.c.b16 %v1707, %v1703
    %v2000 = vpack.c.b16 %v1708, %v1704
    %v2001 = vpack.c.b16 %v1709, %v1705
    %v2002 = vpack.c.b16 %v1710, %v1706
    %v2003 = vpack.c.b16 %v1715, %v1711
    %v2004 = vpack.c.b16 %v1716, %v1712
    %v2005 = vpack.c.b16 %v1717, %v1713
    %v2006 = vpack.c.b16 %v1718, %v1714
    %v2007 = vpack.c.b16 %v1723, %v1719
    %v2008 = vpack.c.b16 %v1724, %v1720
    %v2009 = vpack.c.b16 %v1725, %v1721
    %v2010 = vpack.c.b16 %v1726, %v1722
    %v2011 = vpack.c.b16 %v1731, %v1727
    %v2012 = vpack.c.b16 %v1732, %v1728
    %v2013 = vpack.c.b16 %v1733, %v1729
    %v2014 = vpack.c.b16 %v1734, %v1730
    %v2015 = vpack.c.b16 %v1739, %v1735
    %v2016 = vpack.c.b16 %v1740, %v1736
    %v2017 = vpack.c.b16 %v1741, %v1737
    %v2018 = vpack.c.b16 %v1742, %v1738
    %v2019 = vpack.c.b16 %v1747, %v1743
    %v2020 = vpack.c.b16 %v1748, %v1744
    %v2021 = vpack.c.b16 %v1749, %v1745
    %v2022 = vpack.c.b16 %v1750, %v1746
    %v2023 = vpack.c.b16 %v1755, %v1751
    %v2024 = vpack.c.b16 %v1756, %v1752
    %v2025 = vpack.c.b16 %v1757, %v1753
    %v2026 = vpack.c.b16 %v1758, %v1754
    %v2027 = vpack.c.b16 %v1763, %v1759
    %v2028 = vpack.c.b16 %v1764, %v1760
    %v2029 = vpack.c.b16 %v1765, %v1761
    %v2030 = vpack.c.b16 %v1766, %v1762
    %v2031 = vpack.c.b16 %v1771, %v1767
    %v2032 = vpack.c.b16 %v1772, %v1768
    %v2033 = vpack.c.b16 %v1773, %v1769
    %v2034 = vpack.c.b16 %v1774, %v1770
    %v2035 = vpack.c.b16 %v1779, %v1775
    %v2036 = vpack.c.b16 %v1780, %v1776
    %v2037 = vpack.c.b16 %v1781, %v1777
    %v2038 = vpack.c.b16 %v1782, %v1778
    %2295 = vmatpush.bf16.msra.mxu0 %v1811
    %2296 = vmatpush.bf16.msra.mxu0 %v1807
    %2297 = vmatpush.bf16.msra.mxu0 %v1803
    %2298 = vmatpush.bf16.msra.mxu0 %v1799
    %2299 = vmatpush.bf16.msra.mxu0 %v1795
    %2300 = vmatpush.bf16.msra.mxu0 %v1791
    %2301 = vmatpush.bf16.msra.mxu0 %v1787
    %2302 = vmatpush.bf16.msra.mxu0 %v1783
    %2303 = vmatmul.bf16.gmra.mxu0 %v741
    %v2304 = vpop.f32.mrf.mxu0
    %v2305 = vadd.f32 %v1007, %v2304
    %v2306 = vpop.f32.mrf.mxu0
    %v2307 = vadd.f32 %v1007, %v2306
    %2308 = vdwg.mxu0
    %2309 = vmatpush.bf16.msra.mxu0 %v1843
    %2310 = vmatpush.bf16.msra.mxu0 %v1839
    %2311 = vmatpush.bf16.msra.mxu0 %v1835
    %2312 = vmatpush.bf16.msra.mxu0 %v1831
    %2313 = vmatpush.bf16.msra.mxu0 %v1827
    %2314 = vmatpush.bf16.msra.mxu0 %v1823
    %2315 = vmatpush.bf16.msra.mxu0 %v1819
    %2316 = vmatpush.bf16.msra.mxu0 %v1815
    %2317 = vmatmul.bf16.gmra.mxu0 %v742
    %v2318 = vpop.f32.mrf.mxu0
    %v2319 = vadd.f32 %v2305, %v2318
    %v2320 = vpop.f32.mrf.mxu0
    %v2321 = vadd.f32 %v2307, %v2320
    %2322 = vdwg.mxu0
    %2323 = vmatpush.bf16.msra.mxu0 %v1875
    %2324 = vmatpush.bf16.msra.mxu0 %v1871
    %2325 = vmatpush.bf16.msra.mxu0 %v1867
    %2326 = vmatpush.bf16.msra.mxu0 %v1863
    %2327 = vmatpush.bf16.msra.mxu0 %v1859
    %2328 = vmatpush.bf16.msra.mxu0 %v1855
    %2329 = vmatpush.bf16.msra.mxu0 %v1851
    %2330 = vmatpush.bf16.msra.mxu0 %v1847
    %2331 = vmatmul.bf16.gmra.mxu0 %v743
    %v2332 = vpop.f32.mrf.mxu0
    %v2333 = vadd.f32 %v2319, %v2332
    %v2334 = vpop.f32.mrf.mxu0
    %v2335 = vadd.f32 %v2321, %v2334
    %2336 = vdwg.mxu0
    %2337 = vmatpush.bf16.msra.mxu0 %v1907
    %2338 = vmatpush.bf16.msra.mxu0 %v1903
    %2339 = vmatpush.bf16.msra.mxu0 %v1899
    %2340 = vmatpush.bf16.msra.mxu0 %v1895
    %2341 = vmatpush.bf16.msra.mxu0 %v1891
    %2342 = vmatpush.bf16.msra.mxu0 %v1887
    %2343 = vmatpush.bf16.msra.mxu0 %v1883
    %2344 = vmatpush.bf16.msra.mxu0 %v1879
    %2345 = vmatmul.bf16.gmra.mxu0 %v744
    %v2346 = vpop.f32.mrf.mxu0
    %v2347 = vadd.f32 %v2333, %v2346
    %v2348 = vpop.f32.mrf.mxu0
    %v2349 = vadd.f32 %v2335, %v2348
    %2350 = vdwg.mxu0
    %2351 = vmatpush.bf16.msra.mxu0 %v1939
    %2352 = vmatpush.bf16.msra.mxu0 %v1935
    %2353 = vmatpush.bf16.msra.mxu0 %v1931
    %2354 = vmatpush.bf16.msra.mxu0 %v1927
    %2355 = vmatpush.bf16.msra.mxu0 %v1923
    %2356 = vmatpush.bf16.msra.mxu0 %v1919
    %2357 = vmatpush.bf16.msra.mxu0 %v1915
    %2358 = vmatpush.bf16.msra.mxu0 %v1911
    %2359 = vmatmul.bf16.gmra.mxu0 %v745
    %v2360 = vpop.f32.mrf.mxu0
    %v2361 = vadd.f32 %v2347, %v2360
    %v2362 = vpop.f32.mrf.mxu0
    %v2363 = vadd.f32 %v2349, %v2362
    %2364 = vdwg.mxu0
    %2365 = vmatpush.bf16.msra.mxu0 %v1971
    %2366 = vmatpush.bf16.msra.mxu0 %v1967
    %2367 = vmatpush.bf16.msra.mxu0 %v1963
    %2368 = vmatpush.bf16.msra.mxu0 %v1959
    %2369 = vmatpush.bf16.msra.mxu0 %v1955
    %2370 = vmatpush.bf16.msra.mxu0 %v1951
    %2371 = vmatpush.bf16.msra.mxu0 %v1947
    %2372 = vmatpush.bf16.msra.mxu0 %v1943
    %2373 = vmatmul.bf16.gmra.mxu0 %v746
    %v2374 = vpop.f32.mrf.mxu0
    %v2375 = vadd.f32 %v2361, %v2374
    %v2376 = vpop.f32.mrf.mxu0
    %v2377 = vadd.f32 %v2363, %v2376
    %2378 = vdwg.mxu0
    %2379 = vmatpush.bf16.msra.mxu0 %v2003
    %2380 = vmatpush.bf16.msra.mxu0 %v1999
    %2381 = vmatpush.bf16.msra.mxu0 %v1995
    %2382 = vmatpush.bf16.msra.mxu0 %v1991
    %2383 = vmatpush.bf16.msra.mxu0 %v1987
    %2384 = vmatpush.bf16.msra.mxu0 %v1983
    %2385 = vmatpush.bf16.msra.mxu0 %v1979
    %2386 = vmatpush.bf16.msra.mxu0 %v1975
    %2387 = vmatmul.bf16.gmra.mxu0 %v747
    %v2388 = vpop.f32.mrf.mxu0
    %v2389 = vadd.f32 %v2375, %v2388
    %v2390 = vpop.f32.mrf.mxu0
    %v2391 = vadd.f32 %v2377, %v2390
    %2392 = vdwg.mxu0
    %2393 = vmatpush.bf16.msra.mxu0 %v2035
    %2394 = vmatpush.bf16.msra.mxu0 %v2031
    %2395 = vmatpush.bf16.msra.mxu0 %v2027
    %2396 = vmatpush.bf16.msra.mxu0 %v2023
    %2397 = vmatpush.bf16.msra.mxu0 %v2019
    %2398 = vmatpush.bf16.msra.mxu0 %v2015
    %2399 = vmatpush.bf16.msra.mxu0 %v2011
    %2400 = vmatpush.bf16.msra.mxu0 %v2007
    %2401 = vmatmul.bf16.gmra.mxu0 %v748
    %v2402 = vpop.f32.mrf.mxu0
    %v2403 = vadd.f32 %v2389, %v2402
    %v2404 = vpop.f32.mrf.mxu0
    %v2405 = vadd.f32 %v2391, %v2404
    %2406 = vdwg.mxu0
    %2407 = vmatpush.bf16.msra.mxu0 %v1812
    %2408 = vmatpush.bf16.msra.mxu0 %v1808
    %2409 = vmatpush.bf16.msra.mxu0 %v1804
    %2410 = vmatpush.bf16.msra.mxu0 %v1800
    %2411 = vmatpush.bf16.msra.mxu0 %v1796
    %2412 = vmatpush.bf16.msra.mxu0 %v1792
    %2413 = vmatpush.bf16.msra.mxu0 %v1788
    %2414 = vmatpush.bf16.msra.mxu0 %v1784
    %2415 = vmatmul.bf16.gmra.mxu0 %v741
    %v2416 = vpop.f32.mrf.mxu0
    %v2417 = vadd.f32 %v1008, %v2416
    %v2418 = vpop.f32.mrf.mxu0
    %v2419 = vadd.f32 %v1008, %v2418
    %2420 = vdwg.mxu0
    %2421 = vmatpush.bf16.msra.mxu0 %v1844
    %2422 = vmatpush.bf16.msra.mxu0 %v1840
    %2423 = vmatpush.bf16.msra.mxu0 %v1836
    %2424 = vmatpush.bf16.msra.mxu0 %v1832
    %2425 = vmatpush.bf16.msra.mxu0 %v1828
    %2426 = vmatpush.bf16.msra.mxu0 %v1824
    %2427 = vmatpush.bf16.msra.mxu0 %v1820
    %2428 = vmatpush.bf16.msra.mxu0 %v1816
    %2429 = vmatmul.bf16.gmra.mxu0 %v742
    %v2430 = vpop.f32.mrf.mxu0
    %v2431 = vadd.f32 %v2417, %v2430
    %v2432 = vpop.f32.mrf.mxu0
    %v2433 = vadd.f32 %v2419, %v2432
    %2434 = vdwg.mxu0
    %2435 = vmatpush.bf16.msra.mxu0 %v1876
    %2436 = vmatpush.bf16.msra.mxu0 %v1872
    %2437 = vmatpush.bf16.msra.mxu0 %v1868
    %2438 = vmatpush.bf16.msra.mxu0 %v1864
    %2439 = vmatpush.bf16.msra.mxu0 %v1860
    %2440 = vmatpush.bf16.msra.mxu0 %v1856
    %2441 = vmatpush.bf16.msra.mxu0 %v1852
    %2442 = vmatpush.bf16.msra.mxu0 %v1848
    %2443 = vmatmul.bf16.gmra.mxu0 %v743
    %v2444 = vpop.f32.mrf.mxu0
    %v2445 = vadd.f32 %v2431, %v2444
    %v2446 = vpop.f32.mrf.mxu0
    %v2447 = vadd.f32 %v2433, %v2446
    %2448 = vdwg.mxu0
    %2449 = vmatpush.bf16.msra.mxu0 %v1908
    %2450 = vmatpush.bf16.msra.mxu0 %v1904
    %2451 = vmatpush.bf16.msra.mxu0 %v1900
    %2452 = vmatpush.bf16.msra.mxu0 %v1896
    %2453 = vmatpush.bf16.msra.mxu0 %v1892
    %2454 = vmatpush.bf16.msra.mxu0 %v1888
    %2455 = vmatpush.bf16.msra.mxu0 %v1884
    %2456 = vmatpush.bf16.msra.mxu0 %v1880
    %2457 = vmatmul.bf16.gmra.mxu0 %v744
    %v2458 = vpop.f32.mrf.mxu0
    %v2459 = vadd.f32 %v2445, %v2458
    %v2460 = vpop.f32.mrf.mxu0
    %v2461 = vadd.f32 %v2447, %v2460
    %2462 = vdwg.mxu0
    %2463 = vmatpush.bf16.msra.mxu0 %v1940
    %2464 = vmatpush.bf16.msra.mxu0 %v1936
    %2465 = vmatpush.bf16.msra.mxu0 %v1932
    %2466 = vmatpush.bf16.msra.mxu0 %v1928
    %2467 = vmatpush.bf16.msra.mxu0 %v1924
    %2468 = vmatpush.bf16.msra.mxu0 %v1920
    %2469 = vmatpush.bf16.msra.mxu0 %v1916
    %2470 = vmatpush.bf16.msra.mxu0 %v1912
    %2471 = vmatmul.bf16.gmra.mxu0 %v745
    %v2472 = vpop.f32.mrf.mxu0
    %v2473 = vadd.f32 %v2459, %v2472
    %v2474 = vpop.f32.mrf.mxu0
    %v2475 = vadd.f32 %v2461, %v2474
    %2476 = vdwg.mxu0
    %2477 = vmatpush.bf16.msra.mxu0 %v1972
    %2478 = vmatpush.bf16.msra.mxu0 %v1968
    %2479 = vmatpush.bf16.msra.mxu0 %v1964
    %2480 = vmatpush.bf16.msra.mxu0 %v1960
    %2481 = vmatpush.bf16.msra.mxu0 %v1956
    %2482 = vmatpush.bf16.msra.mxu0 %v1952
    %2483 = vmatpush.bf16.msra.mxu0 %v1948
    %2484 = vmatpush.bf16.msra.mxu0 %v1944
    %2485 = vmatmul.bf16.gmra.mxu0 %v746
    %v2486 = vpop.f32.mrf.mxu0
    %v2487 = vadd.f32 %v2473, %v2486
    %v2488 = vpop.f32.mrf.mxu0
    %v2489 = vadd.f32 %v2475, %v2488
    %2490 = vdwg.mxu0
    %2491 = vmatpush.bf16.msra.mxu0 %v2004
    %2492 = vmatpush.bf16.msra.mxu0 %v2000
    %2493 = vmatpush.bf16.msra.mxu0 %v1996
    %2494 = vmatpush.bf16.msra.mxu0 %v1992
    %2495 = vmatpush.bf16.msra.mxu0 %v1988
    %2496 = vmatpush.bf16.msra.mxu0 %v1984
    %2497 = vmatpush.bf16.msra.mxu0 %v1980
    %2498 = vmatpush.bf16.msra.mxu0 %v1976
    %2499 = vmatmul.bf16.gmra.mxu0 %v747
    %v2500 = vpop.f32.mrf.mxu0
    %v2501 = vadd.f32 %v2487, %v2500
    %v2502 = vpop.f32.mrf.mxu0
    %v2503 = vadd.f32 %v2489, %v2502
    %2504 = vdwg.mxu0
    %2505 = vmatpush.bf16.msra.mxu0 %v2036
    %2506 = vmatpush.bf16.msra.mxu0 %v2032
    %2507 = vmatpush.bf16.msra.mxu0 %v2028
    %2508 = vmatpush.bf16.msra.mxu0 %v2024
    %2509 = vmatpush.bf16.msra.mxu0 %v2020
    %2510 = vmatpush.bf16.msra.mxu0 %v2016
    %2511 = vmatpush.bf16.msra.mxu0 %v2012
    %2512 = vmatpush.bf16.msra.mxu0 %v2008
    %2513 = vmatmul.bf16.gmra.mxu0 %v748
    %v2514 = vpop.f32.mrf.mxu0
    %v2515 = vadd.f32 %v2501, %v2514
    %v2516 = vpop.f32.mrf.mxu0
    %v2517 = vadd.f32 %v2503, %v2516
    %2518 = vdwg.mxu0
    %2519 = vmatpush.bf16.msra.mxu0 %v1813
    %2520 = vmatpush.bf16.msra.mxu0 %v1809
    %2521 = vmatpush.bf16.msra.mxu0 %v1805
    %2522 = vmatpush.bf16.msra.mxu0 %v1801
    %2523 = vmatpush.bf16.msra.mxu0 %v1797
    %2524 = vmatpush.bf16.msra.mxu0 %v1793
    %2525 = vmatpush.bf16.msra.mxu0 %v1789
    %2526 = vmatpush.bf16.msra.mxu0 %v1785
    %2527 = vmatmul.bf16.gmra.mxu0 %v741
    %v2528 = vpop.f32.mrf.mxu0
    %v2529 = vadd.f32 %v1009, %v2528
    %v2530 = vpop.f32.mrf.mxu0
    %v2531 = vadd.f32 %v1009, %v2530
    %2532 = vdwg.mxu0
    %2533 = vmatpush.bf16.msra.mxu0 %v1845
    %2534 = vmatpush.bf16.msra.mxu0 %v1841
    %2535 = vmatpush.bf16.msra.mxu0 %v1837
    %2536 = vmatpush.bf16.msra.mxu0 %v1833
    %2537 = vmatpush.bf16.msra.mxu0 %v1829
    %2538 = vmatpush.bf16.msra.mxu0 %v1825
    %2539 = vmatpush.bf16.msra.mxu0 %v1821
    %2540 = vmatpush.bf16.msra.mxu0 %v1817
    %2541 = vmatmul.bf16.gmra.mxu0 %v742
    %v2542 = vpop.f32.mrf.mxu0
    %v2543 = vadd.f32 %v2529, %v2542
    %v2544 = vpop.f32.mrf.mxu0
    %v2545 = vadd.f32 %v2531, %v2544
    %2546 = vdwg.mxu0
    %2547 = vmatpush.bf16.msra.mxu0 %v1877
    %2548 = vmatpush.bf16.msra.mxu0 %v1873
    %2549 = vmatpush.bf16.msra.mxu0 %v1869
    %2550 = vmatpush.bf16.msra.mxu0 %v1865
    %2551 = vmatpush.bf16.msra.mxu0 %v1861
    %2552 = vmatpush.bf16.msra.mxu0 %v1857
    %2553 = vmatpush.bf16.msra.mxu0 %v1853
    %2554 = vmatpush.bf16.msra.mxu0 %v1849
    %2555 = vmatmul.bf16.gmra.mxu0 %v743
    %v2556 = vpop.f32.mrf.mxu0
    %v2557 = vadd.f32 %v2543, %v2556
    %v2558 = vpop.f32.mrf.mxu0
    %v2559 = vadd.f32 %v2545, %v2558
    %2560 = vdwg.mxu0
    %2561 = vmatpush.bf16.msra.mxu0 %v1909
    %2562 = vmatpush.bf16.msra.mxu0 %v1905
    %2563 = vmatpush.bf16.msra.mxu0 %v1901
    %2564 = vmatpush.bf16.msra.mxu0 %v1897
    %2565 = vmatpush.bf16.msra.mxu0 %v1893
    %2566 = vmatpush.bf16.msra.mxu0 %v1889
    %2567 = vmatpush.bf16.msra.mxu0 %v1885
    %2568 = vmatpush.bf16.msra.mxu0 %v1881
    %2569 = vmatmul.bf16.gmra.mxu0 %v744
    %v2570 = vpop.f32.mrf.mxu0
    %v2571 = vadd.f32 %v2557, %v2570
    %v2572 = vpop.f32.mrf.mxu0
    %v2573 = vadd.f32 %v2559, %v2572
    %2574 = vdwg.mxu0
    %2575 = vmatpush.bf16.msra.mxu0 %v1941
    %2576 = vmatpush.bf16.msra.mxu0 %v1937
    %2577 = vmatpush.bf16.msra.mxu0 %v1933
    %2578 = vmatpush.bf16.msra.mxu0 %v1929
    %2579 = vmatpush.bf16.msra.mxu0 %v1925
    %2580 = vmatpush.bf16.msra.mxu0 %v1921
    %2581 = vmatpush.bf16.msra.mxu0 %v1917
    %2582 = vmatpush.bf16.msra.mxu0 %v1913
    %2583 = vmatmul.bf16.gmra.mxu0 %v745
    %v2584 = vpop.f32.mrf.mxu0
    %v2585 = vadd.f32 %v2571, %v2584
    %v2586 = vpop.f32.mrf.mxu0
    %v2587 = vadd.f32 %v2573, %v2586
    %2588 = vdwg.mxu0
    %2589 = vmatpush.bf16.msra.mxu0 %v1973
    %2590 = vmatpush.bf16.msra.mxu0 %v1969
    %2591 = vmatpush.bf16.msra.mxu0 %v1965
    %2592 = vmatpush.bf16.msra.mxu0 %v1961
    %2593 = vmatpush.bf16.msra.mxu0 %v1957
    %2594 = vmatpush.bf16.msra.mxu0 %v1953
    %2595 = vmatpush.bf16.msra.mxu0 %v1949
    %2596 = vmatpush.bf16.msra.mxu0 %v1945
    %2597 = vmatmul.bf16.gmra.mxu0 %v746
    %v2598 = vpop.f32.mrf.mxu0
    %v2599 = vadd.f32 %v2585, %v2598
    %v2600 = vpop.f32.mrf.mxu0
    %v2601 = vadd.f32 %v2587, %v2600
    %2602 = vdwg.mxu0
    %2603 = vmatpush.bf16.msra.mxu0 %v2005
    %2604 = vmatpush.bf16.msra.mxu0 %v2001
    %2605 = vmatpush.bf16.msra.mxu0 %v1997
    %2606 = vmatpush.bf16.msra.mxu0 %v1993
    %2607 = vmatpush.bf16.msra.mxu0 %v1989
    %2608 = vmatpush.bf16.msra.mxu0 %v1985
    %2609 = vmatpush.bf16.msra.mxu0 %v1981
    %2610 = vmatpush.bf16.msra.mxu0 %v1977
    %2611 = vmatmul.bf16.gmra.mxu0 %v747
    %v2612 = vpop.f32.mrf.mxu0
    %v2613 = vadd.f32 %v2599, %v2612
    %v2614 = vpop.f32.mrf.mxu0
    %v2615 = vadd.f32 %v2601, %v2614
    %2616 = vdwg.mxu0
    %2617 = vmatpush.bf16.msra.mxu0 %v2037
    %2618 = vmatpush.bf16.msra.mxu0 %v2033
    %2619 = vmatpush.bf16.msra.mxu0 %v2029
    %2620 = vmatpush.bf16.msra.mxu0 %v2025
    %2621 = vmatpush.bf16.msra.mxu0 %v2021
    %2622 = vmatpush.bf16.msra.mxu0 %v2017
    %2623 = vmatpush.bf16.msra.mxu0 %v2013
    %2624 = vmatpush.bf16.msra.mxu0 %v2009
    %2625 = vmatmul.bf16.gmra.mxu0 %v748
    %v2626 = vpop.f32.mrf.mxu0
    %v2627 = vadd.f32 %v2613, %v2626
    %v2628 = vpop.f32.mrf.mxu0
    %v2629 = vadd.f32 %v2615, %v2628
    %2630 = vdwg.mxu0
    %2631 = vmatpush.bf16.msra.mxu0 %v1814
    %2632 = vmatpush.bf16.msra.mxu0 %v1810
    %2633 = vmatpush.bf16.msra.mxu0 %v1806
    %2634 = vmatpush.bf16.msra.mxu0 %v1802
    %2635 = vmatpush.bf16.msra.mxu0 %v1798
    %2636 = vmatpush.bf16.msra.mxu0 %v1794
    %2637 = vmatpush.bf16.msra.mxu0 %v1790
    %2638 = vmatpush.bf16.msra.mxu0 %v1786
    %2639 = vmatmul.bf16.gmra.mxu0 %v741
    %v2640 = vpop.f32.mrf.mxu0
    %v2641 = vadd.f32 %v1010, %v2640
    %v2642 = vpop.f32.mrf.mxu0
    %v2643 = vadd.f32 %v1010, %v2642
    %2644 = vdwg.mxu0
    %2645 = vmatpush.bf16.msra.mxu0 %v1846
    %2646 = vmatpush.bf16.msra.mxu0 %v1842
    %2647 = vmatpush.bf16.msra.mxu0 %v1838
    %2648 = vmatpush.bf16.msra.mxu0 %v1834
    %2649 = vmatpush.bf16.msra.mxu0 %v1830
    %2650 = vmatpush.bf16.msra.mxu0 %v1826
    %2651 = vmatpush.bf16.msra.mxu0 %v1822
    %2652 = vmatpush.bf16.msra.mxu0 %v1818
    %2653 = vmatmul.bf16.gmra.mxu0 %v742
    %v2654 = vpop.f32.mrf.mxu0
    %v2655 = vadd.f32 %v2641, %v2654
    %v2656 = vpop.f32.mrf.mxu0
    %v2657 = vadd.f32 %v2643, %v2656
    %2658 = vdwg.mxu0
    %2659 = vmatpush.bf16.msra.mxu0 %v1878
    %2660 = vmatpush.bf16.msra.mxu0 %v1874
    %2661 = vmatpush.bf16.msra.mxu0 %v1870
    %2662 = vmatpush.bf16.msra.mxu0 %v1866
    %2663 = vmatpush.bf16.msra.mxu0 %v1862
    %2664 = vmatpush.bf16.msra.mxu0 %v1858
    %2665 = vmatpush.bf16.msra.mxu0 %v1854
    %2666 = vmatpush.bf16.msra.mxu0 %v1850
    %2667 = vmatmul.bf16.gmra.mxu0 %v743
    %v2668 = vpop.f32.mrf.mxu0
    %v2669 = vadd.f32 %v2655, %v2668
    %v2670 = vpop.f32.mrf.mxu0
    %v2671 = vadd.f32 %v2657, %v2670
    %2672 = vdwg.mxu0
    %2673 = vmatpush.bf16.msra.mxu0 %v1910
    %2674 = vmatpush.bf16.msra.mxu0 %v1906
    %2675 = vmatpush.bf16.msra.mxu0 %v1902
    %2676 = vmatpush.bf16.msra.mxu0 %v1898
    %2677 = vmatpush.bf16.msra.mxu0 %v1894
    %2678 = vmatpush.bf16.msra.mxu0 %v1890
    %2679 = vmatpush.bf16.msra.mxu0 %v1886
    %2680 = vmatpush.bf16.msra.mxu0 %v1882
    %2681 = vmatmul.bf16.gmra.mxu0 %v744
    %v2682 = vpop.f32.mrf.mxu0
    %v2683 = vadd.f32 %v2669, %v2682
    %v2684 = vpop.f32.mrf.mxu0
    %v2685 = vadd.f32 %v2671, %v2684
    %2686 = vdwg.mxu0
    %2687 = vmatpush.bf16.msra.mxu0 %v1942
    %2688 = vmatpush.bf16.msra.mxu0 %v1938
    %2689 = vmatpush.bf16.msra.mxu0 %v1934
    %2690 = vmatpush.bf16.msra.mxu0 %v1930
    %2691 = vmatpush.bf16.msra.mxu0 %v1926
    %2692 = vmatpush.bf16.msra.mxu0 %v1922
    %2693 = vmatpush.bf16.msra.mxu0 %v1918
    %2694 = vmatpush.bf16.msra.mxu0 %v1914
    %2695 = vmatmul.bf16.gmra.mxu0 %v745
    %v2696 = vpop.f32.mrf.mxu0
    %v2697 = vadd.f32 %v2683, %v2696
    %v2698 = vpop.f32.mrf.mxu0
    %v2699 = vadd.f32 %v2685, %v2698
    %2700 = vdwg.mxu0
    %2701 = vmatpush.bf16.msra.mxu0 %v1974
    %2702 = vmatpush.bf16.msra.mxu0 %v1970
    %2703 = vmatpush.bf16.msra.mxu0 %v1966
    %2704 = vmatpush.bf16.msra.mxu0 %v1962
    %2705 = vmatpush.bf16.msra.mxu0 %v1958
    %2706 = vmatpush.bf16.msra.mxu0 %v1954
    %2707 = vmatpush.bf16.msra.mxu0 %v1950
    %2708 = vmatpush.bf16.msra.mxu0 %v1946
    %2709 = vmatmul.bf16.gmra.mxu0 %v746
    %v2710 = vpop.f32.mrf.mxu0
    %v2711 = vadd.f32 %v2697, %v2710
    %v2712 = vpop.f32.mrf.mxu0
    %v2713 = vadd.f32 %v2699, %v2712
    %2714 = vdwg.mxu0
    %2715 = vmatpush.bf16.msra.mxu0 %v2006
    %2716 = vmatpush.bf16.msra.mxu0 %v2002
    %2717 = vmatpush.bf16.msra.mxu0 %v1998
    %2718 = vmatpush.bf16.msra.mxu0 %v1994
    %2719 = vmatpush.bf16.msra.mxu0 %v1990
    %2720 = vmatpush.bf16.msra.mxu0 %v1986
    %2721 = vmatpush.bf16.msra.mxu0 %v1982
    %2722 = vmatpush.bf16.msra.mxu0 %v1978
    %2723 = vmatmul.bf16.gmra.mxu0 %v747
    %v2724 = vpop.f32.mrf.mxu0
    %v2725 = vadd.f32 %v2711, %v2724
    %v2726 = vpop.f32.mrf.mxu0
    %v2727 = vadd.f32 %v2713, %v2726
    %2728 = vdwg.mxu0
    %2729 = vmatpush.bf16.msra.mxu0 %v2038
    %2730 = vmatpush.bf16.msra.mxu0 %v2034
    %2731 = vmatpush.bf16.msra.mxu0 %v2030
    %2732 = vmatpush.bf16.msra.mxu0 %v2026
    %2733 = vmatpush.bf16.msra.mxu0 %v2022
    %2734 = vmatpush.bf16.msra.mxu0 %v2018
    %2735 = vmatpush.bf16.msra.mxu0 %v2014
    %2736 = vmatpush.bf16.msra.mxu0 %v2010
    %2737 = vmatmul.bf16.gmra.mxu0 %v748
    %v2738 = vpop.f32.mrf.mxu0
    %v2739 = vadd.f32 %v2725, %v2738
    %v2740 = vpop.f32.mrf.mxu0
    %v2741 = vadd.f32 %v2727, %v2740
    %2742 = vdwg.mxu0
    %v2743 = vmax.f32 %v2403, 0.0
    %v2744 = vmax.f32 %v2515, 0.0
    %v2745 = vmax.f32 %v2627, 0.0
    %v2746 = vmax.f32 %v2739, 0.0
    %v2747 = vmax.f32 %v2405, 0.0
    %v2748 = vmax.f32 %v2517, 0.0
    %v2749 = vmax.f32 %v2629, 0.0
    %v2750 = vmax.f32 %v2741, 0.0
    %v2751 = vpack.c.bf16 %v2747, %v2743
    %v2752 = vpack.c.bf16 %v2748, %v2744
    %v2753 = vpack.c.bf16 %v2749, %v2745
    %v2754 = vpack.c.bf16 %v2750, %v2746
    %v2755 = vld [vmem:[#allocation8] sm:$0xff]
    %v2756 = vld [vmem:[#allocation8 + $0x8] sm:$0xff]
    %v2757 = vld [vmem:[#allocation8 + $0x10] sm:$0xff]
    %v2758 = vld [vmem:[#allocation8 + $0x18] sm:$0xff]
    %v2759 = vld [vmem:[#allocation8 + $0x20] sm:$0xff]
    %v2760 = vld [vmem:[#allocation8 + $0x28] sm:$0xff]
    %v2761 = vld [vmem:[#allocation8 + $0x30] sm:$0xff]
    %v2762 = vld [vmem:[#allocation8 + $0x38] sm:$0xff]
    %v2763 = vld [vmem:[#allocation8 + $0x40] sm:$0xff]
    %v2764 = vld [vmem:[#allocation8 + $0x48] sm:$0xff]
    %v2765 = vld [vmem:[#allocation8 + $0x50] sm:$0xff]
    %v2766 = vld [vmem:[#allocation8 + $0x58] sm:$0xff]
    %v2767 = vld [vmem:[#allocation8 + $0x60] sm:$0xff]
    %v2768 = vld [vmem:[#allocation8 + $0x68] sm:$0xff]
    %v2769 = vld [vmem:[#allocation8 + $0x70] sm:$0xff]
    %v2770 = vld [vmem:[#allocation8 + $0x78] sm:$0xff]
    %v2771 = vld [vmem:[#allocation8 + $0x80] sm:$0xff]
    %v2772 = vld [vmem:[#allocation8 + $0x88] sm:$0xff]
    %v2773 = vld [vmem:[#allocation8 + $0x90] sm:$0xff]
    %v2774 = vld [vmem:[#allocation8 + $0x98] sm:$0xff]
    %v2775 = vld [vmem:[#allocation8 + $0xa0] sm:$0xff]
    %v2776 = vld [vmem:[#allocation8 + $0xa8] sm:$0xff]
    %v2777 = vld [vmem:[#allocation8 + $0xb0] sm:$0xff]
    %v2778 = vld [vmem:[#allocation8 + $0xb8] sm:$0xff]
    %v2779 = vld [vmem:[#allocation8 + $0xc0] sm:$0xff]
    %v2780 = vld [vmem:[#allocation8 + $0xc8] sm:$0xff]
    %v2781 = vld [vmem:[#allocation8 + $0xd0] sm:$0xff]
    %v2782 = vld [vmem:[#allocation8 + $0xd8] sm:$0xff]
    %v2783 = vld [vmem:[#allocation8 + $0xe0] sm:$0xff]
    %v2784 = vld [vmem:[#allocation8 + $0xe8] sm:$0xff]
    %v2785 = vld [vmem:[#allocation8 + $0xf0] sm:$0xff]
    %v2786 = vld [vmem:[#allocation8 + $0xf8] sm:$0xff]
    %v2787 = vld [vmem:[#allocation8 + $0x100] sm:$0xff]
    %v2788 = vld [vmem:[#allocation8 + $0x108] sm:$0xff]
    %v2789 = vld [vmem:[#allocation8 + $0x110] sm:$0xff]
    %v2790 = vld [vmem:[#allocation8 + $0x118] sm:$0xff]
    %v2791 = vld [vmem:[#allocation8 + $0x120] sm:$0xff]
    %v2792 = vld [vmem:[#allocation8 + $0x128] sm:$0xff]
    %v2793 = vld [vmem:[#allocation8 + $0x130] sm:$0xff]
    %v2794 = vld [vmem:[#allocation8 + $0x138] sm:$0xff]
    %v2795 = vld [vmem:[#allocation8 + $0x140] sm:$0xff]
    %v2796 = vld [vmem:[#allocation8 + $0x148] sm:$0xff]
    %v2797 = vld [vmem:[#allocation8 + $0x150] sm:$0xff]
    %v2798 = vld [vmem:[#allocation8 + $0x158] sm:$0xff]
    %v2799 = vld [vmem:[#allocation8 + $0x160] sm:$0xff]
    %v2800 = vld [vmem:[#allocation8 + $0x168] sm:$0xff]
    %v2801 = vld [vmem:[#allocation8 + $0x170] sm:$0xff]
    %v2802 = vld [vmem:[#allocation8 + $0x178] sm:$0xff]
    %v2803 = vld [vmem:[#allocation8 + $0x180] sm:$0xff]
    %v2804 = vld [vmem:[#allocation8 + $0x188] sm:$0xff]
    %v2805 = vld [vmem:[#allocation8 + $0x190] sm:$0xff]
    %v2806 = vld [vmem:[#allocation8 + $0x198] sm:$0xff]
    %v2807 = vld [vmem:[#allocation8 + $0x1a0] sm:$0xff]
    %v2808 = vld [vmem:[#allocation8 + $0x1a8] sm:$0xff]
    %v2809 = vld [vmem:[#allocation8 + $0x1b0] sm:$0xff]
    %v2810 = vld [vmem:[#allocation8 + $0x1b8] sm:$0xff]
    %v2811 = vld [vmem:[#allocation8 + $0x1c0] sm:$0xff]
    %v2812 = vld [vmem:[#allocation8 + $0x1c8] sm:$0xff]
    %v2813 = vld [vmem:[#allocation8 + $0x1d0] sm:$0xff]
    %v2814 = vld [vmem:[#allocation8 + $0x1d8] sm:$0xff]
    %v2815 = vld [vmem:[#allocation8 + $0x1e0] sm:$0xff]
    %v2816 = vld [vmem:[#allocation8 + $0x1e8] sm:$0xff]
    %v2817 = vld [vmem:[#allocation8 + $0x1f0] sm:$0xff]
    %v2818 = vld [vmem:[#allocation8 + $0x1f8] sm:$0xff]
    %v2819 = vld [vmem:[%s10] sm:$0x3]
    %v2821 = vperm.slane %v2819, 0
    %v2822 = vperm.slane %v2819, 1
    %v2889 = vunpack.c.l.b16 %v2755
    %v2890 = vunpack.c.h.b16 %v2755
    %v2891 = vunpack.c.l.b16 %v2756
    %v2892 = vunpack.c.h.b16 %v2756
    %v2893 = vunpack.c.l.b16 %v2757
    %v2894 = vunpack.c.h.b16 %v2757
    %v2895 = vunpack.c.l.b16 %v2758
    %v2896 = vunpack.c.h.b16 %v2758
    %v2897 = vunpack.c.l.b16 %v2759
    %v2898 = vunpack.c.h.b16 %v2759
    %v2899 = vunpack.c.l.b16 %v2760
    %v2900 = vunpack.c.h.b16 %v2760
    %v2901 = vunpack.c.l.b16 %v2761
    %v2902 = vunpack.c.h.b16 %v2761
    %v2903 = vunpack.c.l.b16 %v2762
    %v2904 = vunpack.c.h.b16 %v2762
    %v2905 = vunpack.c.l.b16 %v2763
    %v2906 = vunpack.c.h.b16 %v2763
    %v2907 = vunpack.c.l.b16 %v2764
    %v2908 = vunpack.c.h.b16 %v2764
    %v2909 = vunpack.c.l.b16 %v2765
    %v2910 = vunpack.c.h.b16 %v2765
    %v2911 = vunpack.c.l.b16 %v2766
    %v2912 = vunpack.c.h.b16 %v2766
    %v2913 = vunpack.c.l.b16 %v2767
    %v2914 = vunpack.c.h.b16 %v2767
    %v2915 = vunpack.c.l.b16 %v2768
    %v2916 = vunpack.c.h.b16 %v2768
    %v2917 = vunpack.c.l.b16 %v2769
    %v2918 = vunpack.c.h.b16 %v2769
    %v2919 = vunpack.c.l.b16 %v2770
    %v2920 = vunpack.c.h.b16 %v2770
    %v2921 = vunpack.c.l.b16 %v2771
    %v2922 = vunpack.c.h.b16 %v2771
    %v2923 = vunpack.c.l.b16 %v2772
    %v2924 = vunpack.c.h.b16 %v2772
    %v2925 = vunpack.c.l.b16 %v2773
    %v2926 = vunpack.c.h.b16 %v2773
    %v2927 = vunpack.c.l.b16 %v2774
    %v2928 = vunpack.c.h.b16 %v2774
    %v2929 = vunpack.c.l.b16 %v2775
    %v2930 = vunpack.c.h.b16 %v2775
    %v2931 = vunpack.c.l.b16 %v2776
    %v2932 = vunpack.c.h.b16 %v2776
    %v2933 = vunpack.c.l.b16 %v2777
    %v2934 = vunpack.c.h.b16 %v2777
    %v2935 = vunpack.c.l.b16 %v2778
    %v2936 = vunpack.c.h.b16 %v2778
    %v2937 = vunpack.c.l.b16 %v2779
    %v2938 = vunpack.c.h.b16 %v2779
    %v2939 = vunpack.c.l.b16 %v2780
    %v2940 = vunpack.c.h.b16 %v2780
    %v2941 = vunpack.c.l.b16 %v2781
    %v2942 = vunpack.c.h.b16 %v2781
    %v2943 = vunpack.c.l.b16 %v2782
    %v2944 = vunpack.c.h.b16 %v2782
    %v2945 = vunpack.c.l.b16 %v2783
    %v2946 = vunpack.c.h.b16 %v2783
    %v2947 = vunpack.c.l.b16 %v2784
    %v2948 = vunpack.c.h.b16 %v2784
    %v2949 = vunpack.c.l.b16 %v2785
    %v2950 = vunpack.c.h.b16 %v2785
    %v2951 = vunpack.c.l.b16 %v2786
    %v2952 = vunpack.c.h.b16 %v2786
    %v2953 = vunpack.c.l.b16 %v2787
    %v2954 = vunpack.c.h.b16 %v2787
    %v2955 = vunpack.c.l.b16 %v2788
    %v2956 = vunpack.c.h.b16 %v2788
    %v2957 = vunpack.c.l.b16 %v2789
    %v2958 = vunpack.c.h.b16 %v2789
    %v2959 = vunpack.c.l.b16 %v2790
    %v2960 = vunpack.c.h.b16 %v2790
    %v2961 = vunpack.c.l.b16 %v2791
    %v2962 = vunpack.c.h.b16 %v2791
    %v2963 = vunpack.c.l.b16 %v2792
    %v2964 = vunpack.c.h.b16 %v2792
    %v2965 = vunpack.c.l.b16 %v2793
    %v2966 = vunpack.c.h.b16 %v2793
    %v2967 = vunpack.c.l.b16 %v2794
    %v2968 = vunpack.c.h.b16 %v2794
    %v2969 = vunpack.c.l.b16 %v2795
    %v2970 = vunpack.c.h.b16 %v2795
    %v2971 = vunpack.c.l.b16 %v2796
    %v2972 = vunpack.c.h.b16 %v2796
    %v2973 = vunpack.c.l.b16 %v2797
    %v2974 = vunpack.c.h.b16 %v2797
    %v2975 = vunpack.c.l.b16 %v2798
    %v2976 = vunpack.c.h.b16 %v2798
    %v2977 = vunpack.c.l.b16 %v2799
    %v2978 = vunpack.c.h.b16 %v2799
    %v2979 = vunpack.c.l.b16 %v2800
    %v2980 = vunpack.c.h.b16 %v2800
    %v2981 = vunpack.c.l.b16 %v2801
    %v2982 = vunpack.c.h.b16 %v2801
    %v2983 = vunpack.c.l.b16 %v2802
    %v2984 = vunpack.c.h.b16 %v2802
    %v2985 = vunpack.c.l.b16 %v2803
    %v2986 = vunpack.c.h.b16 %v2803
    %v2987 = vunpack.c.l.b16 %v2804
    %v2988 = vunpack.c.h.b16 %v2804
    %v2989 = vunpack.c.l.b16 %v2805
    %v2990 = vunpack.c.h.b16 %v2805
    %v2991 = vunpack.c.l.b16 %v2806
    %v2992 = vunpack.c.h.b16 %v2806
    %v2993 = vunpack.c.l.b16 %v2807
    %v2994 = vunpack.c.h.b16 %v2807
    %v2995 = vunpack.c.l.b16 %v2808
    %v2996 = vunpack.c.h.b16 %v2808
    %v2997 = vunpack.c.l.b16 %v2809
    %v2998 = vunpack.c.h.b16 %v2809
    %v2999 = vunpack.c.l.b16 %v2810
    %v3000 = vunpack.c.h.b16 %v2810
    %v3001 = vunpack.c.l.b16 %v2811
    %v3002 = vunpack.c.h.b16 %v2811
    %v3003 = vunpack.c.l.b16 %v2812
    %v3004 = vunpack.c.h.b16 %v2812
    %v3005 = vunpack.c.l.b16 %v2813
    %v3006 = vunpack.c.h.b16 %v2813
    %v3007 = vunpack.c.l.b16 %v2814
    %v3008 = vunpack.c.h.b16 %v2814
    %v3009 = vunpack.c.l.b16 %v2815
    %v3010 = vunpack.c.h.b16 %v2815
    %v3011 = vunpack.c.l.b16 %v2816
    %v3012 = vunpack.c.h.b16 %v2816
    %v3013 = vunpack.c.l.b16 %v2817
    %v3014 = vunpack.c.h.b16 %v2817
    %v3015 = vunpack.c.l.b16 %v2818
    %v3016 = vunpack.c.h.b16 %v2818
    %v3017 = vpack.c.b16 %v2891, %v2889
    %v3018 = vpack.c.b16 %v2892, %v2890
    %v3019 = vpack.c.b16 %v2895, %v2893
    %v3020 = vpack.c.b16 %v2896, %v2894
    %v3021 = vpack.c.b16 %v2899, %v2897
    %v3022 = vpack.c.b16 %v2900, %v2898
    %v3023 = vpack.c.b16 %v2903, %v2901
    %v3024 = vpack.c.b16 %v2904, %v2902
    %v3025 = vpack.c.b16 %v2907, %v2905
    %v3026 = vpack.c.b16 %v2908, %v2906
    %v3027 = vpack.c.b16 %v2911, %v2909
    %v3028 = vpack.c.b16 %v2912, %v2910
    %v3029 = vpack.c.b16 %v2915, %v2913
    %v3030 = vpack.c.b16 %v2916, %v2914
    %v3031 = vpack.c.b16 %v2919, %v2917
    %v3032 = vpack.c.b16 %v2920, %v2918
    %v3033 = vpack.c.b16 %v2923, %v2921
    %v3034 = vpack.c.b16 %v2924, %v2922
    %v3035 = vpack.c.b16 %v2927, %v2925
    %v3036 = vpack.c.b16 %v2928, %v2926
    %v3037 = vpack.c.b16 %v2931, %v2929
    %v3038 = vpack.c.b16 %v2932, %v2930
    %v3039 = vpack.c.b16 %v2935, %v2933
    %v3040 = vpack.c.b16 %v2936, %v2934
    %v3041 = vpack.c.b16 %v2939, %v2937
    %v3042 = vpack.c.b16 %v2940, %v2938
    %v3043 = vpack.c.b16 %v2943, %v2941
    %v3044 = vpack.c.b16 %v2944, %v2942
    %v3045 = vpack.c.b16 %v2947, %v2945
    %v3046 = vpack.c.b16 %v2948, %v2946
    %v3047 = vpack.c.b16 %v2951, %v2949
    %v3048 = vpack.c.b16 %v2952, %v2950
    %v3049 = vpack.c.b16 %v2955, %v2953
    %v3050 = vpack.c.b16 %v2956, %v2954
    %v3051 = vpack.c.b16 %v2959, %v2957
    %v3052 = vpack.c.b16 %v2960, %v2958
    %v3053 = vpack.c.b16 %v2963, %v2961
    %v3054 = vpack.c.b16 %v2964, %v2962
    %v3055 = vpack.c.b16 %v2967, %v2965
    %v3056 = vpack.c.b16 %v2968, %v2966
    %v3057 = vpack.c.b16 %v2971, %v2969
    %v3058 = vpack.c.b16 %v2972, %v2970
    %v3059 = vpack.c.b16 %v2975, %v2973
    %v3060 = vpack.c.b16 %v2976, %v2974
    %v3061 = vpack.c.b16 %v2979, %v2977
    %v3062 = vpack.c.b16 %v2980, %v2978
    %v3063 = vpack.c.b16 %v2983, %v2981
    %v3064 = vpack.c.b16 %v2984, %v2982
    %v3065 = vpack.c.b16 %v2987, %v2985
    %v3066 = vpack.c.b16 %v2988, %v2986
    %v3067 = vpack.c.b16 %v2991, %v2989
    %v3068 = vpack.c.b16 %v2992, %v2990
    %v3069 = vpack.c.b16 %v2995, %v2993
    %v3070 = vpack.c.b16 %v2996, %v2994
    %v3071 = vpack.c.b16 %v2999, %v2997
    %v3072 = vpack.c.b16 %v3000, %v2998
    %v3073 = vpack.c.b16 %v3003, %v3001
    %v3074 = vpack.c.b16 %v3004, %v3002
    %v3075 = vpack.c.b16 %v3007, %v3005
    %v3076 = vpack.c.b16 %v3008, %v3006
    %v3077 = vpack.c.b16 %v3011, %v3009
    %v3078 = vpack.c.b16 %v3012, %v3010
    %v3079 = vpack.c.b16 %v3015, %v3013
    %v3080 = vpack.c.b16 %v3016, %v3014
    %3145 = vmatpush.bf16.msra.mxu0 %v3031
    %3146 = vmatpush.bf16.msra.mxu0 %v3029
    %3147 = vmatpush.bf16.msra.mxu0 %v3027
    %3148 = vmatpush.bf16.msra.mxu0 %v3025
    %3149 = vmatpush.bf16.msra.mxu0 %v3023
    %3150 = vmatpush.bf16.msra.mxu0 %v3021
    %3151 = vmatpush.bf16.msra.mxu0 %v3019
    %3152 = vmatpush.bf16.msra.mxu0 %v3017
    %3153 = vmatmul.bf16.gmra.mxu0 %v2751
    %v3154 = vpop.f32.mrf.mxu0
    %v3155 = vadd.f32 %v2821, %v3154
    %v3156 = vpop.f32.mrf.mxu0
    %v3157 = vadd.f32 %v2821, %v3156
    %3158 = vdwg.mxu0
    %3159 = vmatpush.bf16.msra.mxu0 %v3047
    %3160 = vmatpush.bf16.msra.mxu0 %v3045
    %3161 = vmatpush.bf16.msra.mxu0 %v3043
    %3162 = vmatpush.bf16.msra.mxu0 %v3041
    %3163 = vmatpush.bf16.msra.mxu0 %v3039
    %3164 = vmatpush.bf16.msra.mxu0 %v3037
    %3165 = vmatpush.bf16.msra.mxu0 %v3035
    %3166 = vmatpush.bf16.msra.mxu0 %v3033
    %3167 = vmatmul.bf16.gmra.mxu0 %v2752
    %v3168 = vpop.f32.mrf.mxu0
    %v3169 = vadd.f32 %v3155, %v3168
    %v3170 = vpop.f32.mrf.mxu0
    %v3171 = vadd.f32 %v3157, %v3170
    %3172 = vdwg.mxu0
    %3173 = vmatpush.bf16.msra.mxu0 %v3063
    %3174 = vmatpush.bf16.msra.mxu0 %v3061
    %3175 = vmatpush.bf16.msra.mxu0 %v3059
    %3176 = vmatpush.bf16.msra.mxu0 %v3057
    %3177 = vmatpush.bf16.msra.mxu0 %v3055
    %3178 = vmatpush.bf16.msra.mxu0 %v3053
    %3179 = vmatpush.bf16.msra.mxu0 %v3051
    %3180 = vmatpush.bf16.msra.mxu0 %v3049
    %3181 = vmatmul.bf16.gmra.mxu0 %v2753
    %v3182 = vpop.f32.mrf.mxu0
    %v3183 = vadd.f32 %v3169, %v3182
    %v3184 = vpop.f32.mrf.mxu0
    %v3185 = vadd.f32 %v3171, %v3184
    %3186 = vdwg.mxu0
    %3187 = vmatpush.bf16.msra.mxu0 %v3079
    %3188 = vmatpush.bf16.msra.mxu0 %v3077
    %3189 = vmatpush.bf16.msra.mxu0 %v3075
    %3190 = vmatpush.bf16.msra.mxu0 %v3073
    %3191 = vmatpush.bf16.msra.mxu0 %v3071
    %3192 = vmatpush.bf16.msra.mxu0 %v3069
    %3193 = vmatpush.bf16.msra.mxu0 %v3067
    %3194 = vmatpush.bf16.msra.mxu0 %v3065
    %3195 = vmatmul.bf16.gmra.mxu0 %v2754
    %v3196 = vpop.f32.mrf.mxu0
    %v3197 = vadd.f32 %v3183, %v3196
    %v3198 = vpop.f32.mrf.mxu0
    %v3199 = vadd.f32 %v3185, %v3198
    %3200 = vdwg.mxu0
    %3201 = vmatpush.bf16.msra.mxu0 %v3032
    %3202 = vmatpush.bf16.msra.mxu0 %v3030
    %3203 = vmatpush.bf16.msra.mxu0 %v3028
    %3204 = vmatpush.bf16.msra.mxu0 %v3026
    %3205 = vmatpush.bf16.msra.mxu0 %v3024
    %3206 = vmatpush.bf16.msra.mxu0 %v3022
    %3207 = vmatpush.bf16.msra.mxu0 %v3020
    %3208 = vmatpush.bf16.msra.mxu0 %v3018
    %3209 = vmatmul.bf16.gmra.mxu0 %v2751
    %v3210 = vpop.f32.mrf.mxu0
    %v3211 = vadd.f32 %v2822, %v3210
    %v3212 = vpop.f32.mrf.mxu0
    %v3213 = vadd.f32 %v2822, %v3212
    %3214 = vdwg.mxu0
    %3215 = vmatpush.bf16.msra.mxu0 %v3048
    %3216 = vmatpush.bf16.msra.mxu0 %v3046
    %3217 = vmatpush.bf16.msra.mxu0 %v3044
    %3218 = vmatpush.bf16.msra.mxu0 %v3042
    %3219 = vmatpush.bf16.msra.mxu0 %v3040
    %3220 = vmatpush.bf16.msra.mxu0 %v3038
    %3221 = vmatpush.bf16.msra.mxu0 %v3036
    %3222 = vmatpush.bf16.msra.mxu0 %v3034
    %3223 = vmatmul.bf16.gmra.mxu0 %v2752
    %v3224 = vpop.f32.mrf.mxu0
    %v3225 = vadd.f32 %v3211, %v3224
    %v3226 = vpop.f32.mrf.mxu0
    %v3227 = vadd.f32 %v3213, %v3226
    %3228 = vdwg.mxu0
    %3229 = vmatpush.bf16.msra.mxu0 %v3064
    %3230 = vmatpush.bf16.msra.mxu0 %v3062
    %3231 = vmatpush.bf16.msra.mxu0 %v3060
    %3232 = vmatpush.bf16.msra.mxu0 %v3058
    %3233 = vmatpush.bf16.msra.mxu0 %v3056
    %3234 = vmatpush.bf16.msra.mxu0 %v3054
    %3235 = vmatpush.bf16.msra.mxu0 %v3052
    %3236 = vmatpush.bf16.msra.mxu0 %v3050
    %3237 = vmatmul.bf16.gmra.mxu0 %v2753
    %v3238 = vpop.f32.mrf.mxu0
    %v3239 = vadd.f32 %v3225, %v3238
    %v3240 = vpop.f32.mrf.mxu0
    %v3241 = vadd.f32 %v3227, %v3240
    %3242 = vdwg.mxu0
    %3243 = vmatpush.bf16.msra.mxu0 %v3080
    %3244 = vmatpush.bf16.msra.mxu0 %v3078
    %3245 = vmatpush.bf16.msra.mxu0 %v3076
    %3246 = vmatpush.bf16.msra.mxu0 %v3074
    %3247 = vmatpush.bf16.msra.mxu0 %v3072
    %3248 = vmatpush.bf16.msra.mxu0 %v3070
    %3249 = vmatpush.bf16.msra.mxu0 %v3068
    %3250 = vmatpush.bf16.msra.mxu0 %v3066
    %3251 = vmatmul.bf16.gmra.mxu0 %v2754
    %v3252 = vpop.f32.mrf.mxu0
    %v3253 = vadd.f32 %v3239, %v3252
    %v3254 = vpop.f32.mrf.mxu0
    %v3255 = vadd.f32 %v3241, %v3254
    %3256 = vdwg.mxu0
    %3257 = vst [vmem:[#allocation10] sm:$0xff] %v3197
    %3258 = vst [vmem:[#allocation10 + $0x8] sm:$0xff] %v3253
    %3259 = vst [vmem:[#allocation10 + $0x10] sm:$0xff] %v3199
    %3260 = vst [vmem:[#allocation10 + $0x18] sm:$0xff] %v3255
    // Predicated region
    $region62: #{tpu_custom_call.1} parent=1 // pred_check
      _
    $region63: #{tpu_custom_call.1} parent=1 // pred_check_branch
      %3262 = sbr.rel (0) target = $region65
    $region64: #{tpu_custom_call.1} parent=1 // pred_region
      %3264 = vsyncadd [#allocation4], 0
      %s3265 = sshll.u32 [#allocation10], 4
      %s3266 = int_to_ptr.vmem [resolvable:$true] %s3265
      %s3267 = sshll.u32 %s11, 4
      %s3268 = int_to_ptr.hbm [resolvable:$true] %s3267
      %3273 = dma.vmem_to_hbm [thread:$0]  %s3266, 512, %s3268, [#allocation4], 256, 256, 16
    $region65: #{tpu_custom_call.1} parent=1 // pred_fallthru
      _
    // Predicated region
    $region66: #{tpu_custom_call.1} parent=1 // pred_check
      _
    $region67: #{tpu_custom_call.1} parent=1 // pred_check_branch
      %3275 = sbr.rel (0) target = $region69
    $region68: #{tpu_custom_call.1} parent=1 // pred_region
      %3277 = dma.done [#allocation4], 512
    $region69: #{tpu_custom_call.1} parent=1 // pred_fallthru
      _
    %3278 = vsyncpa [#allocation3], 1
    %3279 = vsyncpa [#allocation6], 1
    %3280 = vsyncpa [#allocation9], 1
    %3281 = vsyncpa [#allocation4], 1

</llo_original>
